<compile_context>
chip_gen: v7x
topology: tpu7x:2x2x1
jax: 0.10.0
libtpu: 0.0.40
codegen_flags: <defaults>
</compile_context>

<pallas_src>
import jax
import jax.numpy as jnp
from jax.experimental import pallas as pl
from jax.experimental.pallas import tpu as pltpu

LRELU_SLOPE = 0.2
LN_EPS = 1e-5


# ----------------------------- kernel helpers ------------------------------
def _leaky_relu(x):
    return jnp.where(x > 0, x, LRELU_SLOPE * x)


def _layer_norm(x, gamma, beta):
    mu = jnp.mean(x, axis=-1, keepdims=True)
    var = jnp.mean(jnp.square(x - mu), axis=-1, keepdims=True)
    return (x - mu) * jax.lax.rsqrt(var + LN_EPS) * gamma + beta


# --------------------------------- kernel ----------------------------------
def _make_kernel(num_layers, batch_tile, seq_len, hidden_dim):
    TB, T, H = batch_tile, seq_len, hidden_dim
    M = TB * T

    def build_taps(h3, d):
        # h3: (TB, T, H). Returns (M, 3H) = [h[t-d], h[t], h[t+d]] stacked on
        # the lane axis with zero 'same' padding per batch window (no
        # cross-batch leakage since shifting happens on the T axis of the 3-D
        # view, never across batch rows).
        if d >= T:
            left = jnp.zeros_like(h3)
            right = jnp.zeros_like(h3)
        else:
            zpad = jnp.zeros((TB, d, H), dtype=h3.dtype)
            left = jnp.concatenate([zpad, h3[:, : T - d, :]], axis=1)   # h[t-d]
            right = jnp.concatenate([h3[:, d:, :], zpad], axis=1)       # h[t+d]
        return jnp.concatenate([left, h3, right], axis=-1).reshape(M, 3 * H)

    def conv_fused(h3, w_fused, b, d):
        # Dilated Conv1d, kernel_size=3, 'same': single (M,3H) x (3H,H) GEMM.
        taps = build_taps(h3, d)
        return jnp.dot(taps, w_fused, preferred_element_type=jnp.float32) + b

    def kernel(x_ref,
               w_in_ref, b_in_ref, g_in_ref, be_in_ref,
               cw1_ref, cb1_ref, n1g_ref, n1b_ref,
               cw2_ref, cb2_ref, n2g_ref, n2b_ref,
               wa_ref, ba_ref, wo1_ref, bo1_ref, wo2_ref, bo2_ref,
               logits_ref, *feat_refs):
        c_in = x_ref.shape[-1]
        x = x_ref[...].reshape(M, c_in)

        # --- input_proj: Linear -> LayerNorm -> LeakyReLU(0.2) ---
        h = jnp.dot(x, w_in_ref[...], preferred_element_type=jnp.float32) + b_in_ref[...]
        h = _leaky_relu(_layer_norm(h, g_in_ref[...], be_in_ref[...]))
        feat_refs[0][...] = h.reshape(TB, T, H)

        # --- residual dilated-conv blocks (per-layer weights sliced in-loop) ---
        for l in range(num_layers):
            d = 2 ** l
            residual = h
            y = conv_fused(h.reshape(TB, T, H), cw1_ref[l], cb1_ref[l], d)
            y = _leaky_relu(_layer_norm(y, n1g_ref[l], n1b_ref[l]))
            y = conv_fused(y.reshape(TB, T, H), cw2_ref[l], cb2_ref[l], d)
            y = _layer_norm(y, n2g_ref[l], n2b_ref[l])
            h = _leaky_relu(y + residual)
            feat_refs[l + 1][...] = h.reshape(TB, T, H)

        # --- attention pooling over time (N=1 matvec on VPU/XLU, not MXU) ---
        h3 = h.reshape(TB, T, H)
        wa_row = wa_ref[...].reshape(1, 1, H)
        s = jnp.sum(h3 * wa_row, axis=-1, keepdims=True) + ba_ref[...].reshape(1, 1, 1)
        m = jnp.max(s, axis=1, keepdims=True)
        e = jnp.exp(s - m)
        a = e * pl.reciprocal(jnp.sum(e, axis=1, keepdims=True), approx=True)
        pooled = jnp.sum(h3 * a, axis=1)                                  # (TB, H)

        # --- output head: Linear -> LeakyReLU -> Linear(->1, VPU reduce) ---
        o = _leaky_relu(jnp.dot(pooled, wo1_ref[...],
                                preferred_element_type=jnp.float32) + bo1_ref[...])
        logit = jnp.sum(o * wo2_ref[...], axis=-1, keepdims=True) + bo2_ref[...]
        logits_ref[...] = logit.reshape(TB, 1, 1)

    return kernel


# -------------------------------- wrapper -----------------------------------
def _pick_vmem_limit_bytes():
    # Generation-aware: ~3/4 of per-core VMEM, capped at 96 MiB.
    # v7x (64 MiB/core) -> ~48 MiB; v5e/v6e (128 MiB) -> 96 MiB.
    try:
        cap = int(pltpu.get_tpu_info().vmem_capacity_bytes)
    except Exception:
        cap = 64 * 1024 * 1024
    return max(32 * 1024 * 1024, min(cap * 3 // 4, 96 * 1024 * 1024))


def motion_discriminator(params, x, *, num_layers, batch_tile=None):
    B, T, C = x.shape
    H = params["w_in"].shape[1]

    if batch_tile is None:
        # largest divisor of B not exceeding 8
        batch_tile = 1
        for cand in range(min(B, 8), 0, -1):
            if B % cand == 0:
                batch_tile = cand
                break
    assert B % batch_tile == 0, "batch_tile must divide the batch"
    TB = batch_tile
    grid = (B // TB,)

    kernel = _make_kernel(num_layers, TB, T, H)

    args = (
        x,
        params["w_in"], params["b_in"], params["g_in"], params["be_in"],
        params["cw1"], params["cb1"], params["n1g"], params["n1b"],
        params["cw2"], params["cb2"], params["n2g"], params["n2b"],
        params["wa"], params["ba"],
        params["wo1"], params["bo1"], params["wo2"], params["bo2"],
    )

    def _resident_spec(a):
        nd = a.ndim
        return pl.BlockSpec(a.shape, lambda b, _nd=nd: (0,) * _nd)

    in_specs = [pl.BlockSpec((TB, T, C), lambda b: (b, 0, 0))]
    in_specs += [_resident_spec(a) for a in args[1:]]

    feat_spec = pl.BlockSpec((TB, T, H), lambda b: (b, 0, 0))
    out_specs = (pl.BlockSpec((TB, 1, 1), lambda b: (b, 0, 0)),) + tuple(
        feat_spec for _ in range(num_layers + 1))
    out_shape = (jax.ShapeDtypeStruct((B, 1, 1), jnp.float32),) + tuple(
        jax.ShapeDtypeStruct((B, T, H), jnp.float32)
        for _ in range(num_layers + 1))

    outs = pl.pallas_call(
        kernel,
        grid=grid,
        in_specs=in_specs,
        out_specs=out_specs,
        out_shape=out_shape,
        compiler_params=pltpu.CompilerParams(
            dimension_semantics=("parallel",),
            vmem_limit_bytes=_pick_vmem_limit_bytes(),
        ),
    )(*args)

    logits = outs[0].reshape(B, 1)
    features = list(outs[1:])
    return logits, features


# ----------------------- deterministic parameter init -----------------------
def init_params(key, input_dim, hidden_dim, num_layers):
    H, L = hidden_dim, num_layers
    ks = jax.random.split(key, 16)

    def w(k, shape, scale=0.05):
        return (scale * jax.random.normal(k, shape)).astype(jnp.float32)

    return dict(
        # input_proj
        w_in=w(ks[0], (input_dim, H)),
        b_in=w(ks[1], (1, H)),
        g_in=jnp.ones((1, H), jnp.float32) + w(ks[2], (1, H), 0.01),
        be_in=w(ks[3], (1, H), 0.01),
        # res blocks; conv weights stored fused over taps as (L, 3*H, H)
        # with row (k*H + i) == torch_w[o, i, k] for output column o.
        cw1=w(ks[4], (L, 3 * H, H)),
        cb1=w(ks[5], (L, 1, H)),
        n1g=jnp.ones((L, 1, H), jnp.float32) + w(ks[6], (L, 1, H), 0.01),
        n1b=w(ks[7], (L, 1, H), 0.01),
        cw2=w(ks[8], (L, 3 * H, H)),
        cb2=w(ks[9], (L, 1, H)),
        n2g=jnp.ones((L, 1, H), jnp.float32) + w(ks[10], (L, 1, H), 0.01),
        n2b=w(ks[11], (L, 1, H), 0.01),
        # attention (row vector)
        wa=w(ks[12], (1, H)),
        ba=jnp.zeros((1, 1), jnp.float32),
        # output head
        wo1=w(ks[13], (H, H)),
        bo1=w(ks[14], (1, H)),
        wo2=w(ks[15], (1, H)),
        bo2=jnp.zeros((1, 1), jnp.float32),
    )


# ------------------------- pure-JAX reference check --------------------------
def reference_forward(params, x, num_layers):
    def ln(x, g, b):
        mu = jnp.mean(x, axis=-1, keepdims=True)
        var = jnp.mean((x - mu) ** 2, axis=-1, keepdims=True)
        return (x - mu) / jnp.sqrt(var + LN_EPS) * g + b

    def leaky(x):
        return jnp.where(x > 0, x, LRELU_SLOPE * x)

    def conv(x, w_fused, b, d):
        B, T, H = x.shape
        wk = w_fused.reshape(3, H, H)
        xp = jnp.pad(x, ((0, 0), (d, d), (0, 0)))
        acc = 0.0
        for k in range(3):
            xs = jax.lax.dynamic_slice_in_dim(xp, k * d, T, axis=1)
            acc = acc + jnp.einsum("bth,ho->bto", xs, wk[k])
        return acc + b

    h = jnp.einsum("btc,ch->bth", x, params["w_in"]) + params["b_in"]
    h = leaky(ln(h, params["g_in"], params["be_in"]))
    feats = [h]
    for l in range(num_layers):
        d = 2 ** l
        r = h
        y = conv(h, params["cw1"][l], params["cb1"][l], d)
        y = leaky(ln(y, params["n1g"][l], params["n1b"][l]))
        y = conv(y, params["cw2"][l], params["cb2"][l], d)
        y = ln(y, params["n2g"][l], params["n2b"][l])
        h = leaky(y + r)
        feats.append(h)
    s = jnp.einsum("bth,h->bt", h, params["wa"][0])[..., None] + params["ba"]
    a = jax.nn.softmax(s, axis=1)
    pooled = jnp.sum(h * a, axis=1)
    o = leaky(pooled @ params["wo1"] + params["bo1"])
    logits = o @ params["wo2"].T + params["bo2"]
    return logits, feats


# ----------------------------------- main ------------------------------------
if __name__ == "__main__":
    # small cfg: input_channels=16, hidden_dim=32, num_layers=4; x is (B, T, C)
    B, T, C_IN, H, L = 4, 16, 16, 32, 4
    key = jax.random.PRNGKey(0)
    kx, kp = jax.random.split(key)
    x = jax.random.normal(kx, (B, T, C_IN), dtype=jnp.float32)
    params = init_params(kp, C_IN, H, L)

    # batch_tile=2 -> grid=(2,): exercises both the pipelined grid path and
    # multiple batch rows inside a single tile (per-window conv padding).
    logits, features = motion_discriminator(params, x, num_layers=L, batch_tile=2)
    jax.block_until_ready(logits)
    for f in features:
        jax.block_until_ready(f)

    ref_logits, ref_feats = reference_forward(params, x, L)
    ok = bool(jnp.allclose(logits, ref_logits, rtol=1e-2, atol=1e-2))
    for f, rf in zip(features, ref_feats):
        ok = ok and bool(jnp.allclose(f, rf, rtol=1e-2, atol=1e-2))
    if not ok:
        raise SystemExit("Pallas kernel does not match JAX reference")
    print("KERNEL_OK")
</pallas_src>

<mosaic_0001>
module attributes {stable_mosaic.version = 11 : i64} {
  func.func @kernel(%arg0: i32, %arg1: memref<2x16x16xf32, #tpu.memory_space<vmem>>, %arg2: memref<16x32xf32, #tpu.memory_space<vmem>>, %arg3: memref<1x32xf32, #tpu.memory_space<vmem>>, %arg4: memref<1x32xf32, #tpu.memory_space<vmem>>, %arg5: memref<1x32xf32, #tpu.memory_space<vmem>>, %arg6: memref<4x96x32xf32, #tpu.memory_space<vmem>>, %arg7: memref<4x1x32xf32, #tpu.memory_space<vmem>>, %arg8: memref<4x1x32xf32, #tpu.memory_space<vmem>>, %arg9: memref<4x1x32xf32, #tpu.memory_space<vmem>>, %arg10: memref<4x96x32xf32, #tpu.memory_space<vmem>>, %arg11: memref<4x1x32xf32, #tpu.memory_space<vmem>>, %arg12: memref<4x1x32xf32, #tpu.memory_space<vmem>>, %arg13: memref<4x1x32xf32, #tpu.memory_space<vmem>>, %arg14: memref<1x32xf32, #tpu.memory_space<vmem>>, %arg15: memref<1x1xf32, #tpu.memory_space<vmem>>, %arg16: memref<32x32xf32, #tpu.memory_space<vmem>>, %arg17: memref<1x32xf32, #tpu.memory_space<vmem>>, %arg18: memref<1x32xf32, #tpu.memory_space<vmem>>, %arg19: memref<1x1xf32, #tpu.memory_space<vmem>>, %arg20: memref<2x1x1xf32, #tpu.memory_space<vmem>>, %arg21: memref<2x16x32xf32, #tpu.memory_space<vmem>>, %arg22: memref<2x16x32xf32, #tpu.memory_space<vmem>>, %arg23: memref<2x16x32xf32, #tpu.memory_space<vmem>>, %arg24: memref<2x16x32xf32, #tpu.memory_space<vmem>>, %arg25: memref<2x16x32xf32, #tpu.memory_space<vmem>>) attributes {dimension_semantics = [#tpu.dimension_semantics<parallel>], iteration_bounds = array<i64: 2>, scalar_prefetch = 0 : i64, scratch_operands = 0 : i64, tpu.core_type = #tpu.core_type<tc>, window_params = [{transform_indices = @transform_0, window_bounds = array<i64: 2, 16, 16>}, {pipeline_mode = #tpu.pipeline_mode<synchronous>, transform_indices = @transform_1, window_bounds = array<i64: 16, 32>}, {pipeline_mode = #tpu.pipeline_mode<synchronous>, transform_indices = @transform_2, window_bounds = array<i64: 1, 32>}, {pipeline_mode = #tpu.pipeline_mode<synchronous>, transform_indices = @transform_3, window_bounds = array<i64: 1, 32>}, {pipeline_mode = #tpu.pipeline_mode<synchronous>, transform_indices = @transform_4, window_bounds = array<i64: 1, 32>}, {pipeline_mode = #tpu.pipeline_mode<synchronous>, transform_indices = @transform_5, window_bounds = array<i64: 4, 96, 32>}, {pipeline_mode = #tpu.pipeline_mode<synchronous>, transform_indices = @transform_6, window_bounds = array<i64: 4, 1, 32>}, {pipeline_mode = #tpu.pipeline_mode<synchronous>, transform_indices = @transform_7, window_bounds = array<i64: 4, 1, 32>}, {pipeline_mode = #tpu.pipeline_mode<synchronous>, transform_indices = @transform_8, window_bounds = array<i64: 4, 1, 32>}, {pipeline_mode = #tpu.pipeline_mode<synchronous>, transform_indices = @transform_9, window_bounds = array<i64: 4, 96, 32>}, {pipeline_mode = #tpu.pipeline_mode<synchronous>, transform_indices = @transform_10, window_bounds = array<i64: 4, 1, 32>}, {pipeline_mode = #tpu.pipeline_mode<synchronous>, transform_indices = @transform_11, window_bounds = array<i64: 4, 1, 32>}, {pipeline_mode = #tpu.pipeline_mode<synchronous>, transform_indices = @transform_12, window_bounds = array<i64: 4, 1, 32>}, {pipeline_mode = #tpu.pipeline_mode<synchronous>, transform_indices = @transform_13, window_bounds = array<i64: 1, 32>}, {pipeline_mode = #tpu.pipeline_mode<synchronous>, transform_indices = @transform_14, window_bounds = array<i64: 1, 1>}, {pipeline_mode = #tpu.pipeline_mode<synchronous>, transform_indices = @transform_15, window_bounds = array<i64: 32, 32>}, {pipeline_mode = #tpu.pipeline_mode<synchronous>, transform_indices = @transform_16, window_bounds = array<i64: 1, 32>}, {pipeline_mode = #tpu.pipeline_mode<synchronous>, transform_indices = @transform_17, window_bounds = array<i64: 1, 32>}, {pipeline_mode = #tpu.pipeline_mode<synchronous>, transform_indices = @transform_18, window_bounds = array<i64: 1, 1>}, {transform_indices = @transform_19, window_bounds = array<i64: 2, 1, 1>}, {transform_indices = @transform_20, window_bounds = array<i64: 2, 16, 32>}, {transform_indices = @transform_21, window_bounds = array<i64: 2, 16, 32>}, {transform_indices = @transform_22, window_bounds = array<i64: 2, 16, 32>}, {transform_indices = @transform_23, window_bounds = array<i64: 2, 16, 32>}, {transform_indices = @transform_24, window_bounds = array<i64: 2, 16, 32>}]} {
    %c0 = arith.constant 0 : index
    %c0_0 = arith.constant 0 : index
    %c0_1 = arith.constant 0 : index
    %0 = vector.load %arg1[%c0, %c0_0, %c0_1] : memref<2x16x16xf32, #tpu.memory_space<vmem>>, vector<2x16x16xf32>
    %1 = vector.shape_cast %0 : vector<2x16x16xf32> to vector<32x16xf32>
    %c0_2 = arith.constant 0 : index
    %c0_3 = arith.constant 0 : index
    %2 = vector.load %arg2[%c0_2, %c0_3] : memref<16x32xf32, #tpu.memory_space<vmem>>, vector<16x32xf32>
    %cst = arith.constant dense<0.000000e+00> : vector<32x32xf32>
    %3 = tpu.matmul %1, %2, %cst {dimension_numbers = #tpu.dot_dimension_numbers<[1], [0], [0], [1], [0, 0, 1, 1], [], []>} : vector<32x16xf32>, vector<16x32xf32>, vector<32x32xf32> -> vector<32x32xf32>
    %c0_4 = arith.constant 0 : index
    %c0_5 = arith.constant 0 : index
    %4 = vector.load %arg3[%c0_4, %c0_5] : memref<1x32xf32, #tpu.memory_space<vmem>>, vector<1x32xf32>
    %5 = vector.broadcast %4 : vector<1x32xf32> to vector<32x32xf32>
    %6 = arith.addf %3, %5 : vector<32x32xf32>
    %c0_6 = arith.constant 0 : index
    %c0_7 = arith.constant 0 : index
    %7 = vector.load %arg4[%c0_6, %c0_7] : memref<1x32xf32, #tpu.memory_space<vmem>>, vector<1x32xf32>
    %c0_8 = arith.constant 0 : index
    %c0_9 = arith.constant 0 : index
    %8 = vector.load %arg5[%c0_8, %c0_9] : memref<1x32xf32, #tpu.memory_space<vmem>>, vector<1x32xf32>
    %cst_10 = arith.constant dense<0.000000e+00> : vector<32xf32>
    %9 = vector.multi_reduction <add>, %6, %cst_10 [1] : vector<32x32xf32> to vector<32xf32>
    %10 = vector.shape_cast %9 : vector<32xf32> to vector<32x1xf32>
    %cst_11 = arith.constant 3.200000e+01 : f32
    %11 = vector.broadcast %cst_11 : f32 to vector<32x1xf32>
    %12 = arith.divf %10, %11 : vector<32x1xf32>
    %13 = vector.broadcast %12 : vector<32x1xf32> to vector<32x32xf32>
    %14 = arith.subf %6, %13 : vector<32x32xf32>
    %15 = arith.mulf %14, %14 : vector<32x32xf32>
    %cst_12 = arith.constant dense<0.000000e+00> : vector<32xf32>
    %16 = vector.multi_reduction <add>, %15, %cst_12 [1] : vector<32x32xf32> to vector<32xf32>
    %17 = vector.shape_cast %16 : vector<32xf32> to vector<32x1xf32>
    %cst_13 = arith.constant 3.200000e+01 : f32
    %18 = vector.broadcast %cst_13 : f32 to vector<32x1xf32>
    %19 = arith.divf %17, %18 : vector<32x1xf32>
    %20 = vector.broadcast %12 : vector<32x1xf32> to vector<32x32xf32>
    %21 = arith.subf %6, %20 : vector<32x32xf32>
    %cst_14 = arith.constant 9.99999974E-6 : f32
    %22 = vector.broadcast %cst_14 : f32 to vector<32x1xf32>
    %23 = arith.addf %19, %22 : vector<32x1xf32>
    %24 = math.rsqrt %23 : vector<32x1xf32>
    %25 = vector.broadcast %24 : vector<32x1xf32> to vector<32x32xf32>
    %26 = arith.mulf %21, %25 : vector<32x32xf32>
    %27 = vector.broadcast %7 : vector<1x32xf32> to vector<32x32xf32>
    %28 = arith.mulf %26, %27 : vector<32x32xf32>
    %29 = vector.broadcast %8 : vector<1x32xf32> to vector<32x32xf32>
    %30 = arith.addf %28, %29 : vector<32x32xf32>
    %cst_15 = arith.constant 0.000000e+00 : f32
    %31 = vector.broadcast %cst_15 : f32 to vector<32x32xf32>
    %32 = arith.cmpf ogt, %30, %31 : vector<32x32xf32>
    %cst_16 = arith.constant 2.000000e-01 : f32
    %33 = vector.broadcast %cst_16 : f32 to vector<32x32xf32>
    %34 = arith.mulf %33, %30 : vector<32x32xf32>
    %35 = arith.select %32, %30, %34 : vector<32x32xi1>, vector<32x32xf32>
    %36 = vector.shape_cast %35 : vector<32x32xf32> to vector<2x16x32xf32>
    %c0_17 = arith.constant 0 : index
    %c0_18 = arith.constant 0 : index
    %c0_19 = arith.constant 0 : index
    %37 = vector.load %arg21[%c0_17, %c0_18, %c0_19] : memref<2x16x32xf32, #tpu.memory_space<vmem>>, vector<2x16x32xf32>
    tpu.vector_store %arg21[%c0_17, %c0_18, %c0_19], %36 {strides = array<i32>} : memref<2x16x32xf32, #tpu.memory_space<vmem>>, vector<2x16x32xf32>,
    %38 = vector.shape_cast %35 : vector<32x32xf32> to vector<2x16x32xf32>
    %c0_20 = arith.constant 0 : index
    %c0_21 = arith.constant 0 : index
    %c0_22 = arith.constant 0 : index
    %39 = vector.load %arg6[%c0_20, %c0_21, %c0_22] : memref<4x96x32xf32, #tpu.memory_space<vmem>>, vector<1x96x32xf32>
    %40 = vector.shape_cast %39 : vector<1x96x32xf32> to vector<96x32xf32>
    %c0_23 = arith.constant 0 : index
    %c0_24 = arith.constant 0 : index
    %c0_25 = arith.constant 0 : index
    %41 = vector.load %arg7[%c0_23, %c0_24, %c0_25] : memref<4x1x32xf32, #tpu.memory_space<vmem>>, vector<1x1x32xf32>
    %42 = vector.shape_cast %41 : vector<1x1x32xf32> to vector<1x32xf32>
    %cst_26 = arith.constant 0.000000e+00 : f32
    %43 = vector.broadcast %cst_26 : f32 to vector<2x1x32xf32>
    %44 = vector.extract_strided_slice %38 {offsets = [0, 0, 0], sizes = [2, 15, 32], strides = [1, 1, 1]} : vector<2x16x32xf32> to vector<2x15x32xf32>
    %45 = tpu.concatenate %43, %44 in 1 : vector<2x1x32xf32>, vector<2x15x32xf32> -> vector<2x16x32xf32>
    %46 = vector.extract_strided_slice %38 {offsets = [0, 1, 0], sizes = [2, 15, 32], strides = [1, 1, 1]} : vector<2x16x32xf32> to vector<2x15x32xf32>
    %47 = tpu.concatenate %46, %43 in 1 : vector<2x15x32xf32>, vector<2x1x32xf32> -> vector<2x16x32xf32>
    %48 = tpu.concatenate %45, %38, %47 in 2 : vector<2x16x32xf32>, vector<2x16x32xf32>, vector<2x16x32xf32> -> vector<2x16x96xf32>
    %49 = vector.shape_cast %48 : vector<2x16x96xf32> to vector<32x96xf32>
    %cst_27 = arith.constant dense<0.000000e+00> : vector<32x32xf32>
    %50 = tpu.matmul %49, %40, %cst_27 {dimension_numbers = #tpu.dot_dimension_numbers<[1], [0], [0], [1], [0, 0, 1, 1], [], []>} : vector<32x96xf32>, vector<96x32xf32>, vector<32x32xf32> -> vector<32x32xf32>
    %51 = vector.broadcast %42 : vector<1x32xf32> to vector<32x32xf32>
    %52 = arith.addf %50, %51 : vector<32x32xf32>
    %c0_28 = arith.constant 0 : index
    %c0_29 = arith.constant 0 : index
    %c0_30 = arith.constant 0 : index
    %53 = vector.load %arg8[%c0_28, %c0_29, %c0_30] : memref<4x1x32xf32, #tpu.memory_space<vmem>>, vector<1x1x32xf32>
    %54 = vector.shape_cast %53 : vector<1x1x32xf32> to vector<1x32xf32>
    %c0_31 = arith.constant 0 : index
    %c0_32 = arith.constant 0 : index
    %c0_33 = arith.constant 0 : index
    %55 = vector.load %arg9[%c0_31, %c0_32, %c0_33] : memref<4x1x32xf32, #tpu.memory_space<vmem>>, vector<1x1x32xf32>
    %56 = vector.shape_cast %55 : vector<1x1x32xf32> to vector<1x32xf32>
    %cst_34 = arith.constant dense<0.000000e+00> : vector<32xf32>
    %57 = vector.multi_reduction <add>, %52, %cst_34 [1] : vector<32x32xf32> to vector<32xf32>
    %58 = vector.shape_cast %57 : vector<32xf32> to vector<32x1xf32>
    %cst_35 = arith.constant 3.200000e+01 : f32
    %59 = vector.broadcast %cst_35 : f32 to vector<32x1xf32>
    %60 = arith.divf %58, %59 : vector<32x1xf32>
    %61 = vector.broadcast %60 : vector<32x1xf32> to vector<32x32xf32>
    %62 = arith.subf %52, %61 : vector<32x32xf32>
    %63 = arith.mulf %62, %62 : vector<32x32xf32>
    %cst_36 = arith.constant dense<0.000000e+00> : vector<32xf32>
    %64 = vector.multi_reduction <add>, %63, %cst_36 [1] : vector<32x32xf32> to vector<32xf32>
    %65 = vector.shape_cast %64 : vector<32xf32> to vector<32x1xf32>
    %cst_37 = arith.constant 3.200000e+01 : f32
    %66 = vector.broadcast %cst_37 : f32 to vector<32x1xf32>
    %67 = arith.divf %65, %66 : vector<32x1xf32>
    %68 = vector.broadcast %60 : vector<32x1xf32> to vector<32x32xf32>
    %69 = arith.subf %52, %68 : vector<32x32xf32>
    %cst_38 = arith.constant 9.99999974E-6 : f32
    %70 = vector.broadcast %cst_38 : f32 to vector<32x1xf32>
    %71 = arith.addf %67, %70 : vector<32x1xf32>
    %72 = math.rsqrt %71 : vector<32x1xf32>
    %73 = vector.broadcast %72 : vector<32x1xf32> to vector<32x32xf32>
    %74 = arith.mulf %69, %73 : vector<32x32xf32>
    %75 = vector.broadcast %54 : vector<1x32xf32> to vector<32x32xf32>
    %76 = arith.mulf %74, %75 : vector<32x32xf32>
    %77 = vector.broadcast %56 : vector<1x32xf32> to vector<32x32xf32>
    %78 = arith.addf %76, %77 : vector<32x32xf32>
    %cst_39 = arith.constant 0.000000e+00 : f32
    %79 = vector.broadcast %cst_39 : f32 to vector<32x32xf32>
    %80 = arith.cmpf ogt, %78, %79 : vector<32x32xf32>
    %cst_40 = arith.constant 2.000000e-01 : f32
    %81 = vector.broadcast %cst_40 : f32 to vector<32x32xf32>
    %82 = arith.mulf %81, %78 : vector<32x32xf32>
    %83 = arith.select %80, %78, %82 : vector<32x32xi1>, vector<32x32xf32>
    %84 = vector.shape_cast %83 : vector<32x32xf32> to vector<2x16x32xf32>
    %c0_41 = arith.constant 0 : index
    %c0_42 = arith.constant 0 : index
    %c0_43 = arith.constant 0 : index
    %85 = vector.load %arg10[%c0_41, %c0_42, %c0_43] : memref<4x96x32xf32, #tpu.memory_space<vmem>>, vector<1x96x32xf32>
    %86 = vector.shape_cast %85 : vector<1x96x32xf32> to vector<96x32xf32>
    %c0_44 = arith.constant 0 : index
    %c0_45 = arith.constant 0 : index
    %c0_46 = arith.constant 0 : index
    %87 = vector.load %arg11[%c0_44, %c0_45, %c0_46] : memref<4x1x32xf32, #tpu.memory_space<vmem>>, vector<1x1x32xf32>
    %88 = vector.shape_cast %87 : vector<1x1x32xf32> to vector<1x32xf32>
    %cst_47 = arith.constant 0.000000e+00 : f32
    %89 = vector.broadcast %cst_47 : f32 to vector<2x1x32xf32>
    %90 = vector.extract_strided_slice %84 {offsets = [0, 0, 0], sizes = [2, 15, 32], strides = [1, 1, 1]} : vector<2x16x32xf32> to vector<2x15x32xf32>
    %91 = tpu.concatenate %89, %90 in 1 : vector<2x1x32xf32>, vector<2x15x32xf32> -> vector<2x16x32xf32>
    %92 = vector.extract_strided_slice %84 {offsets = [0, 1, 0], sizes = [2, 15, 32], strides = [1, 1, 1]} : vector<2x16x32xf32> to vector<2x15x32xf32>
    %93 = tpu.concatenate %92, %89 in 1 : vector<2x15x32xf32>, vector<2x1x32xf32> -> vector<2x16x32xf32>
    %94 = tpu.concatenate %91, %84, %93 in 2 : vector<2x16x32xf32>, vector<2x16x32xf32>, vector<2x16x32xf32> -> vector<2x16x96xf32>
    %95 = vector.shape_cast %94 : vector<2x16x96xf32> to vector<32x96xf32>
    %cst_48 = arith.constant dense<0.000000e+00> : vector<32x32xf32>
    %96 = tpu.matmul %95, %86, %cst_48 {dimension_numbers = #tpu.dot_dimension_numbers<[1], [0], [0], [1], [0, 0, 1, 1], [], []>} : vector<32x96xf32>, vector<96x32xf32>, vector<32x32xf32> -> vector<32x32xf32>
    %97 = vector.broadcast %88 : vector<1x32xf32> to vector<32x32xf32>
    %98 = arith.addf %96, %97 : vector<32x32xf32>
    %c0_49 = arith.constant 0 : index
    %c0_50 = arith.constant 0 : index
    %c0_51 = arith.constant 0 : index
    %99 = vector.load %arg12[%c0_49, %c0_50, %c0_51] : memref<4x1x32xf32, #tpu.memory_space<vmem>>, vector<1x1x32xf32>
    %100 = vector.shape_cast %99 : vector<1x1x32xf32> to vector<1x32xf32>
    %c0_52 = arith.constant 0 : index
    %c0_53 = arith.constant 0 : index
    %c0_54 = arith.constant 0 : index
    %101 = vector.load %arg13[%c0_52, %c0_53, %c0_54] : memref<4x1x32xf32, #tpu.memory_space<vmem>>, vector<1x1x32xf32>
    %102 = vector.shape_cast %101 : vector<1x1x32xf32> to vector<1x32xf32>
    %cst_55 = arith.constant dense<0.000000e+00> : vector<32xf32>
    %103 = vector.multi_reduction <add>, %98, %cst_55 [1] : vector<32x32xf32> to vector<32xf32>
    %104 = vector.shape_cast %103 : vector<32xf32> to vector<32x1xf32>
    %cst_56 = arith.constant 3.200000e+01 : f32
    %105 = vector.broadcast %cst_56 : f32 to vector<32x1xf32>
    %106 = arith.divf %104, %105 : vector<32x1xf32>
    %107 = vector.broadcast %106 : vector<32x1xf32> to vector<32x32xf32>
    %108 = arith.subf %98, %107 : vector<32x32xf32>
    %109 = arith.mulf %108, %108 : vector<32x32xf32>
    %cst_57 = arith.constant dense<0.000000e+00> : vector<32xf32>
    %110 = vector.multi_reduction <add>, %109, %cst_57 [1] : vector<32x32xf32> to vector<32xf32>
    %111 = vector.shape_cast %110 : vector<32xf32> to vector<32x1xf32>
    %cst_58 = arith.constant 3.200000e+01 : f32
    %112 = vector.broadcast %cst_58 : f32 to vector<32x1xf32>
    %113 = arith.divf %111, %112 : vector<32x1xf32>
    %114 = vector.broadcast %106 : vector<32x1xf32> to vector<32x32xf32>
    %115 = arith.subf %98, %114 : vector<32x32xf32>
    %cst_59 = arith.constant 9.99999974E-6 : f32
    %116 = vector.broadcast %cst_59 : f32 to vector<32x1xf32>
    %117 = arith.addf %113, %116 : vector<32x1xf32>
    %118 = math.rsqrt %117 : vector<32x1xf32>
    %119 = vector.broadcast %118 : vector<32x1xf32> to vector<32x32xf32>
    %120 = arith.mulf %115, %119 : vector<32x32xf32>
    %121 = vector.broadcast %100 : vector<1x32xf32> to vector<32x32xf32>
    %122 = arith.mulf %120, %121 : vector<32x32xf32>
    %123 = vector.broadcast %102 : vector<1x32xf32> to vector<32x32xf32>
    %124 = arith.addf %122, %123 : vector<32x32xf32>
    %125 = arith.addf %124, %35 : vector<32x32xf32>
    %cst_60 = arith.constant 0.000000e+00 : f32
    %126 = vector.broadcast %cst_60 : f32 to vector<32x32xf32>
    %127 = arith.cmpf ogt, %125, %126 : vector<32x32xf32>
    %cst_61 = arith.constant 2.000000e-01 : f32
    %128 = vector.broadcast %cst_61 : f32 to vector<32x32xf32>
    %129 = arith.mulf %128, %125 : vector<32x32xf32>
    %130 = arith.select %127, %125, %129 : vector<32x32xi1>, vector<32x32xf32>
    %131 = vector.shape_cast %130 : vector<32x32xf32> to vector<2x16x32xf32>
    %c0_62 = arith.constant 0 : index
    %c0_63 = arith.constant 0 : index
    %c0_64 = arith.constant 0 : index
    %132 = vector.load %arg22[%c0_62, %c0_63, %c0_64] : memref<2x16x32xf32, #tpu.memory_space<vmem>>, vector<2x16x32xf32>
    tpu.vector_store %arg22[%c0_62, %c0_63, %c0_64], %131 {strides = array<i32>} : memref<2x16x32xf32, #tpu.memory_space<vmem>>, vector<2x16x32xf32>,
    %133 = vector.shape_cast %130 : vector<32x32xf32> to vector<2x16x32xf32>
    %c1 = arith.constant 1 : index
    %c0_65 = arith.constant 0 : index
    %c0_66 = arith.constant 0 : index
    %134 = vector.load %arg6[%c1, %c0_65, %c0_66] : memref<4x96x32xf32, #tpu.memory_space<vmem>>, vector<1x96x32xf32>
    %135 = vector.shape_cast %134 : vector<1x96x32xf32> to vector<96x32xf32>
    %c1_67 = arith.constant 1 : index
    %c0_68 = arith.constant 0 : index
    %c0_69 = arith.constant 0 : index
    %136 = vector.load %arg7[%c1_67, %c0_68, %c0_69] : memref<4x1x32xf32, #tpu.memory_space<vmem>>, vector<1x1x32xf32>
    %137 = vector.shape_cast %136 : vector<1x1x32xf32> to vector<1x32xf32>
    %cst_70 = arith.constant 0.000000e+00 : f32
    %138 = vector.broadcast %cst_70 : f32 to vector<2x2x32xf32>
    %139 = vector.extract_strided_slice %133 {offsets = [0, 0, 0], sizes = [2, 14, 32], strides = [1, 1, 1]} : vector<2x16x32xf32> to vector<2x14x32xf32>
    %140 = tpu.concatenate %138, %139 in 1 : vector<2x2x32xf32>, vector<2x14x32xf32> -> vector<2x16x32xf32>
    %141 = vector.extract_strided_slice %133 {offsets = [0, 2, 0], sizes = [2, 14, 32], strides = [1, 1, 1]} : vector<2x16x32xf32> to vector<2x14x32xf32>
    %142 = tpu.concatenate %141, %138 in 1 : vector<2x14x32xf32>, vector<2x2x32xf32> -> vector<2x16x32xf32>
    %143 = tpu.concatenate %140, %133, %142 in 2 : vector<2x16x32xf32>, vector<2x16x32xf32>, vector<2x16x32xf32> -> vector<2x16x96xf32>
    %144 = vector.shape_cast %143 : vector<2x16x96xf32> to vector<32x96xf32>
    %cst_71 = arith.constant dense<0.000000e+00> : vector<32x32xf32>
    %145 = tpu.matmul %144, %135, %cst_71 {dimension_numbers = #tpu.dot_dimension_numbers<[1], [0], [0], [1], [0, 0, 1, 1], [], []>} : vector<32x96xf32>, vector<96x32xf32>, vector<32x32xf32> -> vector<32x32xf32>
    %146 = vector.broadcast %137 : vector<1x32xf32> to vector<32x32xf32>
    %147 = arith.addf %145, %146 : vector<32x32xf32>
    %c1_72 = arith.constant 1 : index
    %c0_73 = arith.constant 0 : index
    %c0_74 = arith.constant 0 : index
    %148 = vector.load %arg8[%c1_72, %c0_73, %c0_74] : memref<4x1x32xf32, #tpu.memory_space<vmem>>, vector<1x1x32xf32>
    %149 = vector.shape_cast %148 : vector<1x1x32xf32> to vector<1x32xf32>
    %c1_75 = arith.constant 1 : index
    %c0_76 = arith.constant 0 : index
    %c0_77 = arith.constant 0 : index
    %150 = vector.load %arg9[%c1_75, %c0_76, %c0_77] : memref<4x1x32xf32, #tpu.memory_space<vmem>>, vector<1x1x32xf32>
    %151 = vector.shape_cast %150 : vector<1x1x32xf32> to vector<1x32xf32>
    %cst_78 = arith.constant dense<0.000000e+00> : vector<32xf32>
    %152 = vector.multi_reduction <add>, %147, %cst_78 [1] : vector<32x32xf32> to vector<32xf32>
    %153 = vector.shape_cast %152 : vector<32xf32> to vector<32x1xf32>
    %cst_79 = arith.constant 3.200000e+01 : f32
    %154 = vector.broadcast %cst_79 : f32 to vector<32x1xf32>
    %155 = arith.divf %153, %154 : vector<32x1xf32>
    %156 = vector.broadcast %155 : vector<32x1xf32> to vector<32x32xf32>
    %157 = arith.subf %147, %156 : vector<32x32xf32>
    %158 = arith.mulf %157, %157 : vector<32x32xf32>
    %cst_80 = arith.constant dense<0.000000e+00> : vector<32xf32>
    %159 = vector.multi_reduction <add>, %158, %cst_80 [1] : vector<32x32xf32> to vector<32xf32>
    %160 = vector.shape_cast %159 : vector<32xf32> to vector<32x1xf32>
    %cst_81 = arith.constant 3.200000e+01 : f32
    %161 = vector.broadcast %cst_81 : f32 to vector<32x1xf32>
    %162 = arith.divf %160, %161 : vector<32x1xf32>
    %163 = vector.broadcast %155 : vector<32x1xf32> to vector<32x32xf32>
    %164 = arith.subf %147, %163 : vector<32x32xf32>
    %cst_82 = arith.constant 9.99999974E-6 : f32
    %165 = vector.broadcast %cst_82 : f32 to vector<32x1xf32>
    %166 = arith.addf %162, %165 : vector<32x1xf32>
    %167 = math.rsqrt %166 : vector<32x1xf32>
    %168 = vector.broadcast %167 : vector<32x1xf32> to vector<32x32xf32>
    %169 = arith.mulf %164, %168 : vector<32x32xf32>
    %170 = vector.broadcast %149 : vector<1x32xf32> to vector<32x32xf32>
    %171 = arith.mulf %169, %170 : vector<32x32xf32>
    %172 = vector.broadcast %151 : vector<1x32xf32> to vector<32x32xf32>
    %173 = arith.addf %171, %172 : vector<32x32xf32>
    %cst_83 = arith.constant 0.000000e+00 : f32
    %174 = vector.broadcast %cst_83 : f32 to vector<32x32xf32>
    %175 = arith.cmpf ogt, %173, %174 : vector<32x32xf32>
    %cst_84 = arith.constant 2.000000e-01 : f32
    %176 = vector.broadcast %cst_84 : f32 to vector<32x32xf32>
    %177 = arith.mulf %176, %173 : vector<32x32xf32>
    %178 = arith.select %175, %173, %177 : vector<32x32xi1>, vector<32x32xf32>
    %179 = vector.shape_cast %178 : vector<32x32xf32> to vector<2x16x32xf32>
    %c1_85 = arith.constant 1 : index
    %c0_86 = arith.constant 0 : index
    %c0_87 = arith.constant 0 : index
    %180 = vector.load %arg10[%c1_85, %c0_86, %c0_87] : memref<4x96x32xf32, #tpu.memory_space<vmem>>, vector<1x96x32xf32>
    %181 = vector.shape_cast %180 : vector<1x96x32xf32> to vector<96x32xf32>
    %c1_88 = arith.constant 1 : index
    %c0_89 = arith.constant 0 : index
    %c0_90 = arith.constant 0 : index
    %182 = vector.load %arg11[%c1_88, %c0_89, %c0_90] : memref<4x1x32xf32, #tpu.memory_space<vmem>>, vector<1x1x32xf32>
    %183 = vector.shape_cast %182 : vector<1x1x32xf32> to vector<1x32xf32>
    %cst_91 = arith.constant 0.000000e+00 : f32
    %184 = vector.broadcast %cst_91 : f32 to vector<2x2x32xf32>
    %185 = vector.extract_strided_slice %179 {offsets = [0, 0, 0], sizes = [2, 14, 32], strides = [1, 1, 1]} : vector<2x16x32xf32> to vector<2x14x32xf32>
    %186 = tpu.concatenate %184, %185 in 1 : vector<2x2x32xf32>, vector<2x14x32xf32> -> vector<2x16x32xf32>
    %187 = vector.extract_strided_slice %179 {offsets = [0, 2, 0], sizes = [2, 14, 32], strides = [1, 1, 1]} : vector<2x16x32xf32> to vector<2x14x32xf32>
    %188 = tpu.concatenate %187, %184 in 1 : vector<2x14x32xf32>, vector<2x2x32xf32> -> vector<2x16x32xf32>
    %189 = tpu.concatenate %186, %179, %188 in 2 : vector<2x16x32xf32>, vector<2x16x32xf32>, vector<2x16x32xf32> -> vector<2x16x96xf32>
    %190 = vector.shape_cast %189 : vector<2x16x96xf32> to vector<32x96xf32>
    %cst_92 = arith.constant dense<0.000000e+00> : vector<32x32xf32>
    %191 = tpu.matmul %190, %181, %cst_92 {dimension_numbers = #tpu.dot_dimension_numbers<[1], [0], [0], [1], [0, 0, 1, 1], [], []>} : vector<32x96xf32>, vector<96x32xf32>, vector<32x32xf32> -> vector<32x32xf32>
    %192 = vector.broadcast %183 : vector<1x32xf32> to vector<32x32xf32>
    %193 = arith.addf %191, %192 : vector<32x32xf32>
    %c1_93 = arith.constant 1 : index
    %c0_94 = arith.constant 0 : index
    %c0_95 = arith.constant 0 : index
    %194 = vector.load %arg12[%c1_93, %c0_94, %c0_95] : memref<4x1x32xf32, #tpu.memory_space<vmem>>, vector<1x1x32xf32>
    %195 = vector.shape_cast %194 : vector<1x1x32xf32> to vector<1x32xf32>
    %c1_96 = arith.constant 1 : index
    %c0_97 = arith.constant 0 : index
    %c0_98 = arith.constant 0 : index
    %196 = vector.load %arg13[%c1_96, %c0_97, %c0_98] : memref<4x1x32xf32, #tpu.memory_space<vmem>>, vector<1x1x32xf32>
    %197 = vector.shape_cast %196 : vector<1x1x32xf32> to vector<1x32xf32>
    %cst_99 = arith.constant dense<0.000000e+00> : vector<32xf32>
    %198 = vector.multi_reduction <add>, %193, %cst_99 [1] : vector<32x32xf32> to vector<32xf32>
    %199 = vector.shape_cast %198 : vector<32xf32> to vector<32x1xf32>
    %cst_100 = arith.constant 3.200000e+01 : f32
    %200 = vector.broadcast %cst_100 : f32 to vector<32x1xf32>
    %201 = arith.divf %199, %200 : vector<32x1xf32>
    %202 = vector.broadcast %201 : vector<32x1xf32> to vector<32x32xf32>
    %203 = arith.subf %193, %202 : vector<32x32xf32>
    %204 = arith.mulf %203, %203 : vector<32x32xf32>
    %cst_101 = arith.constant dense<0.000000e+00> : vector<32xf32>
    %205 = vector.multi_reduction <add>, %204, %cst_101 [1] : vector<32x32xf32> to vector<32xf32>
    %206 = vector.shape_cast %205 : vector<32xf32> to vector<32x1xf32>
    %cst_102 = arith.constant 3.200000e+01 : f32
    %207 = vector.broadcast %cst_102 : f32 to vector<32x1xf32>
    %208 = arith.divf %206, %207 : vector<32x1xf32>
    %209 = vector.broadcast %201 : vector<32x1xf32> to vector<32x32xf32>
    %210 = arith.subf %193, %209 : vector<32x32xf32>
    %cst_103 = arith.constant 9.99999974E-6 : f32
    %211 = vector.broadcast %cst_103 : f32 to vector<32x1xf32>
    %212 = arith.addf %208, %211 : vector<32x1xf32>
    %213 = math.rsqrt %212 : vector<32x1xf32>
    %214 = vector.broadcast %213 : vector<32x1xf32> to vector<32x32xf32>
    %215 = arith.mulf %210, %214 : vector<32x32xf32>
    %216 = vector.broadcast %195 : vector<1x32xf32> to vector<32x32xf32>
    %217 = arith.mulf %215, %216 : vector<32x32xf32>
    %218 = vector.broadcast %197 : vector<1x32xf32> to vector<32x32xf32>
    %219 = arith.addf %217, %218 : vector<32x32xf32>
    %220 = arith.addf %219, %130 : vector<32x32xf32>
    %cst_104 = arith.constant 0.000000e+00 : f32
    %221 = vector.broadcast %cst_104 : f32 to vector<32x32xf32>
    %222 = arith.cmpf ogt, %220, %221 : vector<32x32xf32>
    %cst_105 = arith.constant 2.000000e-01 : f32
    %223 = vector.broadcast %cst_105 : f32 to vector<32x32xf32>
    %224 = arith.mulf %223, %220 : vector<32x32xf32>
    %225 = arith.select %222, %220, %224 : vector<32x32xi1>, vector<32x32xf32>
    %226 = vector.shape_cast %225 : vector<32x32xf32> to vector<2x16x32xf32>
    %c0_106 = arith.constant 0 : index
    %c0_107 = arith.constant 0 : index
    %c0_108 = arith.constant 0 : index
    %227 = vector.load %arg23[%c0_106, %c0_107, %c0_108] : memref<2x16x32xf32, #tpu.memory_space<vmem>>, vector<2x16x32xf32>
    tpu.vector_store %arg23[%c0_106, %c0_107, %c0_108], %226 {strides = array<i32>} : memref<2x16x32xf32, #tpu.memory_space<vmem>>, vector<2x16x32xf32>,
    %228 = vector.shape_cast %225 : vector<32x32xf32> to vector<2x16x32xf32>
    %c2 = arith.constant 2 : index
    %c0_109 = arith.constant 0 : index
    %c0_110 = arith.constant 0 : index
    %229 = vector.load %arg6[%c2, %c0_109, %c0_110] : memref<4x96x32xf32, #tpu.memory_space<vmem>>, vector<1x96x32xf32>
    %230 = vector.shape_cast %229 : vector<1x96x32xf32> to vector<96x32xf32>
    %c2_111 = arith.constant 2 : index
    %c0_112 = arith.constant 0 : index
    %c0_113 = arith.constant 0 : index
    %231 = vector.load %arg7[%c2_111, %c0_112, %c0_113] : memref<4x1x32xf32, #tpu.memory_space<vmem>>, vector<1x1x32xf32>
    %232 = vector.shape_cast %231 : vector<1x1x32xf32> to vector<1x32xf32>
    %cst_114 = arith.constant 0.000000e+00 : f32
    %233 = vector.broadcast %cst_114 : f32 to vector<2x4x32xf32>
    %234 = vector.extract_strided_slice %228 {offsets = [0, 0, 0], sizes = [2, 12, 32], strides = [1, 1, 1]} : vector<2x16x32xf32> to vector<2x12x32xf32>
    %235 = tpu.concatenate %233, %234 in 1 : vector<2x4x32xf32>, vector<2x12x32xf32> -> vector<2x16x32xf32>
    %236 = vector.extract_strided_slice %228 {offsets = [0, 4, 0], sizes = [2, 12, 32], strides = [1, 1, 1]} : vector<2x16x32xf32> to vector<2x12x32xf32>
    %237 = tpu.concatenate %236, %233 in 1 : vector<2x12x32xf32>, vector<2x4x32xf32> -> vector<2x16x32xf32>
    %238 = tpu.concatenate %235, %228, %237 in 2 : vector<2x16x32xf32>, vector<2x16x32xf32>, vector<2x16x32xf32> -> vector<2x16x96xf32>
    %239 = vector.shape_cast %238 : vector<2x16x96xf32> to vector<32x96xf32>
    %cst_115 = arith.constant dense<0.000000e+00> : vector<32x32xf32>
    %240 = tpu.matmul %239, %230, %cst_115 {dimension_numbers = #tpu.dot_dimension_numbers<[1], [0], [0], [1], [0, 0, 1, 1], [], []>} : vector<32x96xf32>, vector<96x32xf32>, vector<32x32xf32> -> vector<32x32xf32>
    %241 = vector.broadcast %232 : vector<1x32xf32> to vector<32x32xf32>
    %242 = arith.addf %240, %241 : vector<32x32xf32>
    %c2_116 = arith.constant 2 : index
    %c0_117 = arith.constant 0 : index
    %c0_118 = arith.constant 0 : index
    %243 = vector.load %arg8[%c2_116, %c0_117, %c0_118] : memref<4x1x32xf32, #tpu.memory_space<vmem>>, vector<1x1x32xf32>
    %244 = vector.shape_cast %243 : vector<1x1x32xf32> to vector<1x32xf32>
    %c2_119 = arith.constant 2 : index
    %c0_120 = arith.constant 0 : index
    %c0_121 = arith.constant 0 : index
    %245 = vector.load %arg9[%c2_119, %c0_120, %c0_121] : memref<4x1x32xf32, #tpu.memory_space<vmem>>, vector<1x1x32xf32>
    %246 = vector.shape_cast %245 : vector<1x1x32xf32> to vector<1x32xf32>
    %cst_122 = arith.constant dense<0.000000e+00> : vector<32xf32>
    %247 = vector.multi_reduction <add>, %242, %cst_122 [1] : vector<32x32xf32> to vector<32xf32>
    %248 = vector.shape_cast %247 : vector<32xf32> to vector<32x1xf32>
    %cst_123 = arith.constant 3.200000e+01 : f32
    %249 = vector.broadcast %cst_123 : f32 to vector<32x1xf32>
    %250 = arith.divf %248, %249 : vector<32x1xf32>
    %251 = vector.broadcast %250 : vector<32x1xf32> to vector<32x32xf32>
    %252 = arith.subf %242, %251 : vector<32x32xf32>
    %253 = arith.mulf %252, %252 : vector<32x32xf32>
    %cst_124 = arith.constant dense<0.000000e+00> : vector<32xf32>
    %254 = vector.multi_reduction <add>, %253, %cst_124 [1] : vector<32x32xf32> to vector<32xf32>
    %255 = vector.shape_cast %254 : vector<32xf32> to vector<32x1xf32>
    %cst_125 = arith.constant 3.200000e+01 : f32
    %256 = vector.broadcast %cst_125 : f32 to vector<32x1xf32>
    %257 = arith.divf %255, %256 : vector<32x1xf32>
    %258 = vector.broadcast %250 : vector<32x1xf32> to vector<32x32xf32>
    %259 = arith.subf %242, %258 : vector<32x32xf32>
    %cst_126 = arith.constant 9.99999974E-6 : f32
    %260 = vector.broadcast %cst_126 : f32 to vector<32x1xf32>
    %261 = arith.addf %257, %260 : vector<32x1xf32>
    %262 = math.rsqrt %261 : vector<32x1xf32>
    %263 = vector.broadcast %262 : vector<32x1xf32> to vector<32x32xf32>
    %264 = arith.mulf %259, %263 : vector<32x32xf32>
    %265 = vector.broadcast %244 : vector<1x32xf32> to vector<32x32xf32>
    %266 = arith.mulf %264, %265 : vector<32x32xf32>
    %267 = vector.broadcast %246 : vector<1x32xf32> to vector<32x32xf32>
    %268 = arith.addf %266, %267 : vector<32x32xf32>
    %cst_127 = arith.constant 0.000000e+00 : f32
    %269 = vector.broadcast %cst_127 : f32 to vector<32x32xf32>
    %270 = arith.cmpf ogt, %268, %269 : vector<32x32xf32>
    %cst_128 = arith.constant 2.000000e-01 : f32
    %271 = vector.broadcast %cst_128 : f32 to vector<32x32xf32>
    %272 = arith.mulf %271, %268 : vector<32x32xf32>
    %273 = arith.select %270, %268, %272 : vector<32x32xi1>, vector<32x32xf32>
    %274 = vector.shape_cast %273 : vector<32x32xf32> to vector<2x16x32xf32>
    %c2_129 = arith.constant 2 : index
    %c0_130 = arith.constant 0 : index
    %c0_131 = arith.constant 0 : index
    %275 = vector.load %arg10[%c2_129, %c0_130, %c0_131] : memref<4x96x32xf32, #tpu.memory_space<vmem>>, vector<1x96x32xf32>
    %276 = vector.shape_cast %275 : vector<1x96x32xf32> to vector<96x32xf32>
    %c2_132 = arith.constant 2 : index
    %c0_133 = arith.constant 0 : index
    %c0_134 = arith.constant 0 : index
    %277 = vector.load %arg11[%c2_132, %c0_133, %c0_134] : memref<4x1x32xf32, #tpu.memory_space<vmem>>, vector<1x1x32xf32>
    %278 = vector.shape_cast %277 : vector<1x1x32xf32> to vector<1x32xf32>
    %cst_135 = arith.constant 0.000000e+00 : f32
    %279 = vector.broadcast %cst_135 : f32 to vector<2x4x32xf32>
    %280 = vector.extract_strided_slice %274 {offsets = [0, 0, 0], sizes = [2, 12, 32], strides = [1, 1, 1]} : vector<2x16x32xf32> to vector<2x12x32xf32>
    %281 = tpu.concatenate %279, %280 in 1 : vector<2x4x32xf32>, vector<2x12x32xf32> -> vector<2x16x32xf32>
    %282 = vector.extract_strided_slice %274 {offsets = [0, 4, 0], sizes = [2, 12, 32], strides = [1, 1, 1]} : vector<2x16x32xf32> to vector<2x12x32xf32>
    %283 = tpu.concatenate %282, %279 in 1 : vector<2x12x32xf32>, vector<2x4x32xf32> -> vector<2x16x32xf32>
    %284 = tpu.concatenate %281, %274, %283 in 2 : vector<2x16x32xf32>, vector<2x16x32xf32>, vector<2x16x32xf32> -> vector<2x16x96xf32>
    %285 = vector.shape_cast %284 : vector<2x16x96xf32> to vector<32x96xf32>
    %cst_136 = arith.constant dense<0.000000e+00> : vector<32x32xf32>
    %286 = tpu.matmul %285, %276, %cst_136 {dimension_numbers = #tpu.dot_dimension_numbers<[1], [0], [0], [1], [0, 0, 1, 1], [], []>} : vector<32x96xf32>, vector<96x32xf32>, vector<32x32xf32> -> vector<32x32xf32>
    %287 = vector.broadcast %278 : vector<1x32xf32> to vector<32x32xf32>
    %288 = arith.addf %286, %287 : vector<32x32xf32>
    %c2_137 = arith.constant 2 : index
    %c0_138 = arith.constant 0 : index
    %c0_139 = arith.constant 0 : index
    %289 = vector.load %arg12[%c2_137, %c0_138, %c0_139] : memref<4x1x32xf32, #tpu.memory_space<vmem>>, vector<1x1x32xf32>
    %290 = vector.shape_cast %289 : vector<1x1x32xf32> to vector<1x32xf32>
    %c2_140 = arith.constant 2 : index
    %c0_141 = arith.constant 0 : index
    %c0_142 = arith.constant 0 : index
    %291 = vector.load %arg13[%c2_140, %c0_141, %c0_142] : memref<4x1x32xf32, #tpu.memory_space<vmem>>, vector<1x1x32xf32>
    %292 = vector.shape_cast %291 : vector<1x1x32xf32> to vector<1x32xf32>
    %cst_143 = arith.constant dense<0.000000e+00> : vector<32xf32>
    %293 = vector.multi_reduction <add>, %288, %cst_143 [1] : vector<32x32xf32> to vector<32xf32>
    %294 = vector.shape_cast %293 : vector<32xf32> to vector<32x1xf32>
    %cst_144 = arith.constant 3.200000e+01 : f32
    %295 = vector.broadcast %cst_144 : f32 to vector<32x1xf32>
    %296 = arith.divf %294, %295 : vector<32x1xf32>
    %297 = vector.broadcast %296 : vector<32x1xf32> to vector<32x32xf32>
    %298 = arith.subf %288, %297 : vector<32x32xf32>
    %299 = arith.mulf %298, %298 : vector<32x32xf32>
    %cst_145 = arith.constant dense<0.000000e+00> : vector<32xf32>
    %300 = vector.multi_reduction <add>, %299, %cst_145 [1] : vector<32x32xf32> to vector<32xf32>
    %301 = vector.shape_cast %300 : vector<32xf32> to vector<32x1xf32>
    %cst_146 = arith.constant 3.200000e+01 : f32
    %302 = vector.broadcast %cst_146 : f32 to vector<32x1xf32>
    %303 = arith.divf %301, %302 : vector<32x1xf32>
    %304 = vector.broadcast %296 : vector<32x1xf32> to vector<32x32xf32>
    %305 = arith.subf %288, %304 : vector<32x32xf32>
    %cst_147 = arith.constant 9.99999974E-6 : f32
    %306 = vector.broadcast %cst_147 : f32 to vector<32x1xf32>
    %307 = arith.addf %303, %306 : vector<32x1xf32>
    %308 = math.rsqrt %307 : vector<32x1xf32>
    %309 = vector.broadcast %308 : vector<32x1xf32> to vector<32x32xf32>
    %310 = arith.mulf %305, %309 : vector<32x32xf32>
    %311 = vector.broadcast %290 : vector<1x32xf32> to vector<32x32xf32>
    %312 = arith.mulf %310, %311 : vector<32x32xf32>
    %313 = vector.broadcast %292 : vector<1x32xf32> to vector<32x32xf32>
    %314 = arith.addf %312, %313 : vector<32x32xf32>
    %315 = arith.addf %314, %225 : vector<32x32xf32>
    %cst_148 = arith.constant 0.000000e+00 : f32
    %316 = vector.broadcast %cst_148 : f32 to vector<32x32xf32>
    %317 = arith.cmpf ogt, %315, %316 : vector<32x32xf32>
    %cst_149 = arith.constant 2.000000e-01 : f32
    %318 = vector.broadcast %cst_149 : f32 to vector<32x32xf32>
    %319 = arith.mulf %318, %315 : vector<32x32xf32>
    %320 = arith.select %317, %315, %319 : vector<32x32xi1>, vector<32x32xf32>
    %321 = vector.shape_cast %320 : vector<32x32xf32> to vector<2x16x32xf32>
    %c0_150 = arith.constant 0 : index
    %c0_151 = arith.constant 0 : index
    %c0_152 = arith.constant 0 : index
    %322 = vector.load %arg24[%c0_150, %c0_151, %c0_152] : memref<2x16x32xf32, #tpu.memory_space<vmem>>, vector<2x16x32xf32>
    tpu.vector_store %arg24[%c0_150, %c0_151, %c0_152], %321 {strides = array<i32>} : memref<2x16x32xf32, #tpu.memory_space<vmem>>, vector<2x16x32xf32>,
    %323 = vector.shape_cast %320 : vector<32x32xf32> to vector<2x16x32xf32>
    %c3 = arith.constant 3 : index
    %c0_153 = arith.constant 0 : index
    %c0_154 = arith.constant 0 : index
    %324 = vector.load %arg6[%c3, %c0_153, %c0_154] : memref<4x96x32xf32, #tpu.memory_space<vmem>>, vector<1x96x32xf32>
    %325 = vector.shape_cast %324 : vector<1x96x32xf32> to vector<96x32xf32>
    %c3_155 = arith.constant 3 : index
    %c0_156 = arith.constant 0 : index
    %c0_157 = arith.constant 0 : index
    %326 = vector.load %arg7[%c3_155, %c0_156, %c0_157] : memref<4x1x32xf32, #tpu.memory_space<vmem>>, vector<1x1x32xf32>
    %327 = vector.shape_cast %326 : vector<1x1x32xf32> to vector<1x32xf32>
    %cst_158 = arith.constant 0.000000e+00 : f32
    %328 = vector.broadcast %cst_158 : f32 to vector<2x8x32xf32>
    %329 = vector.extract_strided_slice %323 {offsets = [0, 0, 0], sizes = [2, 8, 32], strides = [1, 1, 1]} : vector<2x16x32xf32> to vector<2x8x32xf32>
    %330 = tpu.concatenate %328, %329 in 1 : vector<2x8x32xf32>, vector<2x8x32xf32> -> vector<2x16x32xf32>
    %331 = vector.extract_strided_slice %323 {offsets = [0, 8, 0], sizes = [2, 8, 32], strides = [1, 1, 1]} : vector<2x16x32xf32> to vector<2x8x32xf32>
    %332 = tpu.concatenate %331, %328 in 1 : vector<2x8x32xf32>, vector<2x8x32xf32> -> vector<2x16x32xf32>
    %333 = tpu.concatenate %330, %323, %332 in 2 : vector<2x16x32xf32>, vector<2x16x32xf32>, vector<2x16x32xf32> -> vector<2x16x96xf32>
    %334 = vector.shape_cast %333 : vector<2x16x96xf32> to vector<32x96xf32>
    %cst_159 = arith.constant dense<0.000000e+00> : vector<32x32xf32>
    %335 = tpu.matmul %334, %325, %cst_159 {dimension_numbers = #tpu.dot_dimension_numbers<[1], [0], [0], [1], [0, 0, 1, 1], [], []>} : vector<32x96xf32>, vector<96x32xf32>, vector<32x32xf32> -> vector<32x32xf32>
    %336 = vector.broadcast %327 : vector<1x32xf32> to vector<32x32xf32>
    %337 = arith.addf %335, %336 : vector<32x32xf32>
    %c3_160 = arith.constant 3 : index
    %c0_161 = arith.constant 0 : index
    %c0_162 = arith.constant 0 : index
    %338 = vector.load %arg8[%c3_160, %c0_161, %c0_162] : memref<4x1x32xf32, #tpu.memory_space<vmem>>, vector<1x1x32xf32>
    %339 = vector.shape_cast %338 : vector<1x1x32xf32> to vector<1x32xf32>
    %c3_163 = arith.constant 3 : index
    %c0_164 = arith.constant 0 : index
    %c0_165 = arith.constant 0 : index
    %340 = vector.load %arg9[%c3_163, %c0_164, %c0_165] : memref<4x1x32xf32, #tpu.memory_space<vmem>>, vector<1x1x32xf32>
    %341 = vector.shape_cast %340 : vector<1x1x32xf32> to vector<1x32xf32>
    %cst_166 = arith.constant dense<0.000000e+00> : vector<32xf32>
    %342 = vector.multi_reduction <add>, %337, %cst_166 [1] : vector<32x32xf32> to vector<32xf32>
    %343 = vector.shape_cast %342 : vector<32xf32> to vector<32x1xf32>
    %cst_167 = arith.constant 3.200000e+01 : f32
    %344 = vector.broadcast %cst_167 : f32 to vector<32x1xf32>
    %345 = arith.divf %343, %344 : vector<32x1xf32>
    %346 = vector.broadcast %345 : vector<32x1xf32> to vector<32x32xf32>
    %347 = arith.subf %337, %346 : vector<32x32xf32>
    %348 = arith.mulf %347, %347 : vector<32x32xf32>
    %cst_168 = arith.constant dense<0.000000e+00> : vector<32xf32>
    %349 = vector.multi_reduction <add>, %348, %cst_168 [1] : vector<32x32xf32> to vector<32xf32>
    %350 = vector.shape_cast %349 : vector<32xf32> to vector<32x1xf32>
    %cst_169 = arith.constant 3.200000e+01 : f32
    %351 = vector.broadcast %cst_169 : f32 to vector<32x1xf32>
    %352 = arith.divf %350, %351 : vector<32x1xf32>
    %353 = vector.broadcast %345 : vector<32x1xf32> to vector<32x32xf32>
    %354 = arith.subf %337, %353 : vector<32x32xf32>
    %cst_170 = arith.constant 9.99999974E-6 : f32
    %355 = vector.broadcast %cst_170 : f32 to vector<32x1xf32>
    %356 = arith.addf %352, %355 : vector<32x1xf32>
    %357 = math.rsqrt %356 : vector<32x1xf32>
    %358 = vector.broadcast %357 : vector<32x1xf32> to vector<32x32xf32>
    %359 = arith.mulf %354, %358 : vector<32x32xf32>
    %360 = vector.broadcast %339 : vector<1x32xf32> to vector<32x32xf32>
    %361 = arith.mulf %359, %360 : vector<32x32xf32>
    %362 = vector.broadcast %341 : vector<1x32xf32> to vector<32x32xf32>
    %363 = arith.addf %361, %362 : vector<32x32xf32>
    %cst_171 = arith.constant 0.000000e+00 : f32
    %364 = vector.broadcast %cst_171 : f32 to vector<32x32xf32>
    %365 = arith.cmpf ogt, %363, %364 : vector<32x32xf32>
    %cst_172 = arith.constant 2.000000e-01 : f32
    %366 = vector.broadcast %cst_172 : f32 to vector<32x32xf32>
    %367 = arith.mulf %366, %363 : vector<32x32xf32>
    %368 = arith.select %365, %363, %367 : vector<32x32xi1>, vector<32x32xf32>
    %369 = vector.shape_cast %368 : vector<32x32xf32> to vector<2x16x32xf32>
    %c3_173 = arith.constant 3 : index
    %c0_174 = arith.constant 0 : index
    %c0_175 = arith.constant 0 : index
    %370 = vector.load %arg10[%c3_173, %c0_174, %c0_175] : memref<4x96x32xf32, #tpu.memory_space<vmem>>, vector<1x96x32xf32>
    %371 = vector.shape_cast %370 : vector<1x96x32xf32> to vector<96x32xf32>
    %c3_176 = arith.constant 3 : index
    %c0_177 = arith.constant 0 : index
    %c0_178 = arith.constant 0 : index
    %372 = vector.load %arg11[%c3_176, %c0_177, %c0_178] : memref<4x1x32xf32, #tpu.memory_space<vmem>>, vector<1x1x32xf32>
    %373 = vector.shape_cast %372 : vector<1x1x32xf32> to vector<1x32xf32>
    %cst_179 = arith.constant 0.000000e+00 : f32
    %374 = vector.broadcast %cst_179 : f32 to vector<2x8x32xf32>
    %375 = vector.extract_strided_slice %369 {offsets = [0, 0, 0], sizes = [2, 8, 32], strides = [1, 1, 1]} : vector<2x16x32xf32> to vector<2x8x32xf32>
    %376 = tpu.concatenate %374, %375 in 1 : vector<2x8x32xf32>, vector<2x8x32xf32> -> vector<2x16x32xf32>
    %377 = vector.extract_strided_slice %369 {offsets = [0, 8, 0], sizes = [2, 8, 32], strides = [1, 1, 1]} : vector<2x16x32xf32> to vector<2x8x32xf32>
    %378 = tpu.concatenate %377, %374 in 1 : vector<2x8x32xf32>, vector<2x8x32xf32> -> vector<2x16x32xf32>
    %379 = tpu.concatenate %376, %369, %378 in 2 : vector<2x16x32xf32>, vector<2x16x32xf32>, vector<2x16x32xf32> -> vector<2x16x96xf32>
    %380 = vector.shape_cast %379 : vector<2x16x96xf32> to vector<32x96xf32>
    %cst_180 = arith.constant dense<0.000000e+00> : vector<32x32xf32>
    %381 = tpu.matmul %380, %371, %cst_180 {dimension_numbers = #tpu.dot_dimension_numbers<[1], [0], [0], [1], [0, 0, 1, 1], [], []>} : vector<32x96xf32>, vector<96x32xf32>, vector<32x32xf32> -> vector<32x32xf32>
    %382 = vector.broadcast %373 : vector<1x32xf32> to vector<32x32xf32>
    %383 = arith.addf %381, %382 : vector<32x32xf32>
    %c3_181 = arith.constant 3 : index
    %c0_182 = arith.constant 0 : index
    %c0_183 = arith.constant 0 : index
    %384 = vector.load %arg12[%c3_181, %c0_182, %c0_183] : memref<4x1x32xf32, #tpu.memory_space<vmem>>, vector<1x1x32xf32>
    %385 = vector.shape_cast %384 : vector<1x1x32xf32> to vector<1x32xf32>
    %c3_184 = arith.constant 3 : index
    %c0_185 = arith.constant 0 : index
    %c0_186 = arith.constant 0 : index
    %386 = vector.load %arg13[%c3_184, %c0_185, %c0_186] : memref<4x1x32xf32, #tpu.memory_space<vmem>>, vector<1x1x32xf32>
    %387 = vector.shape_cast %386 : vector<1x1x32xf32> to vector<1x32xf32>
    %cst_187 = arith.constant dense<0.000000e+00> : vector<32xf32>
    %388 = vector.multi_reduction <add>, %383, %cst_187 [1] : vector<32x32xf32> to vector<32xf32>
    %389 = vector.shape_cast %388 : vector<32xf32> to vector<32x1xf32>
    %cst_188 = arith.constant 3.200000e+01 : f32
    %390 = vector.broadcast %cst_188 : f32 to vector<32x1xf32>
    %391 = arith.divf %389, %390 : vector<32x1xf32>
    %392 = vector.broadcast %391 : vector<32x1xf32> to vector<32x32xf32>
    %393 = arith.subf %383, %392 : vector<32x32xf32>
    %394 = arith.mulf %393, %393 : vector<32x32xf32>
    %cst_189 = arith.constant dense<0.000000e+00> : vector<32xf32>
    %395 = vector.multi_reduction <add>, %394, %cst_189 [1] : vector<32x32xf32> to vector<32xf32>
    %396 = vector.shape_cast %395 : vector<32xf32> to vector<32x1xf32>
    %cst_190 = arith.constant 3.200000e+01 : f32
    %397 = vector.broadcast %cst_190 : f32 to vector<32x1xf32>
    %398 = arith.divf %396, %397 : vector<32x1xf32>
    %399 = vector.broadcast %391 : vector<32x1xf32> to vector<32x32xf32>
    %400 = arith.subf %383, %399 : vector<32x32xf32>
    %cst_191 = arith.constant 9.99999974E-6 : f32
    %401 = vector.broadcast %cst_191 : f32 to vector<32x1xf32>
    %402 = arith.addf %398, %401 : vector<32x1xf32>
    %403 = math.rsqrt %402 : vector<32x1xf32>
    %404 = vector.broadcast %403 : vector<32x1xf32> to vector<32x32xf32>
    %405 = arith.mulf %400, %404 : vector<32x32xf32>
    %406 = vector.broadcast %385 : vector<1x32xf32> to vector<32x32xf32>
    %407 = arith.mulf %405, %406 : vector<32x32xf32>
    %408 = vector.broadcast %387 : vector<1x32xf32> to vector<32x32xf32>
    %409 = arith.addf %407, %408 : vector<32x32xf32>
    %410 = arith.addf %409, %320 : vector<32x32xf32>
    %cst_192 = arith.constant 0.000000e+00 : f32
    %411 = vector.broadcast %cst_192 : f32 to vector<32x32xf32>
    %412 = arith.cmpf ogt, %410, %411 : vector<32x32xf32>
    %cst_193 = arith.constant 2.000000e-01 : f32
    %413 = vector.broadcast %cst_193 : f32 to vector<32x32xf32>
    %414 = arith.mulf %413, %410 : vector<32x32xf32>
    %415 = arith.select %412, %410, %414 : vector<32x32xi1>, vector<32x32xf32>
    %416 = vector.shape_cast %415 : vector<32x32xf32> to vector<2x16x32xf32>
    %c0_194 = arith.constant 0 : index
    %c0_195 = arith.constant 0 : index
    %c0_196 = arith.constant 0 : index
    %417 = vector.load %arg25[%c0_194, %c0_195, %c0_196] : memref<2x16x32xf32, #tpu.memory_space<vmem>>, vector<2x16x32xf32>
    tpu.vector_store %arg25[%c0_194, %c0_195, %c0_196], %416 {strides = array<i32>} : memref<2x16x32xf32, #tpu.memory_space<vmem>>, vector<2x16x32xf32>,
    %418 = vector.shape_cast %415 : vector<32x32xf32> to vector<2x16x32xf32>
    %c0_197 = arith.constant 0 : index
    %c0_198 = arith.constant 0 : index
    %419 = vector.load %arg14[%c0_197, %c0_198] : memref<1x32xf32, #tpu.memory_space<vmem>>, vector<1x32xf32>
    %420 = vector.shape_cast %419 : vector<1x32xf32> to vector<1x1x32xf32>
    %421 = vector.broadcast %420 : vector<1x1x32xf32> to vector<2x16x32xf32>
    %422 = arith.mulf %418, %421 : vector<2x16x32xf32>
    %cst_199 = arith.constant dense<0.000000e+00> : vector<2x16xf32>
    %423 = vector.multi_reduction <add>, %422, %cst_199 [2] : vector<2x16x32xf32> to vector<2x16xf32>
    %424 = vector.shape_cast %423 : vector<2x16xf32> to vector<2x16x1xf32>
    %c0_200 = arith.constant 0 : index
    %c0_201 = arith.constant 0 : index
    %425 = vector.load %arg15[%c0_200, %c0_201] : memref<1x1xf32, #tpu.memory_space<vmem>>, vector<1x1xf32>
    %426 = vector.shape_cast %425 : vector<1x1xf32> to vector<1x1x1xf32>
    %427 = vector.broadcast %426 : vector<1x1x1xf32> to vector<2x16x1xf32>
    %428 = arith.addf %424, %427 : vector<2x16x1xf32>
    %cst_202 = arith.constant dense<0xFF800000> : vector<2x1xf32>
    %429 = vector.multi_reduction <maximumf>, %428, %cst_202 [1] : vector<2x16x1xf32> to vector<2x1xf32>
    %430 = vector.shape_cast %429 : vector<2x1xf32> to vector<2x1x1xf32>
    %431 = vector.broadcast %430 : vector<2x1x1xf32> to vector<2x16x1xf32>
    %432 = arith.subf %428, %431 : vector<2x16x1xf32>
    %433 = math.exp %432 : vector<2x16x1xf32>
    %cst_203 = arith.constant dense<0.000000e+00> : vector<2x1xf32>
    %434 = vector.multi_reduction <add>, %433, %cst_203 [1] : vector<2x16x1xf32> to vector<2x1xf32>
    %435 = vector.shape_cast %434 : vector<2x1xf32> to vector<2x1x1xf32>
    %436 = tpu.reciprocal %435 {approx = true} : vector<2x1x1xf32> -> vector<2x1x1xf32>
    %437 = vector.broadcast %436 : vector<2x1x1xf32> to vector<2x16x1xf32>
    %438 = arith.mulf %433, %437 : vector<2x16x1xf32>
    %439 = vector.broadcast %438 : vector<2x16x1xf32> to vector<2x16x32xf32>
    %440 = arith.mulf %418, %439 : vector<2x16x32xf32>
    %cst_204 = arith.constant dense<0.000000e+00> : vector<2x32xf32>
    %441 = vector.multi_reduction <add>, %440, %cst_204 [1] : vector<2x16x32xf32> to vector<2x32xf32>
    %c0_205 = arith.constant 0 : index
    %c0_206 = arith.constant 0 : index
    %442 = vector.load %arg16[%c0_205, %c0_206] : memref<32x32xf32, #tpu.memory_space<vmem>>, vector<32x32xf32>
    %cst_207 = arith.constant dense<0.000000e+00> : vector<2x32xf32>
    %443 = tpu.matmul %441, %442, %cst_207 {dimension_numbers = #tpu.dot_dimension_numbers<[1], [0], [0], [1], [0, 0, 1, 1], [], []>} : vector<2x32xf32>, vector<32x32xf32>, vector<2x32xf32> -> vector<2x32xf32>
    %c0_208 = arith.constant 0 : index
    %c0_209 = arith.constant 0 : index
    %444 = vector.load %arg17[%c0_208, %c0_209] : memref<1x32xf32, #tpu.memory_space<vmem>>, vector<1x32xf32>
    %445 = vector.broadcast %444 : vector<1x32xf32> to vector<2x32xf32>
    %446 = arith.addf %443, %445 : vector<2x32xf32>
    %cst_210 = arith.constant 0.000000e+00 : f32
    %447 = vector.broadcast %cst_210 : f32 to vector<2x32xf32>
    %448 = arith.cmpf ogt, %446, %447 : vector<2x32xf32>
    %cst_211 = arith.constant 2.000000e-01 : f32
    %449 = vector.broadcast %cst_211 : f32 to vector<2x32xf32>
    %450 = arith.mulf %449, %446 : vector<2x32xf32>
    %451 = arith.select %448, %446, %450 : vector<2x32xi1>, vector<2x32xf32>
    %c0_212 = arith.constant 0 : index
    %c0_213 = arith.constant 0 : index
    %452 = vector.load %arg18[%c0_212, %c0_213] : memref<1x32xf32, #tpu.memory_space<vmem>>, vector<1x32xf32>
    %453 = vector.broadcast %452 : vector<1x32xf32> to vector<2x32xf32>
    %454 = arith.mulf %451, %453 : vector<2x32xf32>
    %cst_214 = arith.constant dense<0.000000e+00> : vector<2xf32>
    %455 = vector.multi_reduction <add>, %454, %cst_214 [1] : vector<2x32xf32> to vector<2xf32>
    %456 = vector.shape_cast %455 : vector<2xf32> to vector<2x1xf32>
    %c0_215 = arith.constant 0 : index
    %c0_216 = arith.constant 0 : index
    %457 = vector.load %arg19[%c0_215, %c0_216] : memref<1x1xf32, #tpu.memory_space<vmem>>, vector<1x1xf32>
    %458 = vector.broadcast %457 : vector<1x1xf32> to vector<2x1xf32>
    %459 = arith.addf %456, %458 : vector<2x1xf32>
    %460 = vector.shape_cast %459 : vector<2x1xf32> to vector<2x1x1xf32>
    %c0_217 = arith.constant 0 : index
    %c0_218 = arith.constant 0 : index
    %c0_219 = arith.constant 0 : index
    %461 = vector.load %arg20[%c0_217, %c0_218, %c0_219] : memref<2x1x1xf32, #tpu.memory_space<vmem>>, vector<2x1x1xf32>
    tpu.vector_store %arg20[%c0_217, %c0_218, %c0_219], %460 {strides = array<i32>} : memref<2x1x1xf32, #tpu.memory_space<vmem>>, vector<2x1x1xf32>,
    return
  }
  func.func @transform_0(%arg0: i32) -> (i32, i32, i32) {
    %c0_i32 = arith.constant 0 : i32
    %c0_i32_0 = arith.constant 0 : i32
    %c0_i32_1 = arith.constant 0 : i32
    return %arg0, %c0_i32, %c0_i32_0 : i32, i32, i32
  }
  func.func @transform_1(%arg0: i32) -> (i32, i32) {
    %c0_i32 = arith.constant 0 : i32
    %c0_i32_0 = arith.constant 0 : i32
    %c0_i32_1 = arith.constant 0 : i32
    return %c0_i32, %c0_i32_0 : i32, i32
  }
  func.func @transform_2(%arg0: i32) -> (i32, i32) {
    %c0_i32 = arith.constant 0 : i32
    %c0_i32_0 = arith.constant 0 : i32
    %c0_i32_1 = arith.constant 0 : i32
    return %c0_i32, %c0_i32_0 : i32, i32
  }
  func.func @transform_3(%arg0: i32) -> (i32, i32) {
    %c0_i32 = arith.constant 0 : i32
    %c0_i32_0 = arith.constant 0 : i32
    %c0_i32_1 = arith.constant 0 : i32
    return %c0_i32, %c0_i32_0 : i32, i32
  }
  func.func @transform_4(%arg0: i32) -> (i32, i32) {
    %c0_i32 = arith.constant 0 : i32
    %c0_i32_0 = arith.constant 0 : i32
    %c0_i32_1 = arith.constant 0 : i32
    return %c0_i32, %c0_i32_0 : i32, i32
  }
  func.func @transform_5(%arg0: i32) -> (i32, i32, i32) {
    %c0_i32 = arith.constant 0 : i32
    %c0_i32_0 = arith.constant 0 : i32
    %c0_i32_1 = arith.constant 0 : i32
    %c0_i32_2 = arith.constant 0 : i32
    return %c0_i32, %c0_i32_0, %c0_i32_1 : i32, i32, i32
  }
  func.func @transform_6(%arg0: i32) -> (i32, i32, i32) {
    %c0_i32 = arith.constant 0 : i32
    %c0_i32_0 = arith.constant 0 : i32
    %c0_i32_1 = arith.constant 0 : i32
    %c0_i32_2 = arith.constant 0 : i32
    return %c0_i32, %c0_i32_0, %c0_i32_1 : i32, i32, i32
  }
  func.func @transform_7(%arg0: i32) -> (i32, i32, i32) {
    %c0_i32 = arith.constant 0 : i32
    %c0_i32_0 = arith.constant 0 : i32
    %c0_i32_1 = arith.constant 0 : i32
    %c0_i32_2 = arith.constant 0 : i32
    return %c0_i32, %c0_i32_0, %c0_i32_1 : i32, i32, i32
  }
  func.func @transform_8(%arg0: i32) -> (i32, i32, i32) {
    %c0_i32 = arith.constant 0 : i32
    %c0_i32_0 = arith.constant 0 : i32
    %c0_i32_1 = arith.constant 0 : i32
    %c0_i32_2 = arith.constant 0 : i32
    return %c0_i32, %c0_i32_0, %c0_i32_1 : i32, i32, i32
  }
  func.func @transform_9(%arg0: i32) -> (i32, i32, i32) {
    %c0_i32 = arith.constant 0 : i32
    %c0_i32_0 = arith.constant 0 : i32
    %c0_i32_1 = arith.constant 0 : i32
    %c0_i32_2 = arith.constant 0 : i32
    return %c0_i32, %c0_i32_0, %c0_i32_1 : i32, i32, i32
  }
  func.func @transform_10(%arg0: i32) -> (i32, i32, i32) {
    %c0_i32 = arith.constant 0 : i32
    %c0_i32_0 = arith.constant 0 : i32
    %c0_i32_1 = arith.constant 0 : i32
    %c0_i32_2 = arith.constant 0 : i32
    return %c0_i32, %c0_i32_0, %c0_i32_1 : i32, i32, i32
  }
  func.func @transform_11(%arg0: i32) -> (i32, i32, i32) {
    %c0_i32 = arith.constant 0 : i32
    %c0_i32_0 = arith.constant 0 : i32
    %c0_i32_1 = arith.constant 0 : i32
    %c0_i32_2 = arith.constant 0 : i32
    return %c0_i32, %c0_i32_0, %c0_i32_1 : i32, i32, i32
  }
  func.func @transform_12(%arg0: i32) -> (i32, i32, i32) {
    %c0_i32 = arith.constant 0 : i32
    %c0_i32_0 = arith.constant 0 : i32
    %c0_i32_1 = arith.constant 0 : i32
    %c0_i32_2 = arith.constant 0 : i32
    return %c0_i32, %c0_i32_0, %c0_i32_1 : i32, i32, i32
  }
  func.func @transform_13(%arg0: i32) -> (i32, i32) {
    %c0_i32 = arith.constant 0 : i32
    %c0_i32_0 = arith.constant 0 : i32
    %c0_i32_1 = arith.constant 0 : i32
    return %c0_i32, %c0_i32_0 : i32, i32
  }
  func.func @transform_14(%arg0: i32) -> (i32, i32) {
    %c0_i32 = arith.constant 0 : i32
    %c0_i32_0 = arith.constant 0 : i32
    %c0_i32_1 = arith.constant 0 : i32
    return %c0_i32, %c0_i32_0 : i32, i32
  }
  func.func @transform_15(%arg0: i32) -> (i32, i32) {
    %c0_i32 = arith.constant 0 : i32
    %c0_i32_0 = arith.constant 0 : i32
    %c0_i32_1 = arith.constant 0 : i32
    return %c0_i32, %c0_i32_0 : i32, i32
  }
  func.func @transform_16(%arg0: i32) -> (i32, i32) {
    %c0_i32 = arith.constant 0 : i32
    %c0_i32_0 = arith.constant 0 : i32
    %c0_i32_1 = arith.constant 0 : i32
    return %c0_i32, %c0_i32_0 : i32, i32
  }
  func.func @transform_17(%arg0: i32) -> (i32, i32) {
    %c0_i32 = arith.constant 0 : i32
    %c0_i32_0 = arith.constant 0 : i32
    %c0_i32_1 = arith.constant 0 : i32
    return %c0_i32, %c0_i32_0 : i32, i32
  }
  func.func @transform_18(%arg0: i32) -> (i32, i32) {
    %c0_i32 = arith.constant 0 : i32
    %c0_i32_0 = arith.constant 0 : i32
    %c0_i32_1 = arith.constant 0 : i32
    return %c0_i32, %c0_i32_0 : i32, i32
  }
  func.func @transform_19(%arg0: i32) -> (i32, i32, i32) {
    %c0_i32 = arith.constant 0 : i32
    %c0_i32_0 = arith.constant 0 : i32
    %c0_i32_1 = arith.constant 0 : i32
    return %arg0, %c0_i32, %c0_i32_0 : i32, i32, i32
  }
  func.func @transform_20(%arg0: i32) -> (i32, i32, i32) {
    %c0_i32 = arith.constant 0 : i32
    %c0_i32_0 = arith.constant 0 : i32
    %c0_i32_1 = arith.constant 0 : i32
    return %arg0, %c0_i32, %c0_i32_0 : i32, i32, i32
  }
  func.func @transform_21(%arg0: i32) -> (i32, i32, i32) {
    %c0_i32 = arith.constant 0 : i32
    %c0_i32_0 = arith.constant 0 : i32
    %c0_i32_1 = arith.constant 0 : i32
    return %arg0, %c0_i32, %c0_i32_0 : i32, i32, i32
  }
  func.func @transform_22(%arg0: i32) -> (i32, i32, i32) {
    %c0_i32 = arith.constant 0 : i32
    %c0_i32_0 = arith.constant 0 : i32
    %c0_i32_1 = arith.constant 0 : i32
    return %arg0, %c0_i32, %c0_i32_0 : i32, i32, i32
  }
  func.func @transform_23(%arg0: i32) -> (i32, i32, i32) {
    %c0_i32 = arith.constant 0 : i32
    %c0_i32_0 = arith.constant 0 : i32
    %c0_i32_1 = arith.constant 0 : i32
    return %arg0, %c0_i32, %c0_i32_0 : i32, i32, i32
  }
  func.func @transform_24(%arg0: i32) -> (i32, i32, i32) {
    %c0_i32 = arith.constant 0 : i32
    %c0_i32_0 = arith.constant 0 : i32
    %c0_i32_1 = arith.constant 0 : i32
    return %arg0, %c0_i32, %c0_i32_0 : i32, i32, i32
  }
}

</mosaic_0001>

<llo_original>
// kernel: tpu_custom_call.1
$region0: #{tpu_custom_call.1}
  #allocation0 [shape = 'u32[]', space=smem, size = 0x4, offset = 0x4, fixed_abs, tag = 'smem constant byte address 0x4 - core index']
  #allocation1 [shape = 'u32[144,128]{1,0:T(1,128)}', space=vmem, size = 0x12000, scoped, tag = 'internal scratch']
  #allocation2 [shape = 'f32[1,1]{1,0:T(1,128)S(1)}', space=vmem, size = 0x200, scoped, tag = 'scoped memory for tpu_custom_call.1']
  #allocation3 [shape = 'f32[1,1]{1,0:T(1,128)S(1)}', space=vmem, size = 0x200, scoped, tag = 'scoped memory for tpu_custom_call.1']
  %s0 = inlined_call_operand.vmem [shape: f32[4,16,16], index: 0, kind: input, shape index: {}]
  %s1 = inlined_call_operand.vmem [shape: f32[16,32], index: 1, kind: input, shape index: {}]
  %s2 = inlined_call_operand.vmem [shape: f32[1,32], index: 2, kind: input, shape index: {}]
  %s3 = inlined_call_operand.vmem [shape: f32[1,32], index: 3, kind: input, shape index: {}]
  %s4 = inlined_call_operand.vmem [shape: f32[1,32], index: 4, kind: input, shape index: {}]
  %s5 = inlined_call_operand.vmem [shape: f32[4,96,32], index: 5, kind: input, shape index: {}]
  %s6 = inlined_call_operand.vmem [shape: f32[4,1,32], index: 6, kind: input, shape index: {}]
  %s7 = inlined_call_operand.vmem [shape: f32[4,1,32], index: 7, kind: input, shape index: {}]
  %s8 = inlined_call_operand.vmem [shape: f32[4,1,32], index: 8, kind: input, shape index: {}]
  %s9 = inlined_call_operand.vmem [shape: f32[4,96,32], index: 9, kind: input, shape index: {}]
  %s10 = inlined_call_operand.vmem [shape: f32[4,1,32], index: 10, kind: input, shape index: {}]
  %s11 = inlined_call_operand.vmem [shape: f32[4,1,32], index: 11, kind: input, shape index: {}]
  %s12 = inlined_call_operand.vmem [shape: f32[4,1,32], index: 12, kind: input, shape index: {}]
  %s13 = inlined_call_operand.vmem [shape: f32[1,32], index: 13, kind: input, shape index: {}]
  %s14 = inlined_call_operand.<no memory space> [shape: f32[1,1], index: 14, kind: input, shape index: {}]
  %s15 = inlined_call_operand.vmem [shape: f32[32,32], index: 15, kind: input, shape index: {}]
  %s16 = inlined_call_operand.vmem [shape: f32[1,32], index: 16, kind: input, shape index: {}]
  %s17 = inlined_call_operand.vmem [shape: f32[1,32], index: 17, kind: input, shape index: {}]
  %s18 = inlined_call_operand.<no memory space> [shape: f32[1,1], index: 18, kind: input, shape index: {}]
  %s19 = inlined_call_operand.vmem [shape: f32[4,1,1], index: 19, kind: output, shape index: {0}]
  %s20 = inlined_call_operand.hbm [shape: f32[4,16,32], index: 20, kind: output, shape index: {1}]
  %s21 = inlined_call_operand.hbm [shape: f32[4,16,32], index: 21, kind: output, shape index: {2}]
  %s22 = inlined_call_operand.hbm [shape: f32[4,16,32], index: 22, kind: output, shape index: {3}]
  %s23 = inlined_call_operand.hbm [shape: f32[4,16,32], index: 23, kind: output, shape index: {4}]
  %s24 = inlined_call_operand.hbm [shape: f32[4,16,32], index: 24, kind: output, shape index: {5}]
  %25 = xla_tuple %s19, %s20, %s21, %s22, %s23, %s24
  %s26 = sld [smem:[#allocation0]]
  $region149: #{tpu_custom_call.1} parent=0
    _
  %s28 = ssub.s32 1, %s26
  %s29 = scalar_select 0, %s28, %s26
  %v30 = vstv %s14
  %31 = vst [vmem:[#allocation2] sm:$0x1] %v30
  %v32 = vstv %s18
  %33 = vst [vmem:[#allocation3] sm:$0x1] %v32
  $region1: #{tpu_custom_call.1} parent=0
    #allocation4 [shape = 'u8[32768]{0}', space=vmem, size = 0x8000, scoped, tag = 'output window, operand 1']
    #allocation5 [shape = 's32[2]{0}', space=sflag, size = 0x8, scoped, tag = 'scoped memory for tpu_custom_call.1']
    #allocation6 [shape = 'u8[32768]{0}', space=vmem, size = 0x8000, scoped, tag = 'output window, operand 2']
    #allocation7 [shape = 's32[2]{0}', space=sflag, size = 0x8, scoped, tag = 'scoped memory for tpu_custom_call.1']
    #allocation8 [shape = 'u8[32768]{0}', space=vmem, size = 0x8000, scoped, tag = 'output window, operand 3']
    #allocation9 [shape = 'u8[32768]{0}', space=vmem, size = 0x8000, scoped, tag = 'output window, operand 4']
    #allocation10 [shape = 's32[2]{0}', space=sflag, size = 0x8, scoped, tag = 'scoped memory for tpu_custom_call.1']
    #allocation11 [shape = 'u8[32768]{0}', space=vmem, size = 0x8000, scoped, tag = 'output window, operand 5']
    %34 = vsyncpa [#allocation5], 0
    %s35 = scalar_lea.sflag [#allocation5], 1
    %36 = vsyncpa %s35, 0
    %37 = vsyncpa [#allocation7], 0
    %s38 = scalar_lea.sflag [#allocation7], 1
    %39 = vsyncpa %s38, 0
    %40 = vsyncpa [#allocation10], 0
    %s41 = scalar_lea.sflag [#allocation10], 1
    %42 = vsyncpa %s41, 0
    loop: start=0, step=1, limit=4
    $region2: #{tpu_custom_call.1} parent=1 // loop_pre_header
      _
    $region3: #{tpu_custom_call.1} parent=1 // loop_header
      %s44 = sphi 0, %s48
      %p45 = scmp.ge.s32.totalorder %s44, 4
      %s54 = sphi 0, %s56
      %s57 = sphi 0, %s54
      %s58 = sphi 0, %s57
      %s74 = sphi 0, %s58
      %s78 = sphi 0, %s78
      %s80 = sphi 0, %s78
      %s81 = sphi 0, %s80
      %s95 = sphi 0, %s81
      %s99 = sphi 0, %s99
      %s101 = sphi 0, %s99
      %s102 = sphi 0, %s101
      %s116 = sphi 0, %s102
      %s120 = sphi 0, %s120
      %s122 = sphi 0, %s120
      %s123 = sphi 0, %s122
      %s137 = sphi 0, %s123
      %s141 = sphi 0, %s141
      %s143 = sphi 0, %s141
      %s144 = sphi 0, %s143
      %s158 = sphi 0, %s144
      %s162 = sphi 0, %s162
      %s164 = sphi 0, %s162
      %s165 = sphi 0, %s164
      %s179 = sphi 0, %s165
      %s183 = sphi 0, %s183
      %s185 = sphi 0, %s183
      %s186 = sphi 0, %s185
      %s200 = sphi 0, %s186
      %s204 = sphi 0, %s204
      %s206 = sphi 0, %s204
      %s207 = sphi 0, %s206
      %s221 = sphi 0, %s207
      %s225 = sphi 0, %s225
      %s227 = sphi 0, %s225
      %s228 = sphi 0, %s227
      %s242 = sphi 0, %s228
      %s246 = sphi 0, %s246
      %s248 = sphi 0, %s246
      %s249 = sphi 0, %s248
      %s263 = sphi 0, %s249
      %s267 = sphi 0, %s267
      %s269 = sphi 0, %s267
      %s270 = sphi 0, %s269
      %s284 = sphi 0, %s270
      %s288 = sphi 0, %s288
      %s290 = sphi 0, %s288
      %s291 = sphi 0, %s290
      %s305 = sphi 0, %s291
      %s309 = sphi 0, %s309
      %s311 = sphi 0, %s309
      %s312 = sphi 0, %s311
      %s326 = sphi 0, %s312
      %s330 = sphi 0, %s330
      %s332 = sphi 0, %s330
      %s333 = sphi 0, %s332
      %s347 = sphi 0, %s333
      %s351 = sphi 0, %s351
      %s353 = sphi 0, %s351
      %s354 = sphi 0, %s353
      %s368 = sphi 0, %s354
      %s372 = sphi 0, %s372
      %s374 = sphi 0, %s372
      %s375 = sphi 0, %s374
      %s389 = sphi 0, %s375
      %s393 = sphi 0, %s393
      %s395 = sphi 0, %s393
      %s396 = sphi 0, %s395
      %s410 = sphi 0, %s396
      %s414 = sphi 0, %s414
      %s416 = sphi 0, %s414
      %s417 = sphi 0, %s416
      %s431 = sphi 0, %s417
      %s435 = sphi 0, %s435
      %s437 = sphi 0, %s435
      %s438 = sphi 0, %s437
      %s452 = sphi 0, %s438
      %s458 = sphi 0, %s460
      %s461 = sphi 0, %s458
      %s462 = sphi 0, %s461
      %s478 = sphi 0, %s462
      %s484 = sphi 0, %s486
      %s487 = sphi 0, %s484
      %s488 = sphi 0, %s487
      %s504 = sphi 0, %s488
      %s510 = sphi 0, %s512
      %s513 = sphi 0, %s510
      %s514 = sphi 0, %s513
      %s530 = sphi 0, %s514
      %s536 = sphi 0, %s538
      %s539 = sphi 0, %s536
      %s540 = sphi 0, %s539
      %s556 = sphi 0, %s540
      %s562 = sphi 0, %s564
      %s565 = sphi 0, %s562
      %s566 = sphi 0, %s565
      %s582 = sphi 0, %s566
      %s588 = sphi 0, %s590
      %s591 = sphi 0, %s588
      %s592 = sphi 0, %s591
      %s608 = sphi 0, %s592
    $region4: #{tpu_custom_call.1} parent=1 // loop_header_branch
      %47 = sbr.rel (%p45) target = $region8
    $region5: #{tpu_custom_call.1} parent=1 // loop_body
      %s49 = ssub.s32 %s44, 1
      %s50 = ssub.s32 %s44, 2
      %s51 = sadd.s32 %s44, 1
      %s52 = ssub.s32 %s44, %s51
      %p53 = scmp.eq.s32.totalorder %s52, 0
      %s55 = sadd.s32 %s54, 1
      %s56 = scalar_select %p53, %s54, %s55
      %p59 = pneg %p53
      %p60 = scmp.eq.s32.totalorder %s44, 1
      %p61 = por %p59, %p60
      %p62 = scmp.ne.s32.totalorder %s54, %s57
      %p63 = scmp.eq.s32.totalorder %s44, 0
      %p64 = por %p62, %p63
      %p65 = scmp.ne.s32.totalorder %s54, %s57
      %p66 = scmp.eq.s32.totalorder %s49, 1
      %p67 = por %p65, %p66
      %p68 = scmp.ne.s32.totalorder %s57, %s58
      %p69 = scmp.eq.s32.totalorder %s49, 0
      %p70 = por %p68, %p69
      %p71 = scmp.ne.s32.totalorder %s57, %s58
      %p72 = scmp.eq.s32.totalorder %s50, 1
      %p73 = por %p71, %p72
      %p75 = scmp.ne.s32.totalorder %s58, %s74
      %p76 = scmp.eq.s32.totalorder %s50, 0
      %p77 = por %p75, %p76
      %s79 = sadd.s32 %s78, 1
      %p82 = scmp.eq.s32.totalorder %s44, 1
      %p83 = scmp.ne.s32.totalorder %s78, %s80
      %p84 = scmp.eq.s32.totalorder %s44, 0
      %p85 = por %p83, %p84
      %p86 = scmp.ne.s32.totalorder %s78, %s80
      %p87 = scmp.eq.s32.totalorder %s49, 1
      %p88 = por %p86, %p87
      %p89 = scmp.ne.s32.totalorder %s80, %s81
      %p90 = scmp.eq.s32.totalorder %s49, 0
      %p91 = por %p89, %p90
      %p92 = scmp.ne.s32.totalorder %s80, %s81
      %p93 = scmp.eq.s32.totalorder %s50, 1
      %p94 = por %p92, %p93
      %p96 = scmp.ne.s32.totalorder %s81, %s95
      %p97 = scmp.eq.s32.totalorder %s50, 0
      %p98 = por %p96, %p97
      %s100 = sadd.s32 %s99, 1
      %p103 = scmp.eq.s32.totalorder %s44, 1
      %p104 = scmp.ne.s32.totalorder %s99, %s101
      %p105 = scmp.eq.s32.totalorder %s44, 0
      %p106 = por %p104, %p105
      %p107 = scmp.ne.s32.totalorder %s99, %s101
      %p108 = scmp.eq.s32.totalorder %s49, 1
      %p109 = por %p107, %p108
      %p110 = scmp.ne.s32.totalorder %s101, %s102
      %p111 = scmp.eq.s32.totalorder %s49, 0
      %p112 = por %p110, %p111
      %p113 = scmp.ne.s32.totalorder %s101, %s102
      %p114 = scmp.eq.s32.totalorder %s50, 1
      %p115 = por %p113, %p114
      %p117 = scmp.ne.s32.totalorder %s102, %s116
      %p118 = scmp.eq.s32.totalorder %s50, 0
      %p119 = por %p117, %p118
      %s121 = sadd.s32 %s120, 1
      %p124 = scmp.eq.s32.totalorder %s44, 1
      %p125 = scmp.ne.s32.totalorder %s120, %s122
      %p126 = scmp.eq.s32.totalorder %s44, 0
      %p127 = por %p125, %p126
      %p128 = scmp.ne.s32.totalorder %s120, %s122
      %p129 = scmp.eq.s32.totalorder %s49, 1
      %p130 = por %p128, %p129
      %p131 = scmp.ne.s32.totalorder %s122, %s123
      %p132 = scmp.eq.s32.totalorder %s49, 0
      %p133 = por %p131, %p132
      %p134 = scmp.ne.s32.totalorder %s122, %s123
      %p135 = scmp.eq.s32.totalorder %s50, 1
      %p136 = por %p134, %p135
      %p138 = scmp.ne.s32.totalorder %s123, %s137
      %p139 = scmp.eq.s32.totalorder %s50, 0
      %p140 = por %p138, %p139
      %s142 = sadd.s32 %s141, 1
      %p145 = scmp.eq.s32.totalorder %s44, 1
      %p146 = scmp.ne.s32.totalorder %s141, %s143
      %p147 = scmp.eq.s32.totalorder %s44, 0
      %p148 = por %p146, %p147
      %p149 = scmp.ne.s32.totalorder %s141, %s143
      %p150 = scmp.eq.s32.totalorder %s49, 1
      %p151 = por %p149, %p150
      %p152 = scmp.ne.s32.totalorder %s143, %s144
      %p153 = scmp.eq.s32.totalorder %s49, 0
      %p154 = por %p152, %p153
      %p155 = scmp.ne.s32.totalorder %s143, %s144
      %p156 = scmp.eq.s32.totalorder %s50, 1
      %p157 = por %p155, %p156
      %p159 = scmp.ne.s32.totalorder %s144, %s158
      %p160 = scmp.eq.s32.totalorder %s50, 0
      %p161 = por %p159, %p160
      %s163 = sadd.s32 %s162, 1
      %p166 = scmp.eq.s32.totalorder %s44, 1
      %p167 = scmp.ne.s32.totalorder %s162, %s164
      %p168 = scmp.eq.s32.totalorder %s44, 0
      %p169 = por %p167, %p168
      %p170 = scmp.ne.s32.totalorder %s162, %s164
      %p171 = scmp.eq.s32.totalorder %s49, 1
      %p172 = por %p170, %p171
      %p173 = scmp.ne.s32.totalorder %s164, %s165
      %p174 = scmp.eq.s32.totalorder %s49, 0
      %p175 = por %p173, %p174
      %p176 = scmp.ne.s32.totalorder %s164, %s165
      %p177 = scmp.eq.s32.totalorder %s50, 1
      %p178 = por %p176, %p177
      %p180 = scmp.ne.s32.totalorder %s165, %s179
      %p181 = scmp.eq.s32.totalorder %s50, 0
      %p182 = por %p180, %p181
      %s184 = sadd.s32 %s183, 1
      %p187 = scmp.eq.s32.totalorder %s44, 1
      %p188 = scmp.ne.s32.totalorder %s183, %s185
      %p189 = scmp.eq.s32.totalorder %s44, 0
      %p190 = por %p188, %p189
      %p191 = scmp.ne.s32.totalorder %s183, %s185
      %p192 = scmp.eq.s32.totalorder %s49, 1
      %p193 = por %p191, %p192
      %p194 = scmp.ne.s32.totalorder %s185, %s186
      %p195 = scmp.eq.s32.totalorder %s49, 0
      %p196 = por %p194, %p195
      %p197 = scmp.ne.s32.totalorder %s185, %s186
      %p198 = scmp.eq.s32.totalorder %s50, 1
      %p199 = por %p197, %p198
      %p201 = scmp.ne.s32.totalorder %s186, %s200
      %p202 = scmp.eq.s32.totalorder %s50, 0
      %p203 = por %p201, %p202
      %s205 = sadd.s32 %s204, 1
      %p208 = scmp.eq.s32.totalorder %s44, 1
      %p209 = scmp.ne.s32.totalorder %s204, %s206
      %p210 = scmp.eq.s32.totalorder %s44, 0
      %p211 = por %p209, %p210
      %p212 = scmp.ne.s32.totalorder %s204, %s206
      %p213 = scmp.eq.s32.totalorder %s49, 1
      %p214 = por %p212, %p213
      %p215 = scmp.ne.s32.totalorder %s206, %s207
      %p216 = scmp.eq.s32.totalorder %s49, 0
      %p217 = por %p215, %p216
      %p218 = scmp.ne.s32.totalorder %s206, %s207
      %p219 = scmp.eq.s32.totalorder %s50, 1
      %p220 = por %p218, %p219
      %p222 = scmp.ne.s32.totalorder %s207, %s221
      %p223 = scmp.eq.s32.totalorder %s50, 0
      %p224 = por %p222, %p223
      %s226 = sadd.s32 %s225, 1
      %p229 = scmp.eq.s32.totalorder %s44, 1
      %p230 = scmp.ne.s32.totalorder %s225, %s227
      %p231 = scmp.eq.s32.totalorder %s44, 0
      %p232 = por %p230, %p231
      %p233 = scmp.ne.s32.totalorder %s225, %s227
      %p234 = scmp.eq.s32.totalorder %s49, 1
      %p235 = por %p233, %p234
      %p236 = scmp.ne.s32.totalorder %s227, %s228
      %p237 = scmp.eq.s32.totalorder %s49, 0
      %p238 = por %p236, %p237
      %p239 = scmp.ne.s32.totalorder %s227, %s228
      %p240 = scmp.eq.s32.totalorder %s50, 1
      %p241 = por %p239, %p240
      %p243 = scmp.ne.s32.totalorder %s228, %s242
      %p244 = scmp.eq.s32.totalorder %s50, 0
      %p245 = por %p243, %p244
      %s247 = sadd.s32 %s246, 1
      %p250 = scmp.eq.s32.totalorder %s44, 1
      %p251 = scmp.ne.s32.totalorder %s246, %s248
      %p252 = scmp.eq.s32.totalorder %s44, 0
      %p253 = por %p251, %p252
      %p254 = scmp.ne.s32.totalorder %s246, %s248
      %p255 = scmp.eq.s32.totalorder %s49, 1
      %p256 = por %p254, %p255
      %p257 = scmp.ne.s32.totalorder %s248, %s249
      %p258 = scmp.eq.s32.totalorder %s49, 0
      %p259 = por %p257, %p258
      %p260 = scmp.ne.s32.totalorder %s248, %s249
      %p261 = scmp.eq.s32.totalorder %s50, 1
      %p262 = por %p260, %p261
      %p264 = scmp.ne.s32.totalorder %s249, %s263
      %p265 = scmp.eq.s32.totalorder %s50, 0
      %p266 = por %p264, %p265
      %s268 = sadd.s32 %s267, 1
      %p271 = scmp.eq.s32.totalorder %s44, 1
      %p272 = scmp.ne.s32.totalorder %s267, %s269
      %p273 = scmp.eq.s32.totalorder %s44, 0
      %p274 = por %p272, %p273
      %p275 = scmp.ne.s32.totalorder %s267, %s269
      %p276 = scmp.eq.s32.totalorder %s49, 1
      %p277 = por %p275, %p276
      %p278 = scmp.ne.s32.totalorder %s269, %s270
      %p279 = scmp.eq.s32.totalorder %s49, 0
      %p280 = por %p278, %p279
      %p281 = scmp.ne.s32.totalorder %s269, %s270
      %p282 = scmp.eq.s32.totalorder %s50, 1
      %p283 = por %p281, %p282
      %p285 = scmp.ne.s32.totalorder %s270, %s284
      %p286 = scmp.eq.s32.totalorder %s50, 0
      %p287 = por %p285, %p286
      %s289 = sadd.s32 %s288, 1
      %p292 = scmp.eq.s32.totalorder %s44, 1
      %p293 = scmp.ne.s32.totalorder %s288, %s290
      %p294 = scmp.eq.s32.totalorder %s44, 0
      %p295 = por %p293, %p294
      %p296 = scmp.ne.s32.totalorder %s288, %s290
      %p297 = scmp.eq.s32.totalorder %s49, 1
      %p298 = por %p296, %p297
      %p299 = scmp.ne.s32.totalorder %s290, %s291
      %p300 = scmp.eq.s32.totalorder %s49, 0
      %p301 = por %p299, %p300
      %p302 = scmp.ne.s32.totalorder %s290, %s291
      %p303 = scmp.eq.s32.totalorder %s50, 1
      %p304 = por %p302, %p303
      %p306 = scmp.ne.s32.totalorder %s291, %s305
      %p307 = scmp.eq.s32.totalorder %s50, 0
      %p308 = por %p306, %p307
      %s310 = sadd.s32 %s309, 1
      %p313 = scmp.eq.s32.totalorder %s44, 1
      %p314 = scmp.ne.s32.totalorder %s309, %s311
      %p315 = scmp.eq.s32.totalorder %s44, 0
      %p316 = por %p314, %p315
      %p317 = scmp.ne.s32.totalorder %s309, %s311
      %p318 = scmp.eq.s32.totalorder %s49, 1
      %p319 = por %p317, %p318
      %p320 = scmp.ne.s32.totalorder %s311, %s312
      %p321 = scmp.eq.s32.totalorder %s49, 0
      %p322 = por %p320, %p321
      %p323 = scmp.ne.s32.totalorder %s311, %s312
      %p324 = scmp.eq.s32.totalorder %s50, 1
      %p325 = por %p323, %p324
      %p327 = scmp.ne.s32.totalorder %s312, %s326
      %p328 = scmp.eq.s32.totalorder %s50, 0
      %p329 = por %p327, %p328
      %s331 = sadd.s32 %s330, 1
      %p334 = scmp.eq.s32.totalorder %s44, 1
      %p335 = scmp.ne.s32.totalorder %s330, %s332
      %p336 = scmp.eq.s32.totalorder %s44, 0
      %p337 = por %p335, %p336
      %p338 = scmp.ne.s32.totalorder %s330, %s332
      %p339 = scmp.eq.s32.totalorder %s49, 1
      %p340 = por %p338, %p339
      %p341 = scmp.ne.s32.totalorder %s332, %s333
      %p342 = scmp.eq.s32.totalorder %s49, 0
      %p343 = por %p341, %p342
      %p344 = scmp.ne.s32.totalorder %s332, %s333
      %p345 = scmp.eq.s32.totalorder %s50, 1
      %p346 = por %p344, %p345
      %p348 = scmp.ne.s32.totalorder %s333, %s347
      %p349 = scmp.eq.s32.totalorder %s50, 0
      %p350 = por %p348, %p349
      %s352 = sadd.s32 %s351, 1
      %p355 = scmp.eq.s32.totalorder %s44, 1
      %p356 = scmp.ne.s32.totalorder %s351, %s353
      %p357 = scmp.eq.s32.totalorder %s44, 0
      %p358 = por %p356, %p357
      %p359 = scmp.ne.s32.totalorder %s351, %s353
      %p360 = scmp.eq.s32.totalorder %s49, 1
      %p361 = por %p359, %p360
      %p362 = scmp.ne.s32.totalorder %s353, %s354
      %p363 = scmp.eq.s32.totalorder %s49, 0
      %p364 = por %p362, %p363
      %p365 = scmp.ne.s32.totalorder %s353, %s354
      %p366 = scmp.eq.s32.totalorder %s50, 1
      %p367 = por %p365, %p366
      %p369 = scmp.ne.s32.totalorder %s354, %s368
      %p370 = scmp.eq.s32.totalorder %s50, 0
      %p371 = por %p369, %p370
      %s373 = sadd.s32 %s372, 1
      %p376 = scmp.eq.s32.totalorder %s44, 1
      %p377 = scmp.ne.s32.totalorder %s372, %s374
      %p378 = scmp.eq.s32.totalorder %s44, 0
      %p379 = por %p377, %p378
      %p380 = scmp.ne.s32.totalorder %s372, %s374
      %p381 = scmp.eq.s32.totalorder %s49, 1
      %p382 = por %p380, %p381
      %p383 = scmp.ne.s32.totalorder %s374, %s375
      %p384 = scmp.eq.s32.totalorder %s49, 0
      %p385 = por %p383, %p384
      %p386 = scmp.ne.s32.totalorder %s374, %s375
      %p387 = scmp.eq.s32.totalorder %s50, 1
      %p388 = por %p386, %p387
      %p390 = scmp.ne.s32.totalorder %s375, %s389
      %p391 = scmp.eq.s32.totalorder %s50, 0
      %p392 = por %p390, %p391
      %s394 = sadd.s32 %s393, 1
      %p397 = scmp.eq.s32.totalorder %s44, 1
      %p398 = scmp.ne.s32.totalorder %s393, %s395
      %p399 = scmp.eq.s32.totalorder %s44, 0
      %p400 = por %p398, %p399
      %p401 = scmp.ne.s32.totalorder %s393, %s395
      %p402 = scmp.eq.s32.totalorder %s49, 1
      %p403 = por %p401, %p402
      %p404 = scmp.ne.s32.totalorder %s395, %s396
      %p405 = scmp.eq.s32.totalorder %s49, 0
      %p406 = por %p404, %p405
      %p407 = scmp.ne.s32.totalorder %s395, %s396
      %p408 = scmp.eq.s32.totalorder %s50, 1
      %p409 = por %p407, %p408
      %p411 = scmp.ne.s32.totalorder %s396, %s410
      %p412 = scmp.eq.s32.totalorder %s50, 0
      %p413 = por %p411, %p412
      %s415 = sadd.s32 %s414, 1
      %p418 = scmp.eq.s32.totalorder %s44, 1
      %p419 = scmp.ne.s32.totalorder %s414, %s416
      %p420 = scmp.eq.s32.totalorder %s44, 0
      %p421 = por %p419, %p420
      %p422 = scmp.ne.s32.totalorder %s414, %s416
      %p423 = scmp.eq.s32.totalorder %s49, 1
      %p424 = por %p422, %p423
      %p425 = scmp.ne.s32.totalorder %s416, %s417
      %p426 = scmp.eq.s32.totalorder %s49, 0
      %p427 = por %p425, %p426
      %p428 = scmp.ne.s32.totalorder %s416, %s417
      %p429 = scmp.eq.s32.totalorder %s50, 1
      %p430 = por %p428, %p429
      %p432 = scmp.ne.s32.totalorder %s417, %s431
      %p433 = scmp.eq.s32.totalorder %s50, 0
      %p434 = por %p432, %p433
      %s436 = sadd.s32 %s435, 1
      %p439 = scmp.eq.s32.totalorder %s44, 1
      %p440 = scmp.ne.s32.totalorder %s435, %s437
      %p441 = scmp.eq.s32.totalorder %s44, 0
      %p442 = por %p440, %p441
      %p443 = scmp.ne.s32.totalorder %s435, %s437
      %p444 = scmp.eq.s32.totalorder %s49, 1
      %p445 = por %p443, %p444
      %p446 = scmp.ne.s32.totalorder %s437, %s438
      %p447 = scmp.eq.s32.totalorder %s49, 0
      %p448 = por %p446, %p447
      %p449 = scmp.ne.s32.totalorder %s437, %s438
      %p450 = scmp.eq.s32.totalorder %s50, 1
      %p451 = por %p449, %p450
      %p453 = scmp.ne.s32.totalorder %s438, %s452
      %p454 = scmp.eq.s32.totalorder %s50, 0
      %p455 = por %p453, %p454
      %s456 = ssub.s32 %s44, %s51
      %p457 = scmp.eq.s32.totalorder %s456, 0
      %s459 = sadd.s32 %s458, 1
      %s460 = scalar_select %p457, %s458, %s459
      %p463 = pneg %p457
      %p464 = scmp.eq.s32.totalorder %s44, 1
      %p465 = por %p463, %p464
      %p466 = scmp.ne.s32.totalorder %s458, %s461
      %p467 = scmp.eq.s32.totalorder %s44, 0
      %p468 = por %p466, %p467
      %p469 = scmp.ne.s32.totalorder %s458, %s461
      %p470 = scmp.eq.s32.totalorder %s49, 1
      %p471 = por %p469, %p470
      %p472 = scmp.ne.s32.totalorder %s461, %s462
      %p473 = scmp.eq.s32.totalorder %s49, 0
      %p474 = por %p472, %p473
      %p475 = scmp.ne.s32.totalorder %s461, %s462
      %p476 = scmp.eq.s32.totalorder %s50, 1
      %p477 = por %p475, %p476
      %p479 = scmp.ne.s32.totalorder %s462, %s478
      %p480 = scmp.eq.s32.totalorder %s50, 0
      %p481 = por %p479, %p480
      %s482 = ssub.s32 %s44, %s51
      %p483 = scmp.eq.s32.totalorder %s482, 0
      %s485 = sadd.s32 %s484, 1
      %s486 = scalar_select %p483, %s484, %s485
      %p489 = pneg %p483
      %p490 = scmp.eq.s32.totalorder %s44, 1
      %p491 = por %p489, %p490
      %p492 = scmp.ne.s32.totalorder %s484, %s487
      %p493 = scmp.eq.s32.totalorder %s44, 0
      %p494 = por %p492, %p493
      %p495 = scmp.ne.s32.totalorder %s484, %s487
      %p496 = scmp.eq.s32.totalorder %s49, 1
      %p497 = por %p495, %p496
      %p498 = scmp.ne.s32.totalorder %s487, %s488
      %p499 = scmp.eq.s32.totalorder %s49, 0
      %p500 = por %p498, %p499
      %p501 = scmp.ne.s32.totalorder %s487, %s488
      %p502 = scmp.eq.s32.totalorder %s50, 1
      %p503 = por %p501, %p502
      %p505 = scmp.ne.s32.totalorder %s488, %s504
      %p506 = scmp.eq.s32.totalorder %s50, 0
      %p507 = por %p505, %p506
      %s508 = ssub.s32 %s44, %s51
      %p509 = scmp.eq.s32.totalorder %s508, 0
      %s511 = sadd.s32 %s510, 1
      %s512 = scalar_select %p509, %s510, %s511
      %p515 = pneg %p509
      %p516 = scmp.eq.s32.totalorder %s44, 1
      %p517 = por %p515, %p516
      %p518 = scmp.ne.s32.totalorder %s510, %s513
      %p519 = scmp.eq.s32.totalorder %s44, 0
      %p520 = por %p518, %p519
      %p521 = scmp.ne.s32.totalorder %s510, %s513
      %p522 = scmp.eq.s32.totalorder %s49, 1
      %p523 = por %p521, %p522
      %p524 = scmp.ne.s32.totalorder %s513, %s514
      %p525 = scmp.eq.s32.totalorder %s49, 0
      %p526 = por %p524, %p525
      %p527 = scmp.ne.s32.totalorder %s513, %s514
      %p528 = scmp.eq.s32.totalorder %s50, 1
      %p529 = por %p527, %p528
      %p531 = scmp.ne.s32.totalorder %s514, %s530
      %p532 = scmp.eq.s32.totalorder %s50, 0
      %p533 = por %p531, %p532
      %s534 = ssub.s32 %s44, %s51
      %p535 = scmp.eq.s32.totalorder %s534, 0
      %s537 = sadd.s32 %s536, 1
      %s538 = scalar_select %p535, %s536, %s537
      %p541 = pneg %p535
      %p542 = scmp.eq.s32.totalorder %s44, 1
      %p543 = por %p541, %p542
      %p544 = scmp.ne.s32.totalorder %s536, %s539
      %p545 = scmp.eq.s32.totalorder %s44, 0
      %p546 = por %p544, %p545
      %p547 = scmp.ne.s32.totalorder %s536, %s539
      %p548 = scmp.eq.s32.totalorder %s49, 1
      %p549 = por %p547, %p548
      %p550 = scmp.ne.s32.totalorder %s539, %s540
      %p551 = scmp.eq.s32.totalorder %s49, 0
      %p552 = por %p550, %p551
      %p553 = scmp.ne.s32.totalorder %s539, %s540
      %p554 = scmp.eq.s32.totalorder %s50, 1
      %p555 = por %p553, %p554
      %p557 = scmp.ne.s32.totalorder %s540, %s556
      %p558 = scmp.eq.s32.totalorder %s50, 0
      %p559 = por %p557, %p558
      %s560 = ssub.s32 %s44, %s51
      %p561 = scmp.eq.s32.totalorder %s560, 0
      %s563 = sadd.s32 %s562, 1
      %s564 = scalar_select %p561, %s562, %s563
      %p567 = pneg %p561
      %p568 = scmp.eq.s32.totalorder %s44, 1
      %p569 = por %p567, %p568
      %p570 = scmp.ne.s32.totalorder %s562, %s565
      %p571 = scmp.eq.s32.totalorder %s44, 0
      %p572 = por %p570, %p571
      %p573 = scmp.ne.s32.totalorder %s562, %s565
      %p574 = scmp.eq.s32.totalorder %s49, 1
      %p575 = por %p573, %p574
      %p576 = scmp.ne.s32.totalorder %s565, %s566
      %p577 = scmp.eq.s32.totalorder %s49, 0
      %p578 = por %p576, %p577
      %p579 = scmp.ne.s32.totalorder %s565, %s566
      %p580 = scmp.eq.s32.totalorder %s50, 1
      %p581 = por %p579, %p580
      %p583 = scmp.ne.s32.totalorder %s566, %s582
      %p584 = scmp.eq.s32.totalorder %s50, 0
      %p585 = por %p583, %p584
      %s586 = ssub.s32 %s44, %s51
      %p587 = scmp.eq.s32.totalorder %s586, 0
      %s589 = sadd.s32 %s588, 1
      %s590 = scalar_select %p587, %s588, %s589
      %p593 = pneg %p587
      %p594 = scmp.eq.s32.totalorder %s44, 1
      %p595 = por %p593, %p594
      %p596 = scmp.ne.s32.totalorder %s588, %s591
      %p597 = scmp.eq.s32.totalorder %s44, 0
      %p598 = por %p596, %p597
      %p599 = scmp.ne.s32.totalorder %s588, %s591
      %p600 = scmp.eq.s32.totalorder %s49, 1
      %p601 = por %p599, %p600
      %p602 = scmp.ne.s32.totalorder %s591, %s592
      %p603 = scmp.eq.s32.totalorder %s49, 0
      %p604 = por %p602, %p603
      %p605 = scmp.ne.s32.totalorder %s591, %s592
      %p606 = scmp.eq.s32.totalorder %s50, 1
      %p607 = por %p605, %p606
      %p609 = scmp.ne.s32.totalorder %s592, %s608
      %p610 = scmp.eq.s32.totalorder %s50, 0
      %p611 = por %p609, %p610
      %p612 = scmp.le.s32.totalorder 1, %s44
      %p613 = scmp.lt.s32.totalorder %s44, 3
      %p614 = pnand %p612, %p613
      %p615 = pneg %p614
      // Predicated region
      $region9: #{tpu_custom_call.1} parent=5 // pred_check
        _
      $region10: #{tpu_custom_call.1} parent=5 // pred_check_branch
        %617 = sbr.rel (%p614) target = $region12
      $region11: #{tpu_custom_call.1} parent=5 // pred_region
        %s618 = ssub.s32 %s44, 1
        // Predicated region
        $region13: #{tpu_custom_call.1} parent=11 // pred_check
          %p619 = pneg %p91
        $region14: #{tpu_custom_call.1} parent=11 // pred_check_branch
          %621 = sbr.rel (%p619) target = $region16
        $region15: #{tpu_custom_call.1} parent=11 // pred_region
          _
        $region16: #{tpu_custom_call.1} parent=11 // pred_fallthru
          _
        // Predicated region
        $region17: #{tpu_custom_call.1} parent=11 // pred_check
          %p622 = pneg %p112
        $region18: #{tpu_custom_call.1} parent=11 // pred_check_branch
          %624 = sbr.rel (%p622) target = $region20
        $region19: #{tpu_custom_call.1} parent=11 // pred_region
          _
        $region20: #{tpu_custom_call.1} parent=11 // pred_fallthru
          _
        // Predicated region
        $region21: #{tpu_custom_call.1} parent=11 // pred_check
          %p625 = pneg %p133
        $region22: #{tpu_custom_call.1} parent=11 // pred_check_branch
          %627 = sbr.rel (%p625) target = $region24
        $region23: #{tpu_custom_call.1} parent=11 // pred_region
          _
        $region24: #{tpu_custom_call.1} parent=11 // pred_fallthru
          _
        // Predicated region
        $region25: #{tpu_custom_call.1} parent=11 // pred_check
          %p628 = pneg %p154
        $region26: #{tpu_custom_call.1} parent=11 // pred_check_branch
          %630 = sbr.rel (%p628) target = $region28
        $region27: #{tpu_custom_call.1} parent=11 // pred_region
          _
        $region28: #{tpu_custom_call.1} parent=11 // pred_fallthru
          _
        // Predicated region
        $region29: #{tpu_custom_call.1} parent=11 // pred_check
          %p631 = pneg %p175
        $region30: #{tpu_custom_call.1} parent=11 // pred_check_branch
          %633 = sbr.rel (%p631) target = $region32
        $region31: #{tpu_custom_call.1} parent=11 // pred_region
          _
        $region32: #{tpu_custom_call.1} parent=11 // pred_fallthru
          _
        // Predicated region
        $region33: #{tpu_custom_call.1} parent=11 // pred_check
          %p634 = pneg %p196
        $region34: #{tpu_custom_call.1} parent=11 // pred_check_branch
          %636 = sbr.rel (%p634) target = $region36
        $region35: #{tpu_custom_call.1} parent=11 // pred_region
          _
        $region36: #{tpu_custom_call.1} parent=11 // pred_fallthru
          _
        // Predicated region
        $region37: #{tpu_custom_call.1} parent=11 // pred_check
          %p637 = pneg %p217
        $region38: #{tpu_custom_call.1} parent=11 // pred_check_branch
          %639 = sbr.rel (%p637) target = $region40
        $region39: #{tpu_custom_call.1} parent=11 // pred_region
          _
        $region40: #{tpu_custom_call.1} parent=11 // pred_fallthru
          _
        // Predicated region
        $region41: #{tpu_custom_call.1} parent=11 // pred_check
          %p640 = pneg %p238
        $region42: #{tpu_custom_call.1} parent=11 // pred_check_branch
          %642 = sbr.rel (%p640) target = $region44
        $region43: #{tpu_custom_call.1} parent=11 // pred_region
          _
        $region44: #{tpu_custom_call.1} parent=11 // pred_fallthru
          _
        // Predicated region
        $region45: #{tpu_custom_call.1} parent=11 // pred_check
          %p643 = pneg %p259
        $region46: #{tpu_custom_call.1} parent=11 // pred_check_branch
          %645 = sbr.rel (%p643) target = $region48
        $region47: #{tpu_custom_call.1} parent=11 // pred_region
          _
        $region48: #{tpu_custom_call.1} parent=11 // pred_fallthru
          _
        // Predicated region
        $region49: #{tpu_custom_call.1} parent=11 // pred_check
          %p646 = pneg %p280
        $region50: #{tpu_custom_call.1} parent=11 // pred_check_branch
          %648 = sbr.rel (%p646) target = $region52
        $region51: #{tpu_custom_call.1} parent=11 // pred_region
          _
        $region52: #{tpu_custom_call.1} parent=11 // pred_fallthru
          _
        // Predicated region
        $region53: #{tpu_custom_call.1} parent=11 // pred_check
          %p649 = pneg %p301
        $region54: #{tpu_custom_call.1} parent=11 // pred_check_branch
          %651 = sbr.rel (%p649) target = $region56
        $region55: #{tpu_custom_call.1} parent=11 // pred_region
          _
        $region56: #{tpu_custom_call.1} parent=11 // pred_fallthru
          _
        // Predicated region
        $region57: #{tpu_custom_call.1} parent=11 // pred_check
          %p652 = pneg %p322
        $region58: #{tpu_custom_call.1} parent=11 // pred_check_branch
          %654 = sbr.rel (%p652) target = $region60
        $region59: #{tpu_custom_call.1} parent=11 // pred_region
          _
        $region60: #{tpu_custom_call.1} parent=11 // pred_fallthru
          _
        // Predicated region
        $region61: #{tpu_custom_call.1} parent=11 // pred_check
          %p655 = pneg %p343
        $region62: #{tpu_custom_call.1} parent=11 // pred_check_branch
          %657 = sbr.rel (%p655) target = $region64
        $region63: #{tpu_custom_call.1} parent=11 // pred_region
          _
        $region64: #{tpu_custom_call.1} parent=11 // pred_fallthru
          _
        // Predicated region
        $region65: #{tpu_custom_call.1} parent=11 // pred_check
          %p658 = pneg %p364
        $region66: #{tpu_custom_call.1} parent=11 // pred_check_branch
          %660 = sbr.rel (%p658) target = $region68
        $region67: #{tpu_custom_call.1} parent=11 // pred_region
          _
        $region68: #{tpu_custom_call.1} parent=11 // pred_fallthru
          _
        // Predicated region
        $region69: #{tpu_custom_call.1} parent=11 // pred_check
          %p661 = pneg %p385
        $region70: #{tpu_custom_call.1} parent=11 // pred_check_branch
          %663 = sbr.rel (%p661) target = $region72
        $region71: #{tpu_custom_call.1} parent=11 // pred_region
          _
        $region72: #{tpu_custom_call.1} parent=11 // pred_fallthru
          _
        // Predicated region
        $region73: #{tpu_custom_call.1} parent=11 // pred_check
          %p664 = pneg %p406
        $region74: #{tpu_custom_call.1} parent=11 // pred_check_branch
          %666 = sbr.rel (%p664) target = $region76
        $region75: #{tpu_custom_call.1} parent=11 // pred_region
          _
        $region76: #{tpu_custom_call.1} parent=11 // pred_fallthru
          _
        // Predicated region
        $region77: #{tpu_custom_call.1} parent=11 // pred_check
          %p667 = pneg %p427
        $region78: #{tpu_custom_call.1} parent=11 // pred_check_branch
          %669 = sbr.rel (%p667) target = $region80
        $region79: #{tpu_custom_call.1} parent=11 // pred_region
          _
        $region80: #{tpu_custom_call.1} parent=11 // pred_fallthru
          _
        // Predicated region
        $region81: #{tpu_custom_call.1} parent=11 // pred_check
          %p670 = pneg %p448
        $region82: #{tpu_custom_call.1} parent=11 // pred_check_branch
          %672 = sbr.rel (%p670) target = $region84
        $region83: #{tpu_custom_call.1} parent=11 // pred_region
          _
        $region84: #{tpu_custom_call.1} parent=11 // pred_fallthru
          _
      $region12: #{tpu_custom_call.1} parent=5 // pred_fallthru
        _
      %p673 = scmp.lt.s32.totalorder %s44, 2
      // Predicated region
      $region85: #{tpu_custom_call.1} parent=5 // pred_check
        %p674 = pneg %p673
      $region86: #{tpu_custom_call.1} parent=5 // pred_check_branch
        %676 = sbr.rel (%p674) target = $region88
      $region87: #{tpu_custom_call.1} parent=5 // pred_region
        // Predicated region
        $region89: #{tpu_custom_call.1} parent=87 // pred_check
          %p677 = pneg %p64
        $region90: #{tpu_custom_call.1} parent=87 // pred_check_branch
          %679 = sbr.rel (%p677) target = $region92
        $region91: #{tpu_custom_call.1} parent=87 // pred_region
          %s680 = smul.u32 2, %s44
          %p681 = scmp.lt.s32.totalorder %s680, 3
          %s682 = scalar_select %p681, %s680, 3
          %s683 = smul.addr %s682, 2
          %s684 = smul.addr %s683, 8
          %s685 = scalar_lea.vmem %s0, %s684
          %s686 = smul.u32 2, %s44
        $region92: #{tpu_custom_call.1} parent=87 // pred_fallthru
          _
      $region88: #{tpu_custom_call.1} parent=5 // pred_fallthru
        _
      %p687 = scmp.le.s32.totalorder 1, %s44
      %p688 = scmp.lt.s32.totalorder %s44, 3
      %p689 = pnand %p687, %p688
      %p690 = pneg %p689
      // Predicated region
      $region93: #{tpu_custom_call.1} parent=5 // pred_check
        _
      $region94: #{tpu_custom_call.1} parent=5 // pred_check_branch
        %692 = sbr.rel (%p689) target = $region96
      $region95: #{tpu_custom_call.1} parent=5 // pred_region
        %s693 = ssub.s32 %s44, 1
        %s694 = smul.u32 2, %s49
        %p695 = scmp.lt.s32.totalorder %s694, 3
        %s696 = scalar_select %p695, %s694, 3
        %s697 = smul.addr %s696, 2
        %s698 = smul.addr %s697, 8
        %s699 = scalar_lea.vmem %s0, %s698
        %p700 = pneg %p70
        %p701 = pneg %p67
        %p702 = pneg %p91
        %p703 = pneg %p88
        %p704 = pneg %p112
        %p705 = pneg %p109
        %p706 = pneg %p133
        %p707 = pneg %p130
        %p708 = pneg %p154
        %p709 = pneg %p151
        %p710 = pneg %p175
        %p711 = pneg %p172
        %p712 = pneg %p196
        %p713 = pneg %p193
        %p714 = pneg %p217
        %p715 = pneg %p214
        %p716 = pneg %p238
        %p717 = pneg %p235
        %p718 = pneg %p259
        %p719 = pneg %p256
        %p720 = pneg %p280
        %p721 = pneg %p277
        %p722 = pneg %p301
        %p723 = pneg %p298
        %p724 = pneg %p322
        %p725 = pneg %p319
        %p726 = pneg %p343
        %p727 = pneg %p340
        %p728 = pneg %p364
        %p729 = pneg %p361
        %p730 = pneg %p385
        %p731 = pneg %p382
        %p732 = pneg %p406
        %p733 = pneg %p403
        %p734 = pneg %p427
        %p735 = pneg %p424
        %p736 = pneg %p448
        %p737 = pneg %p445
        %p738 = pneg %p474
        %p739 = pneg %p471
        %s740 = smul.u32 2, %s49
        %p741 = scmp.lt.s32.totalorder %s740, 3
        %s742 = scalar_select %p741, %s740, 3
        %s743 = scalar_lea.vmem %s19, %s742
        %p744 = pneg %p500
        %p745 = pneg %p497
        %s746 = sand.u32 %s487, 1
        %s747 = scalar_lea.sflag [#allocation5], %s746
        %s748 = sand.u32 %s487, 1
        %s749 = smul.addr %s748, 32
        %s750 = scalar_lea.vmem [#allocation4], %s749
        %p751 = pneg %p526
        %p752 = pneg %p523
        %s753 = sand.u32 %s49, 1
        %s754 = scalar_lea.sflag [#allocation7], %s753
        %s755 = sand.u32 %s513, 1
        %s756 = smul.addr %s755, 32
        %s757 = scalar_lea.vmem [#allocation6], %s756
        %p758 = pneg %p552
        %p759 = pneg %p549
        %s760 = sand.u32 %s49, 1
        %s761 = scalar_lea.sflag [#allocation7], %s760
        %s762 = sand.u32 %s539, 1
        %s763 = smul.addr %s762, 32
        %s764 = scalar_lea.vmem [#allocation8], %s763
        %p765 = pneg %p578
        %p766 = pneg %p575
        %s767 = sand.u32 %s49, 1
        %s768 = scalar_lea.sflag [#allocation10], %s767
        %s769 = sand.u32 %s565, 1
        %s770 = smul.addr %s769, 32
        %s771 = scalar_lea.vmem [#allocation9], %s770
        %p772 = pneg %p604
        %p773 = pneg %p601
        %s774 = sand.u32 %s49, 1
        %s775 = scalar_lea.sflag [#allocation10], %s774
        %s776 = sand.u32 %s591, 1
        %s777 = smul.addr %s776, 32
        %s778 = scalar_lea.vmem [#allocation11], %s777
        %s779 = smul.u32 2, %s49
        %p780 = scmp.lt.s32.totalorder %s779, 3
        %s781 = scalar_select %p780, %s779, 3
        %s782 = smul.addr %s781, 2
        %s783 = smul.addr %s782, 8
        %s784 = scalar_lea.vmem %s0, %s783
        %s785 = smul.u32 2, %s49
        %s786 = smul.u32 2, %s49
        %p787 = scmp.lt.s32.totalorder %s786, 3
        %s788 = scalar_select %p787, %s786, 3
        %s789 = scalar_lea.vmem %s19, %s788
        %s790 = smul.u32 2, %s49
        %s791 = smul.u32 2, %s49
        %s792 = smul.u32 2, %s49
        %s793 = smul.u32 2, %s49
        %s794 = smul.u32 2, %s49
        %s795 = smul.u32 2, %s49
        %v796 = vld [vmem:[%s784] sm:$0xff]
        %v797 = vld [vmem:[%s784 + $0x8] sm:$0xff]
        %v798 = vld [vmem:[%s784 + $0x10] sm:$0xff]
        %v799 = vld [vmem:[%s784 + $0x18] sm:$0xff]
        %v800 = vld [vmem:[%s1] sm:$0xff]
        %v801 = vld [vmem:[%s1 + $0x8] sm:$0xff]
        %v802 = vld [vmem:[%s2] sm:$0x1]
        %v804 = vlaneseq
        %v805 = vshrl.u32 %v804, 7
        %v806 = vsub.s32 0, %v805
        %v807 = vrot.slane %v802, %v806
        %vm809 = vcmask 130048
        %v811 = vsel %vm809, %v796, 0
        %v814 = vsel %vm809, %v797, 0
        %v817 = vsel %vm809, %v798, 0
        %v820 = vsel %vm809, %v799, 0
        %822 = vmatprep.subr.mxu0 0.0
        %823 = vmatpush1.msra.mxu0 %v800
        %824 = vmatprep.subr.mxu0 0.0
        %825 = vmatpush1.msra.mxu0 %v801
        %826 = vmatprep.subr.mxu0 0.0
        %827 = vmatpush1.msra.mxu0 0.0
        %828 = vmatprep.subr.mxu0 0.0
        %829 = vmatpush1.msra.mxu0 0.0
        %830 = vmatprep.subr.mxu0 0.0
        %831 = vmatpush1.msra.mxu0 0.0
        %832 = vmatprep.subr.mxu0 0.0
        %833 = vmatpush1.msra.mxu0 0.0
        %834 = vmatprep.subr.mxu0 0.0
        %835 = vmatpush1.msra.mxu0 0.0
        %836 = vmatprep.subr.mxu0 0.0
        %837 = vmatpush1.msra.mxu0 0.0
        %838 = vmatprep.subr.mxu0 0.0
        %839 = vmatpush1.msra.mxu0 0.0
        %840 = vmatprep.subr.mxu0 0.0
        %841 = vmatpush1.msra.mxu0 0.0
        %842 = vmatprep.subr.mxu0 0.0
        %843 = vmatpush1.msra.mxu0 0.0
        %844 = vmatprep.subr.mxu0 0.0
        %845 = vmatpush1.msra.mxu0 0.0
        %846 = vmatprep.subr.mxu0 0.0
        %847 = vmatpush1.msra.mxu0 0.0
        %848 = vmatprep.subr.mxu0 0.0
        %849 = vmatpush1.msra.mxu0 0.0
        %850 = vmatprep.subr.mxu0 0.0
        %851 = vmatpush1.msra.mxu0 0.0
        %852 = vmatprep.subr.mxu0 0.0
        %853 = vmatpush1.msra.mxu0 0.0
        %854 = vmatprep.subr.mxu0 0.0
        %855 = vmatpush1.msra.mxu0 0.0
        %856 = vmatprep.subr.mxu0 0.0
        %857 = vmatpush1.msra.mxu0 0.0
        %858 = vmatprep.subr.mxu0 0.0
        %859 = vmatpush1.msra.mxu0 0.0
        %860 = vmatprep.subr.mxu0 0.0
        %861 = vmatpush1.msra.mxu0 0.0
        %862 = vmatprep.subr.mxu0 0.0
        %863 = vmatpush1.msra.mxu0 0.0
        %864 = vmatprep.subr.mxu0 0.0
        %865 = vmatpush1.msra.mxu0 0.0
        %866 = vmatprep.subr.mxu0 0.0
        %867 = vmatpush1.msra.mxu0 0.0
        %868 = vmatprep.subr.mxu0 0.0
        %869 = vmatpush1.msra.mxu0 0.0
        %870 = vmatprep.subr.mxu0 0.0
        %871 = vmatpush1.msra.mxu0 0.0
        %872 = vmatprep.subr.mxu0 0.0
        %873 = vmatpush1.msra.mxu0 0.0
        %874 = vmatprep.subr.mxu0 0.0
        %875 = vmatpush1.msra.mxu0 0.0
        %876 = vmatprep.subr.mxu0 0.0
        %877 = vmatpush1.msra.mxu0 0.0
        %878 = vmatprep.subr.mxu0 0.0
        %879 = vmatpush1.msra.mxu0 0.0
        %880 = vmatprep.subr.mxu0 0.0
        %881 = vmatpush1.msra.mxu0 0.0
        %882 = vmatprep.subr.mxu0 0.0
        %883 = vmatpush1.msra.mxu0 0.0
        %884 = vmatprep.subr.mxu0 0.0
        %885 = vmatpush1.msra.mxu0 0.0
        %886 = vmatprep.mubr.f32.mxu0 0.0
        %887 = vmatmul.mubr.f32.gmra.mrb[0].mxu0 %v811
        %v888 = vpop.f32.mrb[0].mxu0
        %v889 = vadd.f32 %v807, %v888
        %v890 = vpop.f32.mrb[0].mxu0
        %891 = vmatprep.mubr.f32.mxu0 0.0
        %892 = vmatmul.mubr.f32.gmra.mrb[0].mxu0 %v814
        %v893 = vpop.f32.mrb[0].mxu0
        %v894 = vadd.f32 %v807, %v893
        %v895 = vpop.f32.mrb[0].mxu0
        %896 = vmatprep.mubr.f32.mxu0 0.0
        %897 = vmatmul.mubr.f32.gmra.mrb[0].mxu0 %v817
        %v898 = vpop.f32.mrb[0].mxu0
        %v899 = vadd.f32 %v807, %v898
        %v900 = vpop.f32.mrb[0].mxu0
        %901 = vmatprep.mubr.f32.mxu0 0.0
        %902 = vmatmul.mubr.f32.gmra.mrb[0].mxu0 %v820
        %v903 = vpop.f32.mrb[0].mxu0
        %v904 = vadd.f32 %v807, %v903
        %v905 = vpop.f32.mrb[0].mxu0
        %906 = vdwg.mxu0
        %v907 = vld [vmem:[%s3] sm:$0x1]
        %v908 = vld [vmem:[%s4] sm:$0x1]
        %vm909 = vcmask 261120
        %v910 = vsel %vm909, %v889, 0.0
        %911 = vadd.xlane.f32.xlu0 %v910
        %v912 = vpop.xlane.xlu0 %911
        %v913 = vsel %vm909, %v894, 0.0
        %914 = vadd.xlane.f32.xlu0 %v913
        %v915 = vpop.xlane.xlu0 %914
        %v916 = vsel %vm909, %v899, 0.0
        %917 = vadd.xlane.f32.xlu0 %v916
        %v918 = vpop.xlane.xlu0 %917
        %v919 = vsel %vm909, %v904, 0.0
        %920 = vadd.xlane.f32.xlu0 %v919
        %v921 = vpop.xlane.xlu0 %920
        %v922 = vrcp.pop 32.0
        %v923 = vmul.f32 %v912, %v922
        %v924 = vmul.f32 %v915, %v922
        %v925 = vmul.f32 %v918, %v922
        %v926 = vmul.f32 %v921, %v922
        %v927 = vsub.f32 %v889, %v923
        %v928 = vsub.f32 %v894, %v924
        %v929 = vsub.f32 %v899, %v925
        %v930 = vsub.f32 %v904, %v926
        %v931 = vmul.f32 %v927, %v927
        %v932 = vmul.f32 %v928, %v928
        %v933 = vmul.f32 %v929, %v929
        %v934 = vmul.f32 %v930, %v930
        %v935 = vsel %vm909, %v931, 0.0
        %936 = vadd.xlane.f32.xlu0 %v935
        %v937 = vpop.xlane.xlu0 %936
        %v938 = vsel %vm909, %v932, 0.0
        %939 = vadd.xlane.f32.xlu0 %v938
        %v940 = vpop.xlane.xlu0 %939
        %v941 = vsel %vm909, %v933, 0.0
        %942 = vadd.xlane.f32.xlu0 %v941
        %v943 = vpop.xlane.xlu0 %942
        %v944 = vsel %vm909, %v934, 0.0
        %945 = vadd.xlane.f32.xlu0 %v944
        %v946 = vpop.xlane.xlu0 %945
        %v947 = vmul.f32 %v937, %v922
        %v948 = vmul.f32 %v940, %v922
        %v949 = vmul.f32 %v943, %v922
        %v950 = vmul.f32 %v946, %v922
        %v951 = vadd.f32 %v947, 1e-05
        %v952 = vadd.f32 %v948, 1e-05
        %v953 = vadd.f32 %v949, 1e-05
        %v954 = vadd.f32 %v950, 1e-05
        %v955 = vrsqrt.pop %v951
        %v956 = vrsqrt.pop %v952
        %v957 = vrsqrt.pop %v953
        %v958 = vrsqrt.pop %v954
        %v959 = vmul.f32 %v927, %v955
        %v960 = vmul.f32 %v928, %v956
        %v961 = vmul.f32 %v929, %v957
        %v962 = vmul.f32 %v930, %v958
        %v964 = vlaneseq
        %v965 = vshrl.u32 %v964, 7
        %v966 = vsub.s32 0, %v965
        %v967 = vrot.slane %v907, %v966
        %v969 = vmul.f32 %v959, %v967
        %v970 = vmul.f32 %v960, %v967
        %v971 = vmul.f32 %v961, %v967
        %v972 = vmul.f32 %v962, %v967
        %v974 = vlaneseq
        %v975 = vshrl.u32 %v974, 7
        %v976 = vsub.s32 0, %v975
        %v977 = vrot.slane %v908, %v976
        %v979 = vadd.f32 %v969, %v977
        %v980 = vadd.f32 %v970, %v977
        %v981 = vadd.f32 %v971, %v977
        %v982 = vadd.f32 %v972, %v977
        %vm983 = vcmp.gt.f32.partialorder %v979, 0.0
        %vm984 = vcmp.gt.f32.partialorder %v980, 0.0
        %vm985 = vcmp.gt.f32.partialorder %v981, 0.0
        %vm986 = vcmp.gt.f32.partialorder %v982, 0.0
        %v987 = vmul.f32 %v979, 0.2
        %v988 = vmul.f32 %v980, 0.2
        %v989 = vmul.f32 %v981, 0.2
        %v990 = vmul.f32 %v982, 0.2
        %v991 = vsel %vm983, %v979, %v987
        %v992 = vsel %vm984, %v980, %v988
        %v993 = vsel %vm985, %v981, %v989
        %v994 = vsel %vm986, %v982, %v990
        %995 = vst.msk [vmem:[%s750] sm:$0xff] %vm909, %v991
        %996 = vst.msk [vmem:[%s750 + $0x8] sm:$0xff] %vm909, %v992
        %997 = vst.msk [vmem:[%s750 + $0x10] sm:$0xff] %vm909, %v993
        %998 = vst.msk [vmem:[%s750 + $0x18] sm:$0xff] %vm909, %v994
        %v999 = vld [vmem:[%s5] sm:$0xff]
        %v1000 = vld [vmem:[%s5 + $0x8] sm:$0xff]
        %v1001 = vld [vmem:[%s5 + $0x10] sm:$0xff]
        %v1002 = vld [vmem:[%s5 + $0x18] sm:$0xff]
        %v1003 = vld [vmem:[%s5 + $0x20] sm:$0xff]
        %v1004 = vld [vmem:[%s5 + $0x28] sm:$0xff]
        %v1005 = vld [vmem:[%s5 + $0x30] sm:$0xff]
        %v1006 = vld [vmem:[%s5 + $0x38] sm:$0xff]
        %v1007 = vld [vmem:[%s5 + $0x40] sm:$0xff]
        %v1008 = vld [vmem:[%s5 + $0x48] sm:$0xff]
        %v1009 = vld [vmem:[%s5 + $0x50] sm:$0xff]
        %v1010 = vld [vmem:[%s5 + $0x58] sm:$0xff]
        %v1011 = vld [vmem:[%s6] sm:$0x1]
        %vm1016 = vcmask 1040384
        %v1017 = vrot.slane %v991, 7
        %v1018 = vrot.slane %v992, 7
        %v1019 = vsel %vm1016, %v1017, %v1018
        %v1020 = vrot.slane %v993, 7
        %v1021 = vrot.slane %v994, 7
        %v1022 = vsel %vm1016, %v1020, %v1021
        %v1027 = vsel %vm1016, 0.0, %v1017
        %v1028 = vsel %vm1016, 0.0, %v1020
        %vm1029 = vcmask 1046528
        %v1030 = vrot.slane %v991, 1
        %v1031 = vrot.slane %v992, 1
        %v1032 = vsel %vm1029, %v1030, %v1031
        %v1033 = vrot.slane %v993, 1
        %v1034 = vrot.slane %v994, 1
        %v1035 = vsel %vm1029, %v1033, %v1034
        %v1038 = vsel %vm1029, %v1031, 0.0
        %v1039 = vsel %vm1029, %v1034, 0.0
        %1040 = vrot.lane.b32.xlu0 %v991, 32
        %v1041 = vpop.permute.xlu0 %1040
        %1042 = vrot.lane.b32.xlu0 %v992, 32
        %v1043 = vpop.permute.xlu0 %1042
        %1044 = vrot.lane.b32.xlu0 %v993, 32
        %v1045 = vpop.permute.xlu0 %1044
        %1046 = vrot.lane.b32.xlu0 %v994, 32
        %v1047 = vpop.permute.xlu0 %1046
        %1054 = vrot.lane.b32.xlu0 %v1032, 64
        %v1055 = vpop.permute.xlu0 %1054
        %1056 = vrot.lane.b32.xlu0 %v1038, 64
        %v1057 = vpop.permute.xlu0 %1056
        %1058 = vrot.lane.b32.xlu0 %v1035, 64
        %v1059 = vpop.permute.xlu0 %1058
        %1060 = vrot.lane.b32.xlu0 %v1039, 64
        %v1061 = vpop.permute.xlu0 %1060
        %v1066 = vsel %vm909, %v1027, %v1041
        %v1067 = vsel %vm909, %v1019, %v1043
        %v1068 = vsel %vm909, %v1028, %v1045
        %v1069 = vsel %vm909, %v1022, %v1047
        %vm1070 = vcmask 523264
        %v1071 = vsel %vm1070, %v1066, %v1055
        %v1072 = vsel %vm1070, %v1067, %v1057
        %v1073 = vsel %vm1070, %v1068, %v1059
        %v1074 = vsel %vm1070, %v1069, %v1061
        %v1076 = vlaneseq
        %v1077 = vshrl.u32 %v1076, 7
        %v1078 = vsub.s32 0, %v1077
        %v1079 = vrot.slane %v1011, %v1078
        %vm1081 = vcmask 785408
        %v1083 = vsel %vm1081, %v1071, 0
        %v1086 = vsel %vm1081, %v1072, 0
        %v1089 = vsel %vm1081, %v1073, 0
        %v1092 = vsel %vm1081, %v1074, 0
        %1094 = vmatprep.subr.mxu0 0.0
        %1095 = vmatpush1.msra.mxu0 %v999
        %1096 = vmatprep.subr.mxu0 0.0
        %1097 = vmatpush1.msra.mxu0 %v1000
        %1098 = vmatprep.subr.mxu0 0.0
        %1099 = vmatpush1.msra.mxu0 %v1001
        %1100 = vmatprep.subr.mxu0 0.0
        %1101 = vmatpush1.msra.mxu0 %v1002
        %1102 = vmatprep.subr.mxu0 0.0
        %1103 = vmatpush1.msra.mxu0 %v1003
        %1104 = vmatprep.subr.mxu0 0.0
        %1105 = vmatpush1.msra.mxu0 %v1004
        %1106 = vmatprep.subr.mxu0 0.0
        %1107 = vmatpush1.msra.mxu0 %v1005
        %1108 = vmatprep.subr.mxu0 0.0
        %1109 = vmatpush1.msra.mxu0 %v1006
        %1110 = vmatprep.subr.mxu0 0.0
        %1111 = vmatpush1.msra.mxu0 %v1007
        %1112 = vmatprep.subr.mxu0 0.0
        %1113 = vmatpush1.msra.mxu0 %v1008
        %1114 = vmatprep.subr.mxu0 0.0
        %1115 = vmatpush1.msra.mxu0 %v1009
        %1116 = vmatprep.subr.mxu0 0.0
        %1117 = vmatpush1.msra.mxu0 %v1010
        %1118 = vmatprep.subr.mxu0 0.0
        %1119 = vmatpush1.msra.mxu0 0.0
        %1120 = vmatprep.subr.mxu0 0.0
        %1121 = vmatpush1.msra.mxu0 0.0
        %1122 = vmatprep.subr.mxu0 0.0
        %1123 = vmatpush1.msra.mxu0 0.0
        %1124 = vmatprep.subr.mxu0 0.0
        %1125 = vmatpush1.msra.mxu0 0.0
        %1126 = vmatprep.subr.mxu0 0.0
        %1127 = vmatpush1.msra.mxu0 0.0
        %1128 = vmatprep.subr.mxu0 0.0
        %1129 = vmatpush1.msra.mxu0 0.0
        %1130 = vmatprep.subr.mxu0 0.0
        %1131 = vmatpush1.msra.mxu0 0.0
        %1132 = vmatprep.subr.mxu0 0.0
        %1133 = vmatpush1.msra.mxu0 0.0
        %1134 = vmatprep.subr.mxu0 0.0
        %1135 = vmatpush1.msra.mxu0 0.0
        %1136 = vmatprep.subr.mxu0 0.0
        %1137 = vmatpush1.msra.mxu0 0.0
        %1138 = vmatprep.subr.mxu0 0.0
        %1139 = vmatpush1.msra.mxu0 0.0
        %1140 = vmatprep.subr.mxu0 0.0
        %1141 = vmatpush1.msra.mxu0 0.0
        %1142 = vmatprep.subr.mxu0 0.0
        %1143 = vmatpush1.msra.mxu0 0.0
        %1144 = vmatprep.subr.mxu0 0.0
        %1145 = vmatpush1.msra.mxu0 0.0
        %1146 = vmatprep.subr.mxu0 0.0
        %1147 = vmatpush1.msra.mxu0 0.0
        %1148 = vmatprep.subr.mxu0 0.0
        %1149 = vmatpush1.msra.mxu0 0.0
        %1150 = vmatprep.subr.mxu0 0.0
        %1151 = vmatpush1.msra.mxu0 0.0
        %1152 = vmatprep.subr.mxu0 0.0
        %1153 = vmatpush1.msra.mxu0 0.0
        %1154 = vmatprep.subr.mxu0 0.0
        %1155 = vmatpush1.msra.mxu0 0.0
        %1156 = vmatprep.subr.mxu0 0.0
        %1157 = vmatpush1.msra.mxu0 0.0
        %1158 = vmatprep.mubr.f32.mxu0 0.0
        %1159 = vmatmul.mubr.f32.gmra.mrb[0].mxu0 %v1083
        %v1160 = vpop.f32.mrb[0].mxu0
        %v1161 = vadd.f32 %v1079, %v1160
        %v1162 = vpop.f32.mrb[0].mxu0
        %1163 = vmatprep.mubr.f32.mxu0 0.0
        %1164 = vmatmul.mubr.f32.gmra.mrb[0].mxu0 %v1086
        %v1165 = vpop.f32.mrb[0].mxu0
        %v1166 = vadd.f32 %v1079, %v1165
        %v1167 = vpop.f32.mrb[0].mxu0
        %1168 = vmatprep.mubr.f32.mxu0 0.0
        %1169 = vmatmul.mubr.f32.gmra.mrb[0].mxu0 %v1089
        %v1170 = vpop.f32.mrb[0].mxu0
        %v1171 = vadd.f32 %v1079, %v1170
        %v1172 = vpop.f32.mrb[0].mxu0
        %1173 = vmatprep.mubr.f32.mxu0 0.0
        %1174 = vmatmul.mubr.f32.gmra.mrb[0].mxu0 %v1092
        %v1175 = vpop.f32.mrb[0].mxu0
        %v1176 = vadd.f32 %v1079, %v1175
        %v1177 = vpop.f32.mrb[0].mxu0
        %1178 = vdwg.mxu0
        %v1179 = vld [vmem:[%s7] sm:$0x1]
        %v1180 = vld [vmem:[%s8] sm:$0x1]
        %v1181 = vsel %vm909, %v1161, 0.0
        %1182 = vadd.xlane.f32.xlu0 %v1181
        %v1183 = vpop.xlane.xlu0 %1182
        %v1184 = vsel %vm909, %v1166, 0.0
        %1185 = vadd.xlane.f32.xlu0 %v1184
        %v1186 = vpop.xlane.xlu0 %1185
        %v1187 = vsel %vm909, %v1171, 0.0
        %1188 = vadd.xlane.f32.xlu0 %v1187
        %v1189 = vpop.xlane.xlu0 %1188
        %v1190 = vsel %vm909, %v1176, 0.0
        %1191 = vadd.xlane.f32.xlu0 %v1190
        %v1192 = vpop.xlane.xlu0 %1191
        %v1193 = vmul.f32 %v1183, %v922
        %v1194 = vmul.f32 %v1186, %v922
        %v1195 = vmul.f32 %v1189, %v922
        %v1196 = vmul.f32 %v1192, %v922
        %v1197 = vsub.f32 %v1161, %v1193
        %v1198 = vsub.f32 %v1166, %v1194
        %v1199 = vsub.f32 %v1171, %v1195
        %v1200 = vsub.f32 %v1176, %v1196
        %v1201 = vmul.f32 %v1197, %v1197
        %v1202 = vmul.f32 %v1198, %v1198
        %v1203 = vmul.f32 %v1199, %v1199
        %v1204 = vmul.f32 %v1200, %v1200
        %v1205 = vsel %vm909, %v1201, 0.0
        %1206 = vadd.xlane.f32.xlu0 %v1205
        %v1207 = vpop.xlane.xlu0 %1206
        %v1208 = vsel %vm909, %v1202, 0.0
        %1209 = vadd.xlane.f32.xlu0 %v1208
        %v1210 = vpop.xlane.xlu0 %1209
        %v1211 = vsel %vm909, %v1203, 0.0
        %1212 = vadd.xlane.f32.xlu0 %v1211
        %v1213 = vpop.xlane.xlu0 %1212
        %v1214 = vsel %vm909, %v1204, 0.0
        %1215 = vadd.xlane.f32.xlu0 %v1214
        %v1216 = vpop.xlane.xlu0 %1215
        %v1217 = vmul.f32 %v1207, %v922
        %v1218 = vmul.f32 %v1210, %v922
        %v1219 = vmul.f32 %v1213, %v922
        %v1220 = vmul.f32 %v1216, %v922
        %v1221 = vadd.f32 %v1217, 1e-05
        %v1222 = vadd.f32 %v1218, 1e-05
        %v1223 = vadd.f32 %v1219, 1e-05
        %v1224 = vadd.f32 %v1220, 1e-05
        %v1225 = vrsqrt.pop %v1221
        %v1226 = vrsqrt.pop %v1222
        %v1227 = vrsqrt.pop %v1223
        %v1228 = vrsqrt.pop %v1224
        %v1229 = vmul.f32 %v1197, %v1225
        %v1230 = vmul.f32 %v1198, %v1226
        %v1231 = vmul.f32 %v1199, %v1227
        %v1232 = vmul.f32 %v1200, %v1228
        %v1234 = vlaneseq
        %v1235 = vshrl.u32 %v1234, 7
        %v1236 = vsub.s32 0, %v1235
        %v1237 = vrot.slane %v1179, %v1236
        %v1239 = vmul.f32 %v1229, %v1237
        %v1240 = vmul.f32 %v1230, %v1237
        %v1241 = vmul.f32 %v1231, %v1237
        %v1242 = vmul.f32 %v1232, %v1237
        %v1244 = vlaneseq
        %v1245 = vshrl.u32 %v1244, 7
        %v1246 = vsub.s32 0, %v1245
        %v1247 = vrot.slane %v1180, %v1246
        %v1249 = vadd.f32 %v1239, %v1247
        %v1250 = vadd.f32 %v1240, %v1247
        %v1251 = vadd.f32 %v1241, %v1247
        %v1252 = vadd.f32 %v1242, %v1247
        %vm1253 = vcmp.gt.f32.partialorder %v1249, 0.0
        %vm1254 = vcmp.gt.f32.partialorder %v1250, 0.0
        %vm1255 = vcmp.gt.f32.partialorder %v1251, 0.0
        %vm1256 = vcmp.gt.f32.partialorder %v1252, 0.0
        %v1257 = vmul.f32 %v1249, 0.2
        %v1258 = vmul.f32 %v1250, 0.2
        %v1259 = vmul.f32 %v1251, 0.2
        %v1260 = vmul.f32 %v1252, 0.2
        %v1261 = vsel %vm1253, %v1249, %v1257
        %v1262 = vsel %vm1254, %v1250, %v1258
        %v1263 = vsel %vm1255, %v1251, %v1259
        %v1264 = vsel %vm1256, %v1252, %v1260
        %v1265 = vld [vmem:[%s9] sm:$0xff]
        %v1266 = vld [vmem:[%s9 + $0x8] sm:$0xff]
        %v1267 = vld [vmem:[%s9 + $0x10] sm:$0xff]
        %v1268 = vld [vmem:[%s9 + $0x18] sm:$0xff]
        %v1269 = vld [vmem:[%s9 + $0x20] sm:$0xff]
        %v1270 = vld [vmem:[%s9 + $0x28] sm:$0xff]
        %v1271 = vld [vmem:[%s9 + $0x30] sm:$0xff]
        %v1272 = vld [vmem:[%s9 + $0x38] sm:$0xff]
        %v1273 = vld [vmem:[%s9 + $0x40] sm:$0xff]
        %v1274 = vld [vmem:[%s9 + $0x48] sm:$0xff]
        %v1275 = vld [vmem:[%s9 + $0x50] sm:$0xff]
        %v1276 = vld [vmem:[%s9 + $0x58] sm:$0xff]
        %v1277 = vld [vmem:[%s10] sm:$0x1]
        %v1282 = vrot.slane %v1261, 7
        %v1283 = vrot.slane %v1262, 7
        %v1284 = vsel %vm1016, %v1282, %v1283
        %v1285 = vrot.slane %v1263, 7
        %v1286 = vrot.slane %v1264, 7
        %v1287 = vsel %vm1016, %v1285, %v1286
        %v1292 = vsel %vm1016, 0.0, %v1282
        %v1293 = vsel %vm1016, 0.0, %v1285
        %v1294 = vrot.slane %v1261, 1
        %v1295 = vrot.slane %v1262, 1
        %v1296 = vsel %vm1029, %v1294, %v1295
        %v1297 = vrot.slane %v1263, 1
        %v1298 = vrot.slane %v1264, 1
        %v1299 = vsel %vm1029, %v1297, %v1298
        %v1302 = vsel %vm1029, %v1295, 0.0
        %v1303 = vsel %vm1029, %v1298, 0.0
        %1304 = vrot.lane.b32.xlu0 %v1261, 32
        %v1305 = vpop.permute.xlu0 %1304
        %1306 = vrot.lane.b32.xlu0 %v1262, 32
        %v1307 = vpop.permute.xlu0 %1306
        %1308 = vrot.lane.b32.xlu0 %v1263, 32
        %v1309 = vpop.permute.xlu0 %1308
        %1310 = vrot.lane.b32.xlu0 %v1264, 32
        %v1311 = vpop.permute.xlu0 %1310
        %1318 = vrot.lane.b32.xlu0 %v1296, 64
        %v1319 = vpop.permute.xlu0 %1318
        %1320 = vrot.lane.b32.xlu0 %v1302, 64
        %v1321 = vpop.permute.xlu0 %1320
        %1322 = vrot.lane.b32.xlu0 %v1299, 64
        %v1323 = vpop.permute.xlu0 %1322
        %1324 = vrot.lane.b32.xlu0 %v1303, 64
        %v1325 = vpop.permute.xlu0 %1324
        %v1330 = vsel %vm909, %v1292, %v1305
        %v1331 = vsel %vm909, %v1284, %v1307
        %v1332 = vsel %vm909, %v1293, %v1309
        %v1333 = vsel %vm909, %v1287, %v1311
        %v1334 = vsel %vm1070, %v1330, %v1319
        %v1335 = vsel %vm1070, %v1331, %v1321
        %v1336 = vsel %vm1070, %v1332, %v1323
        %v1337 = vsel %vm1070, %v1333, %v1325
        %v1339 = vlaneseq
        %v1340 = vshrl.u32 %v1339, 7
        %v1341 = vsub.s32 0, %v1340
        %v1342 = vrot.slane %v1277, %v1341
        %v1345 = vsel %vm1081, %v1334, 0
        %v1348 = vsel %vm1081, %v1335, 0
        %v1351 = vsel %vm1081, %v1336, 0
        %v1354 = vsel %vm1081, %v1337, 0
        %1356 = vmatprep.subr.mxu0 0.0
        %1357 = vmatpush1.msra.mxu0 %v1265
        %1358 = vmatprep.subr.mxu0 0.0
        %1359 = vmatpush1.msra.mxu0 %v1266
        %1360 = vmatprep.subr.mxu0 0.0
        %1361 = vmatpush1.msra.mxu0 %v1267
        %1362 = vmatprep.subr.mxu0 0.0
        %1363 = vmatpush1.msra.mxu0 %v1268
        %1364 = vmatprep.subr.mxu0 0.0
        %1365 = vmatpush1.msra.mxu0 %v1269
        %1366 = vmatprep.subr.mxu0 0.0
        %1367 = vmatpush1.msra.mxu0 %v1270
        %1368 = vmatprep.subr.mxu0 0.0
        %1369 = vmatpush1.msra.mxu0 %v1271
        %1370 = vmatprep.subr.mxu0 0.0
        %1371 = vmatpush1.msra.mxu0 %v1272
        %1372 = vmatprep.subr.mxu0 0.0
        %1373 = vmatpush1.msra.mxu0 %v1273
        %1374 = vmatprep.subr.mxu0 0.0
        %1375 = vmatpush1.msra.mxu0 %v1274
        %1376 = vmatprep.subr.mxu0 0.0
        %1377 = vmatpush1.msra.mxu0 %v1275
        %1378 = vmatprep.subr.mxu0 0.0
        %1379 = vmatpush1.msra.mxu0 %v1276
        %1380 = vmatprep.subr.mxu0 0.0
        %1381 = vmatpush1.msra.mxu0 0.0
        %1382 = vmatprep.subr.mxu0 0.0
        %1383 = vmatpush1.msra.mxu0 0.0
        %1384 = vmatprep.subr.mxu0 0.0
        %1385 = vmatpush1.msra.mxu0 0.0
        %1386 = vmatprep.subr.mxu0 0.0
        %1387 = vmatpush1.msra.mxu0 0.0
        %1388 = vmatprep.subr.mxu0 0.0
        %1389 = vmatpush1.msra.mxu0 0.0
        %1390 = vmatprep.subr.mxu0 0.0
        %1391 = vmatpush1.msra.mxu0 0.0
        %1392 = vmatprep.subr.mxu0 0.0
        %1393 = vmatpush1.msra.mxu0 0.0
        %1394 = vmatprep.subr.mxu0 0.0
        %1395 = vmatpush1.msra.mxu0 0.0
        %1396 = vmatprep.subr.mxu0 0.0
        %1397 = vmatpush1.msra.mxu0 0.0
        %1398 = vmatprep.subr.mxu0 0.0
        %1399 = vmatpush1.msra.mxu0 0.0
        %1400 = vmatprep.subr.mxu0 0.0
        %1401 = vmatpush1.msra.mxu0 0.0
        %1402 = vmatprep.subr.mxu0 0.0
        %1403 = vmatpush1.msra.mxu0 0.0
        %1404 = vmatprep.subr.mxu0 0.0
        %1405 = vmatpush1.msra.mxu0 0.0
        %1406 = vmatprep.subr.mxu0 0.0
        %1407 = vmatpush1.msra.mxu0 0.0
        %1408 = vmatprep.subr.mxu0 0.0
        %1409 = vmatpush1.msra.mxu0 0.0
        %1410 = vmatprep.subr.mxu0 0.0
        %1411 = vmatpush1.msra.mxu0 0.0
        %1412 = vmatprep.subr.mxu0 0.0
        %1413 = vmatpush1.msra.mxu0 0.0
        %1414 = vmatprep.subr.mxu0 0.0
        %1415 = vmatpush1.msra.mxu0 0.0
        %1416 = vmatprep.subr.mxu0 0.0
        %1417 = vmatpush1.msra.mxu0 0.0
        %1418 = vmatprep.subr.mxu0 0.0
        %1419 = vmatpush1.msra.mxu0 0.0
        %1420 = vmatprep.mubr.f32.mxu0 0.0
        %1421 = vmatmul.mubr.f32.gmra.mrb[0].mxu0 %v1345
        %v1422 = vpop.f32.mrb[0].mxu0
        %v1423 = vadd.f32 %v1342, %v1422
        %v1424 = vpop.f32.mrb[0].mxu0
        %1425 = vmatprep.mubr.f32.mxu0 0.0
        %1426 = vmatmul.mubr.f32.gmra.mrb[0].mxu0 %v1348
        %v1427 = vpop.f32.mrb[0].mxu0
        %v1428 = vadd.f32 %v1342, %v1427
        %v1429 = vpop.f32.mrb[0].mxu0
        %1430 = vmatprep.mubr.f32.mxu0 0.0
        %1431 = vmatmul.mubr.f32.gmra.mrb[0].mxu0 %v1351
        %v1432 = vpop.f32.mrb[0].mxu0
        %v1433 = vadd.f32 %v1342, %v1432
        %v1434 = vpop.f32.mrb[0].mxu0
        %1435 = vmatprep.mubr.f32.mxu0 0.0
        %1436 = vmatmul.mubr.f32.gmra.mrb[0].mxu0 %v1354
        %v1437 = vpop.f32.mrb[0].mxu0
        %v1438 = vadd.f32 %v1342, %v1437
        %v1439 = vpop.f32.mrb[0].mxu0
        %1440 = vdwg.mxu0
        %v1441 = vld [vmem:[%s11] sm:$0x1]
        %v1442 = vld [vmem:[%s12] sm:$0x1]
        %v1443 = vsel %vm909, %v1423, 0.0
        %1444 = vadd.xlane.f32.xlu0 %v1443
        %v1445 = vpop.xlane.xlu0 %1444
        %v1446 = vsel %vm909, %v1428, 0.0
        %1447 = vadd.xlane.f32.xlu0 %v1446
        %v1448 = vpop.xlane.xlu0 %1447
        %v1449 = vsel %vm909, %v1433, 0.0
        %1450 = vadd.xlane.f32.xlu0 %v1449
        %v1451 = vpop.xlane.xlu0 %1450
        %v1452 = vsel %vm909, %v1438, 0.0
        %1453 = vadd.xlane.f32.xlu0 %v1452
        %v1454 = vpop.xlane.xlu0 %1453
        %v1455 = vmul.f32 %v1445, %v922
        %v1456 = vmul.f32 %v1448, %v922
        %v1457 = vmul.f32 %v1451, %v922
        %v1458 = vmul.f32 %v1454, %v922
        %v1459 = vsub.f32 %v1423, %v1455
        %v1460 = vsub.f32 %v1428, %v1456
        %v1461 = vsub.f32 %v1433, %v1457
        %v1462 = vsub.f32 %v1438, %v1458
        %v1463 = vmul.f32 %v1459, %v1459
        %v1464 = vmul.f32 %v1460, %v1460
        %v1465 = vmul.f32 %v1461, %v1461
        %v1466 = vmul.f32 %v1462, %v1462
        %v1467 = vsel %vm909, %v1463, 0.0
        %1468 = vadd.xlane.f32.xlu0 %v1467
        %v1469 = vpop.xlane.xlu0 %1468
        %v1470 = vsel %vm909, %v1464, 0.0
        %1471 = vadd.xlane.f32.xlu0 %v1470
        %v1472 = vpop.xlane.xlu0 %1471
        %v1473 = vsel %vm909, %v1465, 0.0
        %1474 = vadd.xlane.f32.xlu0 %v1473
        %v1475 = vpop.xlane.xlu0 %1474
        %v1476 = vsel %vm909, %v1466, 0.0
        %1477 = vadd.xlane.f32.xlu0 %v1476
        %v1478 = vpop.xlane.xlu0 %1477
        %v1479 = vmul.f32 %v1469, %v922
        %v1480 = vmul.f32 %v1472, %v922
        %v1481 = vmul.f32 %v1475, %v922
        %v1482 = vmul.f32 %v1478, %v922
        %v1483 = vadd.f32 %v1479, 1e-05
        %v1484 = vadd.f32 %v1480, 1e-05
        %v1485 = vadd.f32 %v1481, 1e-05
        %v1486 = vadd.f32 %v1482, 1e-05
        %v1487 = vrsqrt.pop %v1483
        %v1488 = vrsqrt.pop %v1484
        %v1489 = vrsqrt.pop %v1485
        %v1490 = vrsqrt.pop %v1486
        %v1491 = vmul.f32 %v1459, %v1487
        %v1492 = vmul.f32 %v1460, %v1488
        %v1493 = vmul.f32 %v1461, %v1489
        %v1494 = vmul.f32 %v1462, %v1490
        %v1496 = vlaneseq
        %v1497 = vshrl.u32 %v1496, 7
        %v1498 = vsub.s32 0, %v1497
        %v1499 = vrot.slane %v1441, %v1498
        %v1501 = vmul.f32 %v1491, %v1499
        %v1502 = vmul.f32 %v1492, %v1499
        %v1503 = vmul.f32 %v1493, %v1499
        %v1504 = vmul.f32 %v1494, %v1499
        %v1506 = vlaneseq
        %v1507 = vshrl.u32 %v1506, 7
        %v1508 = vsub.s32 0, %v1507
        %v1509 = vrot.slane %v1442, %v1508
        %v1511 = vadd.f32 %v1501, %v1509
        %v1512 = vadd.f32 %v1502, %v1509
        %v1513 = vadd.f32 %v1503, %v1509
        %v1514 = vadd.f32 %v1504, %v1509
        %v1515 = vadd.f32 %v1511, %v991
        %v1516 = vadd.f32 %v1512, %v992
        %v1517 = vadd.f32 %v1513, %v993
        %v1518 = vadd.f32 %v1514, %v994
        %vm1519 = vcmp.gt.f32.partialorder %v1515, 0.0
        %vm1520 = vcmp.gt.f32.partialorder %v1516, 0.0
        %vm1521 = vcmp.gt.f32.partialorder %v1517, 0.0
        %vm1522 = vcmp.gt.f32.partialorder %v1518, 0.0
        %v1523 = vmul.f32 %v1515, 0.2
        %v1524 = vmul.f32 %v1516, 0.2
        %v1525 = vmul.f32 %v1517, 0.2
        %v1526 = vmul.f32 %v1518, 0.2
        %v1527 = vsel %vm1519, %v1515, %v1523
        %v1528 = vsel %vm1520, %v1516, %v1524
        %v1529 = vsel %vm1521, %v1517, %v1525
        %v1530 = vsel %vm1522, %v1518, %v1526
        %1531 = vst.msk [vmem:[%s757] sm:$0xff] %vm909, %v1527
        %1532 = vst.msk [vmem:[%s757 + $0x8] sm:$0xff] %vm909, %v1528
        %1533 = vst.msk [vmem:[%s757 + $0x10] sm:$0xff] %vm909, %v1529
        %1534 = vst.msk [vmem:[%s757 + $0x18] sm:$0xff] %vm909, %v1530
        %s1535 = scalar_lea.vmem %s5, 96
        %v1536 = vld [vmem:[%s1535] sm:$0xff]
        %v1537 = vld [vmem:[%s1535 + $0x8] sm:$0xff]
        %v1538 = vld [vmem:[%s1535 + $0x10] sm:$0xff]
        %v1539 = vld [vmem:[%s1535 + $0x18] sm:$0xff]
        %v1540 = vld [vmem:[%s1535 + $0x20] sm:$0xff]
        %v1541 = vld [vmem:[%s1535 + $0x28] sm:$0xff]
        %v1542 = vld [vmem:[%s1535 + $0x30] sm:$0xff]
        %v1543 = vld [vmem:[%s1535 + $0x38] sm:$0xff]
        %v1544 = vld [vmem:[%s1535 + $0x40] sm:$0xff]
        %v1545 = vld [vmem:[%s1535 + $0x48] sm:$0xff]
        %v1546 = vld [vmem:[%s1535 + $0x50] sm:$0xff]
        %v1547 = vld [vmem:[%s1535 + $0x58] sm:$0xff]
        %s1548 = scalar_lea.vmem %s6, 1
        %v1549 = vld [vmem:[%s1548] sm:$0x1]
        %vm1554 = vcmask 1041408
        %v1555 = vrot.slane %v1527, 6
        %v1556 = vrot.slane %v1528, 6
        %v1557 = vsel %vm1554, %v1555, %v1556
        %v1558 = vrot.slane %v1529, 6
        %v1559 = vrot.slane %v1530, 6
        %v1560 = vsel %vm1554, %v1558, %v1559
        %v1565 = vsel %vm1554, 0.0, %v1555
        %v1566 = vsel %vm1554, 0.0, %v1558
        %vm1567 = vcmask 1045504
        %v1568 = vrot.slane %v1527, 2
        %v1569 = vrot.slane %v1528, 2
        %v1570 = vsel %vm1567, %v1568, %v1569
        %v1571 = vrot.slane %v1529, 2
        %v1572 = vrot.slane %v1530, 2
        %v1573 = vsel %vm1567, %v1571, %v1572
        %v1576 = vsel %vm1567, %v1569, 0.0
        %v1577 = vsel %vm1567, %v1572, 0.0
        %1578 = vrot.lane.b32.xlu0 %v1527, 32
        %v1579 = vpop.permute.xlu0 %1578
        %1580 = vrot.lane.b32.xlu0 %v1528, 32
        %v1581 = vpop.permute.xlu0 %1580
        %1582 = vrot.lane.b32.xlu0 %v1529, 32
        %v1583 = vpop.permute.xlu0 %1582
        %1584 = vrot.lane.b32.xlu0 %v1530, 32
        %v1585 = vpop.permute.xlu0 %1584
        %1592 = vrot.lane.b32.xlu0 %v1570, 64
        %v1593 = vpop.permute.xlu0 %1592
        %1594 = vrot.lane.b32.xlu0 %v1576, 64
        %v1595 = vpop.permute.xlu0 %1594
        %1596 = vrot.lane.b32.xlu0 %v1573, 64
        %v1597 = vpop.permute.xlu0 %1596
        %1598 = vrot.lane.b32.xlu0 %v1577, 64
        %v1599 = vpop.permute.xlu0 %1598
        %v1604 = vsel %vm909, %v1565, %v1579
        %v1605 = vsel %vm909, %v1557, %v1581
        %v1606 = vsel %vm909, %v1566, %v1583
        %v1607 = vsel %vm909, %v1560, %v1585
        %v1608 = vsel %vm1070, %v1604, %v1593
        %v1609 = vsel %vm1070, %v1605, %v1595
        %v1610 = vsel %vm1070, %v1606, %v1597
        %v1611 = vsel %vm1070, %v1607, %v1599
        %v1613 = vlaneseq
        %v1614 = vshrl.u32 %v1613, 7
        %v1615 = vsub.s32 0, %v1614
        %v1616 = vrot.slane %v1549, %v1615
        %v1619 = vsel %vm1081, %v1608, 0
        %v1622 = vsel %vm1081, %v1609, 0
        %v1625 = vsel %vm1081, %v1610, 0
        %v1628 = vsel %vm1081, %v1611, 0
        %1630 = vmatprep.subr.mxu0 0.0
        %1631 = vmatpush1.msra.mxu0 %v1536
        %1632 = vmatprep.subr.mxu0 0.0
        %1633 = vmatpush1.msra.mxu0 %v1537
        %1634 = vmatprep.subr.mxu0 0.0
        %1635 = vmatpush1.msra.mxu0 %v1538
        %1636 = vmatprep.subr.mxu0 0.0
        %1637 = vmatpush1.msra.mxu0 %v1539
        %1638 = vmatprep.subr.mxu0 0.0
        %1639 = vmatpush1.msra.mxu0 %v1540
        %1640 = vmatprep.subr.mxu0 0.0
        %1641 = vmatpush1.msra.mxu0 %v1541
        %1642 = vmatprep.subr.mxu0 0.0
        %1643 = vmatpush1.msra.mxu0 %v1542
        %1644 = vmatprep.subr.mxu0 0.0
        %1645 = vmatpush1.msra.mxu0 %v1543
        %1646 = vmatprep.subr.mxu0 0.0
        %1647 = vmatpush1.msra.mxu0 %v1544
        %1648 = vmatprep.subr.mxu0 0.0
        %1649 = vmatpush1.msra.mxu0 %v1545
        %1650 = vmatprep.subr.mxu0 0.0
        %1651 = vmatpush1.msra.mxu0 %v1546
        %1652 = vmatprep.subr.mxu0 0.0
        %1653 = vmatpush1.msra.mxu0 %v1547
        %1654 = vmatprep.subr.mxu0 0.0
        %1655 = vmatpush1.msra.mxu0 0.0
        %1656 = vmatprep.subr.mxu0 0.0
        %1657 = vmatpush1.msra.mxu0 0.0
        %1658 = vmatprep.subr.mxu0 0.0
        %1659 = vmatpush1.msra.mxu0 0.0
        %1660 = vmatprep.subr.mxu0 0.0
        %1661 = vmatpush1.msra.mxu0 0.0
        %1662 = vmatprep.subr.mxu0 0.0
        %1663 = vmatpush1.msra.mxu0 0.0
        %1664 = vmatprep.subr.mxu0 0.0
        %1665 = vmatpush1.msra.mxu0 0.0
        %1666 = vmatprep.subr.mxu0 0.0
        %1667 = vmatpush1.msra.mxu0 0.0
        %1668 = vmatprep.subr.mxu0 0.0
        %1669 = vmatpush1.msra.mxu0 0.0
        %1670 = vmatprep.subr.mxu0 0.0
        %1671 = vmatpush1.msra.mxu0 0.0
        %1672 = vmatprep.subr.mxu0 0.0
        %1673 = vmatpush1.msra.mxu0 0.0
        %1674 = vmatprep.subr.mxu0 0.0
        %1675 = vmatpush1.msra.mxu0 0.0
        %1676 = vmatprep.subr.mxu0 0.0
        %1677 = vmatpush1.msra.mxu0 0.0
        %1678 = vmatprep.subr.mxu0 0.0
        %1679 = vmatpush1.msra.mxu0 0.0
        %1680 = vmatprep.subr.mxu0 0.0
        %1681 = vmatpush1.msra.mxu0 0.0
        %1682 = vmatprep.subr.mxu0 0.0
        %1683 = vmatpush1.msra.mxu0 0.0
        %1684 = vmatprep.subr.mxu0 0.0
        %1685 = vmatpush1.msra.mxu0 0.0
        %1686 = vmatprep.subr.mxu0 0.0
        %1687 = vmatpush1.msra.mxu0 0.0
        %1688 = vmatprep.subr.mxu0 0.0
        %1689 = vmatpush1.msra.mxu0 0.0
        %1690 = vmatprep.subr.mxu0 0.0
        %1691 = vmatpush1.msra.mxu0 0.0
        %1692 = vmatprep.subr.mxu0 0.0
        %1693 = vmatpush1.msra.mxu0 0.0
        %1694 = vmatprep.mubr.f32.mxu0 0.0
        %1695 = vmatmul.mubr.f32.gmra.mrb[0].mxu0 %v1619
        %v1696 = vpop.f32.mrb[0].mxu0
        %v1697 = vadd.f32 %v1616, %v1696
        %v1698 = vpop.f32.mrb[0].mxu0
        %1699 = vmatprep.mubr.f32.mxu0 0.0
        %1700 = vmatmul.mubr.f32.gmra.mrb[0].mxu0 %v1622
        %v1701 = vpop.f32.mrb[0].mxu0
        %v1702 = vadd.f32 %v1616, %v1701
        %v1703 = vpop.f32.mrb[0].mxu0
        %1704 = vmatprep.mubr.f32.mxu0 0.0
        %1705 = vmatmul.mubr.f32.gmra.mrb[0].mxu0 %v1625
        %v1706 = vpop.f32.mrb[0].mxu0
        %v1707 = vadd.f32 %v1616, %v1706
        %v1708 = vpop.f32.mrb[0].mxu0
        %1709 = vmatprep.mubr.f32.mxu0 0.0
        %1710 = vmatmul.mubr.f32.gmra.mrb[0].mxu0 %v1628
        %v1711 = vpop.f32.mrb[0].mxu0
        %v1712 = vadd.f32 %v1616, %v1711
        %v1713 = vpop.f32.mrb[0].mxu0
        %1714 = vdwg.mxu0
        %s1715 = scalar_lea.vmem %s7, 1
        %v1716 = vld [vmem:[%s1715] sm:$0x1]
        %s1717 = scalar_lea.vmem %s8, 1
        %v1718 = vld [vmem:[%s1717] sm:$0x1]
        %v1719 = vsel %vm909, %v1697, 0.0
        %1720 = vadd.xlane.f32.xlu0 %v1719
        %v1721 = vpop.xlane.xlu0 %1720
        %v1722 = vsel %vm909, %v1702, 0.0
        %1723 = vadd.xlane.f32.xlu0 %v1722
        %v1724 = vpop.xlane.xlu0 %1723
        %v1725 = vsel %vm909, %v1707, 0.0
        %1726 = vadd.xlane.f32.xlu0 %v1725
        %v1727 = vpop.xlane.xlu0 %1726
        %v1728 = vsel %vm909, %v1712, 0.0
        %1729 = vadd.xlane.f32.xlu0 %v1728
        %v1730 = vpop.xlane.xlu0 %1729
        %v1731 = vmul.f32 %v1721, %v922
        %v1732 = vmul.f32 %v1724, %v922
        %v1733 = vmul.f32 %v1727, %v922
        %v1734 = vmul.f32 %v1730, %v922
        %v1735 = vsub.f32 %v1697, %v1731
        %v1736 = vsub.f32 %v1702, %v1732
        %v1737 = vsub.f32 %v1707, %v1733
        %v1738 = vsub.f32 %v1712, %v1734
        %v1739 = vmul.f32 %v1735, %v1735
        %v1740 = vmul.f32 %v1736, %v1736
        %v1741 = vmul.f32 %v1737, %v1737
        %v1742 = vmul.f32 %v1738, %v1738
        %v1743 = vsel %vm909, %v1739, 0.0
        %1744 = vadd.xlane.f32.xlu0 %v1743
        %v1745 = vpop.xlane.xlu0 %1744
        %v1746 = vsel %vm909, %v1740, 0.0
        %1747 = vadd.xlane.f32.xlu0 %v1746
        %v1748 = vpop.xlane.xlu0 %1747
        %v1749 = vsel %vm909, %v1741, 0.0
        %1750 = vadd.xlane.f32.xlu0 %v1749
        %v1751 = vpop.xlane.xlu0 %1750
        %v1752 = vsel %vm909, %v1742, 0.0
        %1753 = vadd.xlane.f32.xlu0 %v1752
        %v1754 = vpop.xlane.xlu0 %1753
        %v1755 = vmul.f32 %v1745, %v922
        %v1756 = vmul.f32 %v1748, %v922
        %v1757 = vmul.f32 %v1751, %v922
        %v1758 = vmul.f32 %v1754, %v922
        %v1759 = vadd.f32 %v1755, 1e-05
        %v1760 = vadd.f32 %v1756, 1e-05
        %v1761 = vadd.f32 %v1757, 1e-05
        %v1762 = vadd.f32 %v1758, 1e-05
        %v1763 = vrsqrt.pop %v1759
        %v1764 = vrsqrt.pop %v1760
        %v1765 = vrsqrt.pop %v1761
        %v1766 = vrsqrt.pop %v1762
        %v1767 = vmul.f32 %v1735, %v1763
        %v1768 = vmul.f32 %v1736, %v1764
        %v1769 = vmul.f32 %v1737, %v1765
        %v1770 = vmul.f32 %v1738, %v1766
        %v1772 = vlaneseq
        %v1773 = vshrl.u32 %v1772, 7
        %v1774 = vsub.s32 0, %v1773
        %v1775 = vrot.slane %v1716, %v1774
        %v1777 = vmul.f32 %v1767, %v1775
        %v1778 = vmul.f32 %v1768, %v1775
        %v1779 = vmul.f32 %v1769, %v1775
        %v1780 = vmul.f32 %v1770, %v1775
        %v1782 = vlaneseq
        %v1783 = vshrl.u32 %v1782, 7
        %v1784 = vsub.s32 0, %v1783
        %v1785 = vrot.slane %v1718, %v1784
        %v1787 = vadd.f32 %v1777, %v1785
        %v1788 = vadd.f32 %v1778, %v1785
        %v1789 = vadd.f32 %v1779, %v1785
        %v1790 = vadd.f32 %v1780, %v1785
        %vm1791 = vcmp.gt.f32.partialorder %v1787, 0.0
        %vm1792 = vcmp.gt.f32.partialorder %v1788, 0.0
        %vm1793 = vcmp.gt.f32.partialorder %v1789, 0.0
        %vm1794 = vcmp.gt.f32.partialorder %v1790, 0.0
        %v1795 = vmul.f32 %v1787, 0.2
        %v1796 = vmul.f32 %v1788, 0.2
        %v1797 = vmul.f32 %v1789, 0.2
        %v1798 = vmul.f32 %v1790, 0.2
        %v1799 = vsel %vm1791, %v1787, %v1795
        %v1800 = vsel %vm1792, %v1788, %v1796
        %v1801 = vsel %vm1793, %v1789, %v1797
        %v1802 = vsel %vm1794, %v1790, %v1798
        %s1803 = scalar_lea.vmem %s9, 96
        %v1804 = vld [vmem:[%s1803] sm:$0xff]
        %v1805 = vld [vmem:[%s1803 + $0x8] sm:$0xff]
        %v1806 = vld [vmem:[%s1803 + $0x10] sm:$0xff]
        %v1807 = vld [vmem:[%s1803 + $0x18] sm:$0xff]
        %v1808 = vld [vmem:[%s1803 + $0x20] sm:$0xff]
        %v1809 = vld [vmem:[%s1803 + $0x28] sm:$0xff]
        %v1810 = vld [vmem:[%s1803 + $0x30] sm:$0xff]
        %v1811 = vld [vmem:[%s1803 + $0x38] sm:$0xff]
        %v1812 = vld [vmem:[%s1803 + $0x40] sm:$0xff]
        %v1813 = vld [vmem:[%s1803 + $0x48] sm:$0xff]
        %v1814 = vld [vmem:[%s1803 + $0x50] sm:$0xff]
        %v1815 = vld [vmem:[%s1803 + $0x58] sm:$0xff]
        %s1816 = scalar_lea.vmem %s10, 1
        %v1817 = vld [vmem:[%s1816] sm:$0x1]
        %v1822 = vrot.slane %v1799, 6
        %v1823 = vrot.slane %v1800, 6
        %v1824 = vsel %vm1554, %v1822, %v1823
        %v1825 = vrot.slane %v1801, 6
        %v1826 = vrot.slane %v1802, 6
        %v1827 = vsel %vm1554, %v1825, %v1826
        %v1832 = vsel %vm1554, 0.0, %v1822
        %v1833 = vsel %vm1554, 0.0, %v1825
        %v1834 = vrot.slane %v1799, 2
        %v1835 = vrot.slane %v1800, 2
        %v1836 = vsel %vm1567, %v1834, %v1835
        %v1837 = vrot.slane %v1801, 2
        %v1838 = vrot.slane %v1802, 2
        %v1839 = vsel %vm1567, %v1837, %v1838
        %v1842 = vsel %vm1567, %v1835, 0.0
        %v1843 = vsel %vm1567, %v1838, 0.0
        %1844 = vrot.lane.b32.xlu0 %v1799, 32
        %v1845 = vpop.permute.xlu0 %1844
        %1846 = vrot.lane.b32.xlu0 %v1800, 32
        %v1847 = vpop.permute.xlu0 %1846
        %1848 = vrot.lane.b32.xlu0 %v1801, 32
        %v1849 = vpop.permute.xlu0 %1848
        %1850 = vrot.lane.b32.xlu0 %v1802, 32
        %v1851 = vpop.permute.xlu0 %1850
        %1858 = vrot.lane.b32.xlu0 %v1836, 64
        %v1859 = vpop.permute.xlu0 %1858
        %1860 = vrot.lane.b32.xlu0 %v1842, 64
        %v1861 = vpop.permute.xlu0 %1860
        %1862 = vrot.lane.b32.xlu0 %v1839, 64
        %v1863 = vpop.permute.xlu0 %1862
        %1864 = vrot.lane.b32.xlu0 %v1843, 64
        %v1865 = vpop.permute.xlu0 %1864
        %v1870 = vsel %vm909, %v1832, %v1845
        %v1871 = vsel %vm909, %v1824, %v1847
        %v1872 = vsel %vm909, %v1833, %v1849
        %v1873 = vsel %vm909, %v1827, %v1851
        %v1874 = vsel %vm1070, %v1870, %v1859
        %v1875 = vsel %vm1070, %v1871, %v1861
        %v1876 = vsel %vm1070, %v1872, %v1863
        %v1877 = vsel %vm1070, %v1873, %v1865
        %v1879 = vlaneseq
        %v1880 = vshrl.u32 %v1879, 7
        %v1881 = vsub.s32 0, %v1880
        %v1882 = vrot.slane %v1817, %v1881
        %v1885 = vsel %vm1081, %v1874, 0
        %v1888 = vsel %vm1081, %v1875, 0
        %v1891 = vsel %vm1081, %v1876, 0
        %v1894 = vsel %vm1081, %v1877, 0
        %1896 = vmatprep.subr.mxu0 0.0
        %1897 = vmatpush1.msra.mxu0 %v1804
        %1898 = vmatprep.subr.mxu0 0.0
        %1899 = vmatpush1.msra.mxu0 %v1805
        %1900 = vmatprep.subr.mxu0 0.0
        %1901 = vmatpush1.msra.mxu0 %v1806
        %1902 = vmatprep.subr.mxu0 0.0
        %1903 = vmatpush1.msra.mxu0 %v1807
        %1904 = vmatprep.subr.mxu0 0.0
        %1905 = vmatpush1.msra.mxu0 %v1808
        %1906 = vmatprep.subr.mxu0 0.0
        %1907 = vmatpush1.msra.mxu0 %v1809
        %1908 = vmatprep.subr.mxu0 0.0
        %1909 = vmatpush1.msra.mxu0 %v1810
        %1910 = vmatprep.subr.mxu0 0.0
        %1911 = vmatpush1.msra.mxu0 %v1811
        %1912 = vmatprep.subr.mxu0 0.0
        %1913 = vmatpush1.msra.mxu0 %v1812
        %1914 = vmatprep.subr.mxu0 0.0
        %1915 = vmatpush1.msra.mxu0 %v1813
        %1916 = vmatprep.subr.mxu0 0.0
        %1917 = vmatpush1.msra.mxu0 %v1814
        %1918 = vmatprep.subr.mxu0 0.0
        %1919 = vmatpush1.msra.mxu0 %v1815
        %1920 = vmatprep.subr.mxu0 0.0
        %1921 = vmatpush1.msra.mxu0 0.0
        %1922 = vmatprep.subr.mxu0 0.0
        %1923 = vmatpush1.msra.mxu0 0.0
        %1924 = vmatprep.subr.mxu0 0.0
        %1925 = vmatpush1.msra.mxu0 0.0
        %1926 = vmatprep.subr.mxu0 0.0
        %1927 = vmatpush1.msra.mxu0 0.0
        %1928 = vmatprep.subr.mxu0 0.0
        %1929 = vmatpush1.msra.mxu0 0.0
        %1930 = vmatprep.subr.mxu0 0.0
        %1931 = vmatpush1.msra.mxu0 0.0
        %1932 = vmatprep.subr.mxu0 0.0
        %1933 = vmatpush1.msra.mxu0 0.0
        %1934 = vmatprep.subr.mxu0 0.0
        %1935 = vmatpush1.msra.mxu0 0.0
        %1936 = vmatprep.subr.mxu0 0.0
        %1937 = vmatpush1.msra.mxu0 0.0
        %1938 = vmatprep.subr.mxu0 0.0
        %1939 = vmatpush1.msra.mxu0 0.0
        %1940 = vmatprep.subr.mxu0 0.0
        %1941 = vmatpush1.msra.mxu0 0.0
        %1942 = vmatprep.subr.mxu0 0.0
        %1943 = vmatpush1.msra.mxu0 0.0
        %1944 = vmatprep.subr.mxu0 0.0
        %1945 = vmatpush1.msra.mxu0 0.0
        %1946 = vmatprep.subr.mxu0 0.0
        %1947 = vmatpush1.msra.mxu0 0.0
        %1948 = vmatprep.subr.mxu0 0.0
        %1949 = vmatpush1.msra.mxu0 0.0
        %1950 = vmatprep.subr.mxu0 0.0
        %1951 = vmatpush1.msra.mxu0 0.0
        %1952 = vmatprep.subr.mxu0 0.0
        %1953 = vmatpush1.msra.mxu0 0.0
        %1954 = vmatprep.subr.mxu0 0.0
        %1955 = vmatpush1.msra.mxu0 0.0
        %1956 = vmatprep.subr.mxu0 0.0
        %1957 = vmatpush1.msra.mxu0 0.0
        %1958 = vmatprep.subr.mxu0 0.0
        %1959 = vmatpush1.msra.mxu0 0.0
        %1960 = vmatprep.mubr.f32.mxu0 0.0
        %1961 = vmatmul.mubr.f32.gmra.mrb[0].mxu0 %v1885
        %v1962 = vpop.f32.mrb[0].mxu0
        %v1963 = vadd.f32 %v1882, %v1962
        %v1964 = vpop.f32.mrb[0].mxu0
        %1965 = vmatprep.mubr.f32.mxu0 0.0
        %1966 = vmatmul.mubr.f32.gmra.mrb[0].mxu0 %v1888
        %v1967 = vpop.f32.mrb[0].mxu0
        %v1968 = vadd.f32 %v1882, %v1967
        %v1969 = vpop.f32.mrb[0].mxu0
        %1970 = vmatprep.mubr.f32.mxu0 0.0
        %1971 = vmatmul.mubr.f32.gmra.mrb[0].mxu0 %v1891
        %v1972 = vpop.f32.mrb[0].mxu0
        %v1973 = vadd.f32 %v1882, %v1972
        %v1974 = vpop.f32.mrb[0].mxu0
        %1975 = vmatprep.mubr.f32.mxu0 0.0
        %1976 = vmatmul.mubr.f32.gmra.mrb[0].mxu0 %v1894
        %v1977 = vpop.f32.mrb[0].mxu0
        %v1978 = vadd.f32 %v1882, %v1977
        %v1979 = vpop.f32.mrb[0].mxu0
        %1980 = vdwg.mxu0
        %s1981 = scalar_lea.vmem %s11, 1
        %v1982 = vld [vmem:[%s1981] sm:$0x1]
        %s1983 = scalar_lea.vmem %s12, 1
        %v1984 = vld [vmem:[%s1983] sm:$0x1]
        %v1985 = vsel %vm909, %v1963, 0.0
        %1986 = vadd.xlane.f32.xlu0 %v1985
        %v1987 = vpop.xlane.xlu0 %1986
        %v1988 = vsel %vm909, %v1968, 0.0
        %1989 = vadd.xlane.f32.xlu0 %v1988
        %v1990 = vpop.xlane.xlu0 %1989
        %v1991 = vsel %vm909, %v1973, 0.0
        %1992 = vadd.xlane.f32.xlu0 %v1991
        %v1993 = vpop.xlane.xlu0 %1992
        %v1994 = vsel %vm909, %v1978, 0.0
        %1995 = vadd.xlane.f32.xlu0 %v1994
        %v1996 = vpop.xlane.xlu0 %1995
        %v1997 = vmul.f32 %v1987, %v922
        %v1998 = vmul.f32 %v1990, %v922
        %v1999 = vmul.f32 %v1993, %v922
        %v2000 = vmul.f32 %v1996, %v922
        %v2001 = vsub.f32 %v1963, %v1997
        %v2002 = vsub.f32 %v1968, %v1998
        %v2003 = vsub.f32 %v1973, %v1999
        %v2004 = vsub.f32 %v1978, %v2000
        %v2005 = vmul.f32 %v2001, %v2001
        %v2006 = vmul.f32 %v2002, %v2002
        %v2007 = vmul.f32 %v2003, %v2003
        %v2008 = vmul.f32 %v2004, %v2004
        %v2009 = vsel %vm909, %v2005, 0.0
        %2010 = vadd.xlane.f32.xlu0 %v2009
        %v2011 = vpop.xlane.xlu0 %2010
        %v2012 = vsel %vm909, %v2006, 0.0
        %2013 = vadd.xlane.f32.xlu0 %v2012
        %v2014 = vpop.xlane.xlu0 %2013
        %v2015 = vsel %vm909, %v2007, 0.0
        %2016 = vadd.xlane.f32.xlu0 %v2015
        %v2017 = vpop.xlane.xlu0 %2016
        %v2018 = vsel %vm909, %v2008, 0.0
        %2019 = vadd.xlane.f32.xlu0 %v2018
        %v2020 = vpop.xlane.xlu0 %2019
        %v2021 = vmul.f32 %v2011, %v922
        %v2022 = vmul.f32 %v2014, %v922
        %v2023 = vmul.f32 %v2017, %v922
        %v2024 = vmul.f32 %v2020, %v922
        %v2025 = vadd.f32 %v2021, 1e-05
        %v2026 = vadd.f32 %v2022, 1e-05
        %v2027 = vadd.f32 %v2023, 1e-05
        %v2028 = vadd.f32 %v2024, 1e-05
        %v2029 = vrsqrt.pop %v2025
        %v2030 = vrsqrt.pop %v2026
        %v2031 = vrsqrt.pop %v2027
        %v2032 = vrsqrt.pop %v2028
        %v2033 = vmul.f32 %v2001, %v2029
        %v2034 = vmul.f32 %v2002, %v2030
        %v2035 = vmul.f32 %v2003, %v2031
        %v2036 = vmul.f32 %v2004, %v2032
        %v2038 = vlaneseq
        %v2039 = vshrl.u32 %v2038, 7
        %v2040 = vsub.s32 0, %v2039
        %v2041 = vrot.slane %v1982, %v2040
        %v2043 = vmul.f32 %v2033, %v2041
        %v2044 = vmul.f32 %v2034, %v2041
        %v2045 = vmul.f32 %v2035, %v2041
        %v2046 = vmul.f32 %v2036, %v2041
        %v2048 = vlaneseq
        %v2049 = vshrl.u32 %v2048, 7
        %v2050 = vsub.s32 0, %v2049
        %v2051 = vrot.slane %v1984, %v2050
        %v2053 = vadd.f32 %v2043, %v2051
        %v2054 = vadd.f32 %v2044, %v2051
        %v2055 = vadd.f32 %v2045, %v2051
        %v2056 = vadd.f32 %v2046, %v2051
        %v2057 = vadd.f32 %v2053, %v1527
        %v2058 = vadd.f32 %v2054, %v1528
        %v2059 = vadd.f32 %v2055, %v1529
        %v2060 = vadd.f32 %v2056, %v1530
        %vm2061 = vcmp.gt.f32.partialorder %v2057, 0.0
        %vm2062 = vcmp.gt.f32.partialorder %v2058, 0.0
        %vm2063 = vcmp.gt.f32.partialorder %v2059, 0.0
        %vm2064 = vcmp.gt.f32.partialorder %v2060, 0.0
        %v2065 = vmul.f32 %v2057, 0.2
        %v2066 = vmul.f32 %v2058, 0.2
        %v2067 = vmul.f32 %v2059, 0.2
        %v2068 = vmul.f32 %v2060, 0.2
        %v2069 = vsel %vm2061, %v2057, %v2065
        %v2070 = vsel %vm2062, %v2058, %v2066
        %v2071 = vsel %vm2063, %v2059, %v2067
        %v2072 = vsel %vm2064, %v2060, %v2068
        %2073 = vst.msk [vmem:[%s764] sm:$0xff] %vm909, %v2069
        %2074 = vst.msk [vmem:[%s764 + $0x8] sm:$0xff] %vm909, %v2070
        %2075 = vst.msk [vmem:[%s764 + $0x10] sm:$0xff] %vm909, %v2071
        %2076 = vst.msk [vmem:[%s764 + $0x18] sm:$0xff] %vm909, %v2072
        %s2077 = scalar_lea.vmem %s5, 192
        %v2078 = vld [vmem:[%s2077] sm:$0xff]
        %v2079 = vld [vmem:[%s2077 + $0x8] sm:$0xff]
        %v2080 = vld [vmem:[%s2077 + $0x10] sm:$0xff]
        %v2081 = vld [vmem:[%s2077 + $0x18] sm:$0xff]
        %v2082 = vld [vmem:[%s2077 + $0x20] sm:$0xff]
        %v2083 = vld [vmem:[%s2077 + $0x28] sm:$0xff]
        %v2084 = vld [vmem:[%s2077 + $0x30] sm:$0xff]
        %v2085 = vld [vmem:[%s2077 + $0x38] sm:$0xff]
        %v2086 = vld [vmem:[%s2077 + $0x40] sm:$0xff]
        %v2087 = vld [vmem:[%s2077 + $0x48] sm:$0xff]
        %v2088 = vld [vmem:[%s2077 + $0x50] sm:$0xff]
        %v2089 = vld [vmem:[%s2077 + $0x58] sm:$0xff]
        %s2090 = scalar_lea.vmem %s6, 2
        %v2091 = vld [vmem:[%s2090] sm:$0x1]
        %vm2096 = vcmask 1043456
        %v2097 = vrot.slane %v2069, 4
        %v2098 = vrot.slane %v2070, 4
        %v2099 = vsel %vm2096, %v2097, %v2098
        %v2100 = vrot.slane %v2071, 4
        %v2101 = vrot.slane %v2072, 4
        %v2102 = vsel %vm2096, %v2100, %v2101
        %v2107 = vsel %vm2096, 0.0, %v2097
        %v2108 = vsel %vm2096, 0.0, %v2100
        %v2111 = vsel %vm2096, %v2098, 0.0
        %v2112 = vsel %vm2096, %v2101, 0.0
        %2113 = vrot.lane.b32.xlu0 %v2069, 32
        %v2114 = vpop.permute.xlu0 %2113
        %2115 = vrot.lane.b32.xlu0 %v2070, 32
        %v2116 = vpop.permute.xlu0 %2115
        %2117 = vrot.lane.b32.xlu0 %v2071, 32
        %v2118 = vpop.permute.xlu0 %2117
        %2119 = vrot.lane.b32.xlu0 %v2072, 32
        %v2120 = vpop.permute.xlu0 %2119
        %2127 = vrot.lane.b32.xlu0 %v2099, 64
        %v2128 = vpop.permute.xlu0 %2127
        %2129 = vrot.lane.b32.xlu0 %v2111, 64
        %v2130 = vpop.permute.xlu0 %2129
        %2131 = vrot.lane.b32.xlu0 %v2102, 64
        %v2132 = vpop.permute.xlu0 %2131
        %2133 = vrot.lane.b32.xlu0 %v2112, 64
        %v2134 = vpop.permute.xlu0 %2133
        %v2139 = vsel %vm909, %v2107, %v2114
        %v2140 = vsel %vm909, %v2099, %v2116
        %v2141 = vsel %vm909, %v2108, %v2118
        %v2142 = vsel %vm909, %v2102, %v2120
        %v2143 = vsel %vm1070, %v2139, %v2128
        %v2144 = vsel %vm1070, %v2140, %v2130
        %v2145 = vsel %vm1070, %v2141, %v2132
        %v2146 = vsel %vm1070, %v2142, %v2134
        %v2148 = vlaneseq
        %v2149 = vshrl.u32 %v2148, 7
        %v2150 = vsub.s32 0, %v2149
        %v2151 = vrot.slane %v2091, %v2150
        %v2154 = vsel %vm1081, %v2143, 0
        %v2157 = vsel %vm1081, %v2144, 0
        %v2160 = vsel %vm1081, %v2145, 0
        %v2163 = vsel %vm1081, %v2146, 0
        %2165 = vmatprep.subr.mxu0 0.0
        %2166 = vmatpush1.msra.mxu0 %v2078
        %2167 = vmatprep.subr.mxu0 0.0
        %2168 = vmatpush1.msra.mxu0 %v2079
        %2169 = vmatprep.subr.mxu0 0.0
        %2170 = vmatpush1.msra.mxu0 %v2080
        %2171 = vmatprep.subr.mxu0 0.0
        %2172 = vmatpush1.msra.mxu0 %v2081
        %2173 = vmatprep.subr.mxu0 0.0
        %2174 = vmatpush1.msra.mxu0 %v2082
        %2175 = vmatprep.subr.mxu0 0.0
        %2176 = vmatpush1.msra.mxu0 %v2083
        %2177 = vmatprep.subr.mxu0 0.0
        %2178 = vmatpush1.msra.mxu0 %v2084
        %2179 = vmatprep.subr.mxu0 0.0
        %2180 = vmatpush1.msra.mxu0 %v2085
        %2181 = vmatprep.subr.mxu0 0.0
        %2182 = vmatpush1.msra.mxu0 %v2086
        %2183 = vmatprep.subr.mxu0 0.0
        %2184 = vmatpush1.msra.mxu0 %v2087
        %2185 = vmatprep.subr.mxu0 0.0
        %2186 = vmatpush1.msra.mxu0 %v2088
        %2187 = vmatprep.subr.mxu0 0.0
        %2188 = vmatpush1.msra.mxu0 %v2089
        %2189 = vmatprep.subr.mxu0 0.0
        %2190 = vmatpush1.msra.mxu0 0.0
        %2191 = vmatprep.subr.mxu0 0.0
        %2192 = vmatpush1.msra.mxu0 0.0
        %2193 = vmatprep.subr.mxu0 0.0
        %2194 = vmatpush1.msra.mxu0 0.0
        %2195 = vmatprep.subr.mxu0 0.0
        %2196 = vmatpush1.msra.mxu0 0.0
        %2197 = vmatprep.subr.mxu0 0.0
        %2198 = vmatpush1.msra.mxu0 0.0
        %2199 = vmatprep.subr.mxu0 0.0
        %2200 = vmatpush1.msra.mxu0 0.0
        %2201 = vmatprep.subr.mxu0 0.0
        %2202 = vmatpush1.msra.mxu0 0.0
        %2203 = vmatprep.subr.mxu0 0.0
        %2204 = vmatpush1.msra.mxu0 0.0
        %2205 = vmatprep.subr.mxu0 0.0
        %2206 = vmatpush1.msra.mxu0 0.0
        %2207 = vmatprep.subr.mxu0 0.0
        %2208 = vmatpush1.msra.mxu0 0.0
        %2209 = vmatprep.subr.mxu0 0.0
        %2210 = vmatpush1.msra.mxu0 0.0
        %2211 = vmatprep.subr.mxu0 0.0
        %2212 = vmatpush1.msra.mxu0 0.0
        %2213 = vmatprep.subr.mxu0 0.0
        %2214 = vmatpush1.msra.mxu0 0.0
        %2215 = vmatprep.subr.mxu0 0.0
        %2216 = vmatpush1.msra.mxu0 0.0
        %2217 = vmatprep.subr.mxu0 0.0
        %2218 = vmatpush1.msra.mxu0 0.0
        %2219 = vmatprep.subr.mxu0 0.0
        %2220 = vmatpush1.msra.mxu0 0.0
        %2221 = vmatprep.subr.mxu0 0.0
        %2222 = vmatpush1.msra.mxu0 0.0
        %2223 = vmatprep.subr.mxu0 0.0
        %2224 = vmatpush1.msra.mxu0 0.0
        %2225 = vmatprep.subr.mxu0 0.0
        %2226 = vmatpush1.msra.mxu0 0.0
        %2227 = vmatprep.subr.mxu0 0.0
        %2228 = vmatpush1.msra.mxu0 0.0
        %2229 = vmatprep.mubr.f32.mxu0 0.0
        %2230 = vmatmul.mubr.f32.gmra.mrb[0].mxu0 %v2154
        %v2231 = vpop.f32.mrb[0].mxu0
        %v2232 = vadd.f32 %v2151, %v2231
        %v2233 = vpop.f32.mrb[0].mxu0
        %2234 = vmatprep.mubr.f32.mxu0 0.0
        %2235 = vmatmul.mubr.f32.gmra.mrb[0].mxu0 %v2157
        %v2236 = vpop.f32.mrb[0].mxu0
        %v2237 = vadd.f32 %v2151, %v2236
        %v2238 = vpop.f32.mrb[0].mxu0
        %2239 = vmatprep.mubr.f32.mxu0 0.0
        %2240 = vmatmul.mubr.f32.gmra.mrb[0].mxu0 %v2160
        %v2241 = vpop.f32.mrb[0].mxu0
        %v2242 = vadd.f32 %v2151, %v2241
        %v2243 = vpop.f32.mrb[0].mxu0
        %2244 = vmatprep.mubr.f32.mxu0 0.0
        %2245 = vmatmul.mubr.f32.gmra.mrb[0].mxu0 %v2163
        %v2246 = vpop.f32.mrb[0].mxu0
        %v2247 = vadd.f32 %v2151, %v2246
        %v2248 = vpop.f32.mrb[0].mxu0
        %2249 = vdwg.mxu0
        %s2250 = scalar_lea.vmem %s7, 2
        %v2251 = vld [vmem:[%s2250] sm:$0x1]
        %s2252 = scalar_lea.vmem %s8, 2
        %v2253 = vld [vmem:[%s2252] sm:$0x1]
        %v2254 = vsel %vm909, %v2232, 0.0
        %2255 = vadd.xlane.f32.xlu0 %v2254
        %v2256 = vpop.xlane.xlu0 %2255
        %v2257 = vsel %vm909, %v2237, 0.0
        %2258 = vadd.xlane.f32.xlu0 %v2257
        %v2259 = vpop.xlane.xlu0 %2258
        %v2260 = vsel %vm909, %v2242, 0.0
        %2261 = vadd.xlane.f32.xlu0 %v2260
        %v2262 = vpop.xlane.xlu0 %2261
        %v2263 = vsel %vm909, %v2247, 0.0
        %2264 = vadd.xlane.f32.xlu0 %v2263
        %v2265 = vpop.xlane.xlu0 %2264
        %v2266 = vmul.f32 %v2256, %v922
        %v2267 = vmul.f32 %v2259, %v922
        %v2268 = vmul.f32 %v2262, %v922
        %v2269 = vmul.f32 %v2265, %v922
        %v2270 = vsub.f32 %v2232, %v2266
        %v2271 = vsub.f32 %v2237, %v2267
        %v2272 = vsub.f32 %v2242, %v2268
        %v2273 = vsub.f32 %v2247, %v2269
        %v2274 = vmul.f32 %v2270, %v2270
        %v2275 = vmul.f32 %v2271, %v2271
        %v2276 = vmul.f32 %v2272, %v2272
        %v2277 = vmul.f32 %v2273, %v2273
        %v2278 = vsel %vm909, %v2274, 0.0
        %2279 = vadd.xlane.f32.xlu0 %v2278
        %v2280 = vpop.xlane.xlu0 %2279
        %v2281 = vsel %vm909, %v2275, 0.0
        %2282 = vadd.xlane.f32.xlu0 %v2281
        %v2283 = vpop.xlane.xlu0 %2282
        %v2284 = vsel %vm909, %v2276, 0.0
        %2285 = vadd.xlane.f32.xlu0 %v2284
        %v2286 = vpop.xlane.xlu0 %2285
        %v2287 = vsel %vm909, %v2277, 0.0
        %2288 = vadd.xlane.f32.xlu0 %v2287
        %v2289 = vpop.xlane.xlu0 %2288
        %v2290 = vmul.f32 %v2280, %v922
        %v2291 = vmul.f32 %v2283, %v922
        %v2292 = vmul.f32 %v2286, %v922
        %v2293 = vmul.f32 %v2289, %v922
        %v2294 = vadd.f32 %v2290, 1e-05
        %v2295 = vadd.f32 %v2291, 1e-05
        %v2296 = vadd.f32 %v2292, 1e-05
        %v2297 = vadd.f32 %v2293, 1e-05
        %v2298 = vrsqrt.pop %v2294
        %v2299 = vrsqrt.pop %v2295
        %v2300 = vrsqrt.pop %v2296
        %v2301 = vrsqrt.pop %v2297
        %v2302 = vmul.f32 %v2270, %v2298
        %v2303 = vmul.f32 %v2271, %v2299
        %v2304 = vmul.f32 %v2272, %v2300
        %v2305 = vmul.f32 %v2273, %v2301
        %v2307 = vlaneseq
        %v2308 = vshrl.u32 %v2307, 7
        %v2309 = vsub.s32 0, %v2308
        %v2310 = vrot.slane %v2251, %v2309
        %v2312 = vmul.f32 %v2302, %v2310
        %v2313 = vmul.f32 %v2303, %v2310
        %v2314 = vmul.f32 %v2304, %v2310
        %v2315 = vmul.f32 %v2305, %v2310
        %v2317 = vlaneseq
        %v2318 = vshrl.u32 %v2317, 7
        %v2319 = vsub.s32 0, %v2318
        %v2320 = vrot.slane %v2253, %v2319
        %v2322 = vadd.f32 %v2312, %v2320
        %v2323 = vadd.f32 %v2313, %v2320
        %v2324 = vadd.f32 %v2314, %v2320
        %v2325 = vadd.f32 %v2315, %v2320
        %vm2326 = vcmp.gt.f32.partialorder %v2322, 0.0
        %vm2327 = vcmp.gt.f32.partialorder %v2323, 0.0
        %vm2328 = vcmp.gt.f32.partialorder %v2324, 0.0
        %vm2329 = vcmp.gt.f32.partialorder %v2325, 0.0
        %v2330 = vmul.f32 %v2322, 0.2
        %v2331 = vmul.f32 %v2323, 0.2
        %v2332 = vmul.f32 %v2324, 0.2
        %v2333 = vmul.f32 %v2325, 0.2
        %v2334 = vsel %vm2326, %v2322, %v2330
        %v2335 = vsel %vm2327, %v2323, %v2331
        %v2336 = vsel %vm2328, %v2324, %v2332
        %v2337 = vsel %vm2329, %v2325, %v2333
        %s2338 = scalar_lea.vmem %s9, 192
        %v2339 = vld [vmem:[%s2338] sm:$0xff]
        %v2340 = vld [vmem:[%s2338 + $0x8] sm:$0xff]
        %v2341 = vld [vmem:[%s2338 + $0x10] sm:$0xff]
        %v2342 = vld [vmem:[%s2338 + $0x18] sm:$0xff]
        %v2343 = vld [vmem:[%s2338 + $0x20] sm:$0xff]
        %v2344 = vld [vmem:[%s2338 + $0x28] sm:$0xff]
        %v2345 = vld [vmem:[%s2338 + $0x30] sm:$0xff]
        %v2346 = vld [vmem:[%s2338 + $0x38] sm:$0xff]
        %v2347 = vld [vmem:[%s2338 + $0x40] sm:$0xff]
        %v2348 = vld [vmem:[%s2338 + $0x48] sm:$0xff]
        %v2349 = vld [vmem:[%s2338 + $0x50] sm:$0xff]
        %v2350 = vld [vmem:[%s2338 + $0x58] sm:$0xff]
        %s2351 = scalar_lea.vmem %s10, 2
        %v2352 = vld [vmem:[%s2351] sm:$0x1]
        %v2357 = vrot.slane %v2334, 4
        %v2358 = vrot.slane %v2335, 4
        %v2359 = vsel %vm2096, %v2357, %v2358
        %v2360 = vrot.slane %v2336, 4
        %v2361 = vrot.slane %v2337, 4
        %v2362 = vsel %vm2096, %v2360, %v2361
        %v2367 = vsel %vm2096, 0.0, %v2357
        %v2368 = vsel %vm2096, 0.0, %v2360
        %v2371 = vsel %vm2096, %v2358, 0.0
        %v2372 = vsel %vm2096, %v2361, 0.0
        %2373 = vrot.lane.b32.xlu0 %v2334, 32
        %v2374 = vpop.permute.xlu0 %2373
        %2375 = vrot.lane.b32.xlu0 %v2335, 32
        %v2376 = vpop.permute.xlu0 %2375
        %2377 = vrot.lane.b32.xlu0 %v2336, 32
        %v2378 = vpop.permute.xlu0 %2377
        %2379 = vrot.lane.b32.xlu0 %v2337, 32
        %v2380 = vpop.permute.xlu0 %2379
        %2387 = vrot.lane.b32.xlu0 %v2359, 64
        %v2388 = vpop.permute.xlu0 %2387
        %2389 = vrot.lane.b32.xlu0 %v2371, 64
        %v2390 = vpop.permute.xlu0 %2389
        %2391 = vrot.lane.b32.xlu0 %v2362, 64
        %v2392 = vpop.permute.xlu0 %2391
        %2393 = vrot.lane.b32.xlu0 %v2372, 64
        %v2394 = vpop.permute.xlu0 %2393
        %v2399 = vsel %vm909, %v2367, %v2374
        %v2400 = vsel %vm909, %v2359, %v2376
        %v2401 = vsel %vm909, %v2368, %v2378
        %v2402 = vsel %vm909, %v2362, %v2380
        %v2403 = vsel %vm1070, %v2399, %v2388
        %v2404 = vsel %vm1070, %v2400, %v2390
        %v2405 = vsel %vm1070, %v2401, %v2392
        %v2406 = vsel %vm1070, %v2402, %v2394
        %v2408 = vlaneseq
        %v2409 = vshrl.u32 %v2408, 7
        %v2410 = vsub.s32 0, %v2409
        %v2411 = vrot.slane %v2352, %v2410
        %v2414 = vsel %vm1081, %v2403, 0
        %v2417 = vsel %vm1081, %v2404, 0
        %v2420 = vsel %vm1081, %v2405, 0
        %v2423 = vsel %vm1081, %v2406, 0
        %2425 = vmatprep.subr.mxu0 0.0
        %2426 = vmatpush1.msra.mxu0 %v2339
        %2427 = vmatprep.subr.mxu0 0.0
        %2428 = vmatpush1.msra.mxu0 %v2340
        %2429 = vmatprep.subr.mxu0 0.0
        %2430 = vmatpush1.msra.mxu0 %v2341
        %2431 = vmatprep.subr.mxu0 0.0
        %2432 = vmatpush1.msra.mxu0 %v2342
        %2433 = vmatprep.subr.mxu0 0.0
        %2434 = vmatpush1.msra.mxu0 %v2343
        %2435 = vmatprep.subr.mxu0 0.0
        %2436 = vmatpush1.msra.mxu0 %v2344
        %2437 = vmatprep.subr.mxu0 0.0
        %2438 = vmatpush1.msra.mxu0 %v2345
        %2439 = vmatprep.subr.mxu0 0.0
        %2440 = vmatpush1.msra.mxu0 %v2346
        %2441 = vmatprep.subr.mxu0 0.0
        %2442 = vmatpush1.msra.mxu0 %v2347
        %2443 = vmatprep.subr.mxu0 0.0
        %2444 = vmatpush1.msra.mxu0 %v2348
        %2445 = vmatprep.subr.mxu0 0.0
        %2446 = vmatpush1.msra.mxu0 %v2349
        %2447 = vmatprep.subr.mxu0 0.0
        %2448 = vmatpush1.msra.mxu0 %v2350
        %2449 = vmatprep.subr.mxu0 0.0
        %2450 = vmatpush1.msra.mxu0 0.0
        %2451 = vmatprep.subr.mxu0 0.0
        %2452 = vmatpush1.msra.mxu0 0.0
        %2453 = vmatprep.subr.mxu0 0.0
        %2454 = vmatpush1.msra.mxu0 0.0
        %2455 = vmatprep.subr.mxu0 0.0
        %2456 = vmatpush1.msra.mxu0 0.0
        %2457 = vmatprep.subr.mxu0 0.0
        %2458 = vmatpush1.msra.mxu0 0.0
        %2459 = vmatprep.subr.mxu0 0.0
        %2460 = vmatpush1.msra.mxu0 0.0
        %2461 = vmatprep.subr.mxu0 0.0
        %2462 = vmatpush1.msra.mxu0 0.0
        %2463 = vmatprep.subr.mxu0 0.0
        %2464 = vmatpush1.msra.mxu0 0.0
        %2465 = vmatprep.subr.mxu0 0.0
        %2466 = vmatpush1.msra.mxu0 0.0
        %2467 = vmatprep.subr.mxu0 0.0
        %2468 = vmatpush1.msra.mxu0 0.0
        %2469 = vmatprep.subr.mxu0 0.0
        %2470 = vmatpush1.msra.mxu0 0.0
        %2471 = vmatprep.subr.mxu0 0.0
        %2472 = vmatpush1.msra.mxu0 0.0
        %2473 = vmatprep.subr.mxu0 0.0
        %2474 = vmatpush1.msra.mxu0 0.0
        %2475 = vmatprep.subr.mxu0 0.0
        %2476 = vmatpush1.msra.mxu0 0.0
        %2477 = vmatprep.subr.mxu0 0.0
        %2478 = vmatpush1.msra.mxu0 0.0
        %2479 = vmatprep.subr.mxu0 0.0
        %2480 = vmatpush1.msra.mxu0 0.0
        %2481 = vmatprep.subr.mxu0 0.0
        %2482 = vmatpush1.msra.mxu0 0.0
        %2483 = vmatprep.subr.mxu0 0.0
        %2484 = vmatpush1.msra.mxu0 0.0
        %2485 = vmatprep.subr.mxu0 0.0
        %2486 = vmatpush1.msra.mxu0 0.0
        %2487 = vmatprep.subr.mxu0 0.0
        %2488 = vmatpush1.msra.mxu0 0.0
        %2489 = vmatprep.mubr.f32.mxu0 0.0
        %2490 = vmatmul.mubr.f32.gmra.mrb[0].mxu0 %v2414
        %v2491 = vpop.f32.mrb[0].mxu0
        %v2492 = vadd.f32 %v2411, %v2491
        %v2493 = vpop.f32.mrb[0].mxu0
        %2494 = vmatprep.mubr.f32.mxu0 0.0
        %2495 = vmatmul.mubr.f32.gmra.mrb[0].mxu0 %v2417
        %v2496 = vpop.f32.mrb[0].mxu0
        %v2497 = vadd.f32 %v2411, %v2496
        %v2498 = vpop.f32.mrb[0].mxu0
        %2499 = vmatprep.mubr.f32.mxu0 0.0
        %2500 = vmatmul.mubr.f32.gmra.mrb[0].mxu0 %v2420
        %v2501 = vpop.f32.mrb[0].mxu0
        %v2502 = vadd.f32 %v2411, %v2501
        %v2503 = vpop.f32.mrb[0].mxu0
        %2504 = vmatprep.mubr.f32.mxu0 0.0
        %2505 = vmatmul.mubr.f32.gmra.mrb[0].mxu0 %v2423
        %v2506 = vpop.f32.mrb[0].mxu0
        %v2507 = vadd.f32 %v2411, %v2506
        %v2508 = vpop.f32.mrb[0].mxu0
        %2509 = vdwg.mxu0
        %s2510 = scalar_lea.vmem %s11, 2
        %v2511 = vld [vmem:[%s2510] sm:$0x1]
        %s2512 = scalar_lea.vmem %s12, 2
        %v2513 = vld [vmem:[%s2512] sm:$0x1]
        %v2514 = vsel %vm909, %v2492, 0.0
        %2515 = vadd.xlane.f32.xlu0 %v2514
        %v2516 = vpop.xlane.xlu0 %2515
        %v2517 = vsel %vm909, %v2497, 0.0
        %2518 = vadd.xlane.f32.xlu0 %v2517
        %v2519 = vpop.xlane.xlu0 %2518
        %v2520 = vsel %vm909, %v2502, 0.0
        %2521 = vadd.xlane.f32.xlu0 %v2520
        %v2522 = vpop.xlane.xlu0 %2521
        %v2523 = vsel %vm909, %v2507, 0.0
        %2524 = vadd.xlane.f32.xlu0 %v2523
        %v2525 = vpop.xlane.xlu0 %2524
        %v2526 = vmul.f32 %v2516, %v922
        %v2527 = vmul.f32 %v2519, %v922
        %v2528 = vmul.f32 %v2522, %v922
        %v2529 = vmul.f32 %v2525, %v922
        %v2530 = vsub.f32 %v2492, %v2526
        %v2531 = vsub.f32 %v2497, %v2527
        %v2532 = vsub.f32 %v2502, %v2528
        %v2533 = vsub.f32 %v2507, %v2529
        %v2534 = vmul.f32 %v2530, %v2530
        %v2535 = vmul.f32 %v2531, %v2531
        %v2536 = vmul.f32 %v2532, %v2532
        %v2537 = vmul.f32 %v2533, %v2533
        %v2538 = vsel %vm909, %v2534, 0.0
        %2539 = vadd.xlane.f32.xlu0 %v2538
        %v2540 = vpop.xlane.xlu0 %2539
        %v2541 = vsel %vm909, %v2535, 0.0
        %2542 = vadd.xlane.f32.xlu0 %v2541
        %v2543 = vpop.xlane.xlu0 %2542
        %v2544 = vsel %vm909, %v2536, 0.0
        %2545 = vadd.xlane.f32.xlu0 %v2544
        %v2546 = vpop.xlane.xlu0 %2545
        %v2547 = vsel %vm909, %v2537, 0.0
        %2548 = vadd.xlane.f32.xlu0 %v2547
        %v2549 = vpop.xlane.xlu0 %2548
        %v2550 = vmul.f32 %v2540, %v922
        %v2551 = vmul.f32 %v2543, %v922
        %v2552 = vmul.f32 %v2546, %v922
        %v2553 = vmul.f32 %v2549, %v922
        %v2554 = vadd.f32 %v2550, 1e-05
        %v2555 = vadd.f32 %v2551, 1e-05
        %v2556 = vadd.f32 %v2552, 1e-05
        %v2557 = vadd.f32 %v2553, 1e-05
        %v2558 = vrsqrt.pop %v2554
        %v2559 = vrsqrt.pop %v2555
        %v2560 = vrsqrt.pop %v2556
        %v2561 = vrsqrt.pop %v2557
        %v2562 = vmul.f32 %v2530, %v2558
        %v2563 = vmul.f32 %v2531, %v2559
        %v2564 = vmul.f32 %v2532, %v2560
        %v2565 = vmul.f32 %v2533, %v2561
        %v2567 = vlaneseq
        %v2568 = vshrl.u32 %v2567, 7
        %v2569 = vsub.s32 0, %v2568
        %v2570 = vrot.slane %v2511, %v2569
        %v2572 = vmul.f32 %v2562, %v2570
        %v2573 = vmul.f32 %v2563, %v2570
        %v2574 = vmul.f32 %v2564, %v2570
        %v2575 = vmul.f32 %v2565, %v2570
        %v2577 = vlaneseq
        %v2578 = vshrl.u32 %v2577, 7
        %v2579 = vsub.s32 0, %v2578
        %v2580 = vrot.slane %v2513, %v2579
        %v2582 = vadd.f32 %v2572, %v2580
        %v2583 = vadd.f32 %v2573, %v2580
        %v2584 = vadd.f32 %v2574, %v2580
        %v2585 = vadd.f32 %v2575, %v2580
        %v2586 = vadd.f32 %v2582, %v2069
        %v2587 = vadd.f32 %v2583, %v2070
        %v2588 = vadd.f32 %v2584, %v2071
        %v2589 = vadd.f32 %v2585, %v2072
        %vm2590 = vcmp.gt.f32.partialorder %v2586, 0.0
        %vm2591 = vcmp.gt.f32.partialorder %v2587, 0.0
        %vm2592 = vcmp.gt.f32.partialorder %v2588, 0.0
        %vm2593 = vcmp.gt.f32.partialorder %v2589, 0.0
        %v2594 = vmul.f32 %v2586, 0.2
        %v2595 = vmul.f32 %v2587, 0.2
        %v2596 = vmul.f32 %v2588, 0.2
        %v2597 = vmul.f32 %v2589, 0.2
        %v2598 = vsel %vm2590, %v2586, %v2594
        %v2599 = vsel %vm2591, %v2587, %v2595
        %v2600 = vsel %vm2592, %v2588, %v2596
        %v2601 = vsel %vm2593, %v2589, %v2597
        %2602 = vst.msk [vmem:[%s771] sm:$0xff] %vm909, %v2598
        %2603 = vst.msk [vmem:[%s771 + $0x8] sm:$0xff] %vm909, %v2599
        %2604 = vst.msk [vmem:[%s771 + $0x10] sm:$0xff] %vm909, %v2600
        %2605 = vst.msk [vmem:[%s771 + $0x18] sm:$0xff] %vm909, %v2601
        %s2606 = scalar_lea.vmem %s5, 288
        %v2607 = vld [vmem:[%s2606] sm:$0xff]
        %v2608 = vld [vmem:[%s2606 + $0x8] sm:$0xff]
        %v2609 = vld [vmem:[%s2606 + $0x10] sm:$0xff]
        %v2610 = vld [vmem:[%s2606 + $0x18] sm:$0xff]
        %v2611 = vld [vmem:[%s2606 + $0x20] sm:$0xff]
        %v2612 = vld [vmem:[%s2606 + $0x28] sm:$0xff]
        %v2613 = vld [vmem:[%s2606 + $0x30] sm:$0xff]
        %v2614 = vld [vmem:[%s2606 + $0x38] sm:$0xff]
        %v2615 = vld [vmem:[%s2606 + $0x40] sm:$0xff]
        %v2616 = vld [vmem:[%s2606 + $0x48] sm:$0xff]
        %v2617 = vld [vmem:[%s2606 + $0x50] sm:$0xff]
        %v2618 = vld [vmem:[%s2606 + $0x58] sm:$0xff]
        %s2619 = scalar_lea.vmem %s6, 3
        %v2620 = vld [vmem:[%s2619] sm:$0x1]
        %2625 = vrot.lane.b32.xlu0 %v2598, 32
        %v2626 = vpop.permute.xlu0 %2625
        %2627 = vrot.lane.b32.xlu0 %v2599, 32
        %v2628 = vpop.permute.xlu0 %2627
        %2629 = vrot.lane.b32.xlu0 %v2600, 32
        %v2630 = vpop.permute.xlu0 %2629
        %2631 = vrot.lane.b32.xlu0 %v2601, 32
        %v2632 = vpop.permute.xlu0 %2631
        %2638 = vrot.lane.b32.xlu0 %v2599, 64
        %v2639 = vpop.permute.xlu0 %2638
        %2640 = vrot.lane.b32.xlu0 0.0, 64
        %v2641 = vpop.permute.xlu0 %2640
        %2642 = vrot.lane.b32.xlu0 %v2601, 64
        %v2643 = vpop.permute.xlu0 %2642
        %v2647 = vsel %vm909, 0.0, %v2626
        %v2648 = vsel %vm909, %v2598, %v2628
        %v2649 = vsel %vm909, 0.0, %v2630
        %v2650 = vsel %vm909, %v2600, %v2632
        %v2651 = vsel %vm1070, %v2647, %v2639
        %v2652 = vsel %vm1070, %v2648, %v2641
        %v2653 = vsel %vm1070, %v2649, %v2643
        %v2654 = vsel %vm1070, %v2650, %v2641
        %v2656 = vlaneseq
        %v2657 = vshrl.u32 %v2656, 7
        %v2658 = vsub.s32 0, %v2657
        %v2659 = vrot.slane %v2620, %v2658
        %v2662 = vsel %vm1081, %v2651, 0
        %v2665 = vsel %vm1081, %v2652, 0
        %v2668 = vsel %vm1081, %v2653, 0
        %v2671 = vsel %vm1081, %v2654, 0
        %2673 = vmatprep.subr.mxu0 0.0
        %2674 = vmatpush1.msra.mxu0 %v2607
        %2675 = vmatprep.subr.mxu0 0.0
        %2676 = vmatpush1.msra.mxu0 %v2608
        %2677 = vmatprep.subr.mxu0 0.0
        %2678 = vmatpush1.msra.mxu0 %v2609
        %2679 = vmatprep.subr.mxu0 0.0
        %2680 = vmatpush1.msra.mxu0 %v2610
        %2681 = vmatprep.subr.mxu0 0.0
        %2682 = vmatpush1.msra.mxu0 %v2611
        %2683 = vmatprep.subr.mxu0 0.0
        %2684 = vmatpush1.msra.mxu0 %v2612
        %2685 = vmatprep.subr.mxu0 0.0
        %2686 = vmatpush1.msra.mxu0 %v2613
        %2687 = vmatprep.subr.mxu0 0.0
        %2688 = vmatpush1.msra.mxu0 %v2614
        %2689 = vmatprep.subr.mxu0 0.0
        %2690 = vmatpush1.msra.mxu0 %v2615
        %2691 = vmatprep.subr.mxu0 0.0
        %2692 = vmatpush1.msra.mxu0 %v2616
        %2693 = vmatprep.subr.mxu0 0.0
        %2694 = vmatpush1.msra.mxu0 %v2617
        %2695 = vmatprep.subr.mxu0 0.0
        %2696 = vmatpush1.msra.mxu0 %v2618
        %2697 = vmatprep.subr.mxu0 0.0
        %2698 = vmatpush1.msra.mxu0 0.0
        %2699 = vmatprep.subr.mxu0 0.0
        %2700 = vmatpush1.msra.mxu0 0.0
        %2701 = vmatprep.subr.mxu0 0.0
        %2702 = vmatpush1.msra.mxu0 0.0
        %2703 = vmatprep.subr.mxu0 0.0
        %2704 = vmatpush1.msra.mxu0 0.0
        %2705 = vmatprep.subr.mxu0 0.0
        %2706 = vmatpush1.msra.mxu0 0.0
        %2707 = vmatprep.subr.mxu0 0.0
        %2708 = vmatpush1.msra.mxu0 0.0
        %2709 = vmatprep.subr.mxu0 0.0
        %2710 = vmatpush1.msra.mxu0 0.0
        %2711 = vmatprep.subr.mxu0 0.0
        %2712 = vmatpush1.msra.mxu0 0.0
        %2713 = vmatprep.subr.mxu0 0.0
        %2714 = vmatpush1.msra.mxu0 0.0
        %2715 = vmatprep.subr.mxu0 0.0
        %2716 = vmatpush1.msra.mxu0 0.0
        %2717 = vmatprep.subr.mxu0 0.0
        %2718 = vmatpush1.msra.mxu0 0.0
        %2719 = vmatprep.subr.mxu0 0.0
        %2720 = vmatpush1.msra.mxu0 0.0
        %2721 = vmatprep.subr.mxu0 0.0
        %2722 = vmatpush1.msra.mxu0 0.0
        %2723 = vmatprep.subr.mxu0 0.0
        %2724 = vmatpush1.msra.mxu0 0.0
        %2725 = vmatprep.subr.mxu0 0.0
        %2726 = vmatpush1.msra.mxu0 0.0
        %2727 = vmatprep.subr.mxu0 0.0
        %2728 = vmatpush1.msra.mxu0 0.0
        %2729 = vmatprep.subr.mxu0 0.0
        %2730 = vmatpush1.msra.mxu0 0.0
        %2731 = vmatprep.subr.mxu0 0.0
        %2732 = vmatpush1.msra.mxu0 0.0
        %2733 = vmatprep.subr.mxu0 0.0
        %2734 = vmatpush1.msra.mxu0 0.0
        %2735 = vmatprep.subr.mxu0 0.0
        %2736 = vmatpush1.msra.mxu0 0.0
        %2737 = vmatprep.mubr.f32.mxu0 0.0
        %2738 = vmatmul.mubr.f32.gmra.mrb[0].mxu0 %v2662
        %v2739 = vpop.f32.mrb[0].mxu0
        %v2740 = vadd.f32 %v2659, %v2739
        %v2741 = vpop.f32.mrb[0].mxu0
        %2742 = vmatprep.mubr.f32.mxu0 0.0
        %2743 = vmatmul.mubr.f32.gmra.mrb[0].mxu0 %v2665
        %v2744 = vpop.f32.mrb[0].mxu0
        %v2745 = vadd.f32 %v2659, %v2744
        %v2746 = vpop.f32.mrb[0].mxu0
        %2747 = vmatprep.mubr.f32.mxu0 0.0
        %2748 = vmatmul.mubr.f32.gmra.mrb[0].mxu0 %v2668
        %v2749 = vpop.f32.mrb[0].mxu0
        %v2750 = vadd.f32 %v2659, %v2749
        %v2751 = vpop.f32.mrb[0].mxu0
        %2752 = vmatprep.mubr.f32.mxu0 0.0
        %2753 = vmatmul.mubr.f32.gmra.mrb[0].mxu0 %v2671
        %v2754 = vpop.f32.mrb[0].mxu0
        %v2755 = vadd.f32 %v2659, %v2754
        %v2756 = vpop.f32.mrb[0].mxu0
        %2757 = vdwg.mxu0
        %s2758 = scalar_lea.vmem %s7, 3
        %v2759 = vld [vmem:[%s2758] sm:$0x1]
        %s2760 = scalar_lea.vmem %s8, 3
        %v2761 = vld [vmem:[%s2760] sm:$0x1]
        %v2762 = vsel %vm909, %v2740, 0.0
        %2763 = vadd.xlane.f32.xlu0 %v2762
        %v2764 = vpop.xlane.xlu0 %2763
        %v2765 = vsel %vm909, %v2745, 0.0
        %2766 = vadd.xlane.f32.xlu0 %v2765
        %v2767 = vpop.xlane.xlu0 %2766
        %v2768 = vsel %vm909, %v2750, 0.0
        %2769 = vadd.xlane.f32.xlu0 %v2768
        %v2770 = vpop.xlane.xlu0 %2769
        %v2771 = vsel %vm909, %v2755, 0.0
        %2772 = vadd.xlane.f32.xlu0 %v2771
        %v2773 = vpop.xlane.xlu0 %2772
        %v2774 = vmul.f32 %v2764, %v922
        %v2775 = vmul.f32 %v2767, %v922
        %v2776 = vmul.f32 %v2770, %v922
        %v2777 = vmul.f32 %v2773, %v922
        %v2778 = vsub.f32 %v2740, %v2774
        %v2779 = vsub.f32 %v2745, %v2775
        %v2780 = vsub.f32 %v2750, %v2776
        %v2781 = vsub.f32 %v2755, %v2777
        %v2782 = vmul.f32 %v2778, %v2778
        %v2783 = vmul.f32 %v2779, %v2779
        %v2784 = vmul.f32 %v2780, %v2780
        %v2785 = vmul.f32 %v2781, %v2781
        %v2786 = vsel %vm909, %v2782, 0.0
        %2787 = vadd.xlane.f32.xlu0 %v2786
        %v2788 = vpop.xlane.xlu0 %2787
        %v2789 = vsel %vm909, %v2783, 0.0
        %2790 = vadd.xlane.f32.xlu0 %v2789
        %v2791 = vpop.xlane.xlu0 %2790
        %v2792 = vsel %vm909, %v2784, 0.0
        %2793 = vadd.xlane.f32.xlu0 %v2792
        %v2794 = vpop.xlane.xlu0 %2793
        %v2795 = vsel %vm909, %v2785, 0.0
        %2796 = vadd.xlane.f32.xlu0 %v2795
        %v2797 = vpop.xlane.xlu0 %2796
        %v2798 = vmul.f32 %v2788, %v922
        %v2799 = vmul.f32 %v2791, %v922
        %v2800 = vmul.f32 %v2794, %v922
        %v2801 = vmul.f32 %v2797, %v922
        %v2802 = vadd.f32 %v2798, 1e-05
        %v2803 = vadd.f32 %v2799, 1e-05
        %v2804 = vadd.f32 %v2800, 1e-05
        %v2805 = vadd.f32 %v2801, 1e-05
        %v2806 = vrsqrt.pop %v2802
        %v2807 = vrsqrt.pop %v2803
        %v2808 = vrsqrt.pop %v2804
        %v2809 = vrsqrt.pop %v2805
        %v2810 = vmul.f32 %v2778, %v2806
        %v2811 = vmul.f32 %v2779, %v2807
        %v2812 = vmul.f32 %v2780, %v2808
        %v2813 = vmul.f32 %v2781, %v2809
        %v2815 = vlaneseq
        %v2816 = vshrl.u32 %v2815, 7
        %v2817 = vsub.s32 0, %v2816
        %v2818 = vrot.slane %v2759, %v2817
        %v2820 = vmul.f32 %v2810, %v2818
        %v2821 = vmul.f32 %v2811, %v2818
        %v2822 = vmul.f32 %v2812, %v2818
        %v2823 = vmul.f32 %v2813, %v2818
        %v2825 = vlaneseq
        %v2826 = vshrl.u32 %v2825, 7
        %v2827 = vsub.s32 0, %v2826
        %v2828 = vrot.slane %v2761, %v2827
        %v2830 = vadd.f32 %v2820, %v2828
        %v2831 = vadd.f32 %v2821, %v2828
        %v2832 = vadd.f32 %v2822, %v2828
        %v2833 = vadd.f32 %v2823, %v2828
        %vm2834 = vcmp.gt.f32.partialorder %v2830, 0.0
        %vm2835 = vcmp.gt.f32.partialorder %v2831, 0.0
        %vm2836 = vcmp.gt.f32.partialorder %v2832, 0.0
        %vm2837 = vcmp.gt.f32.partialorder %v2833, 0.0
        %v2838 = vmul.f32 %v2830, 0.2
        %v2839 = vmul.f32 %v2831, 0.2
        %v2840 = vmul.f32 %v2832, 0.2
        %v2841 = vmul.f32 %v2833, 0.2
        %v2842 = vsel %vm2834, %v2830, %v2838
        %v2843 = vsel %vm2835, %v2831, %v2839
        %v2844 = vsel %vm2836, %v2832, %v2840
        %v2845 = vsel %vm2837, %v2833, %v2841
        %s2846 = scalar_lea.vmem %s9, 288
        %v2847 = vld [vmem:[%s2846] sm:$0xff]
        %v2848 = vld [vmem:[%s2846 + $0x8] sm:$0xff]
        %v2849 = vld [vmem:[%s2846 + $0x10] sm:$0xff]
        %v2850 = vld [vmem:[%s2846 + $0x18] sm:$0xff]
        %v2851 = vld [vmem:[%s2846 + $0x20] sm:$0xff]
        %v2852 = vld [vmem:[%s2846 + $0x28] sm:$0xff]
        %v2853 = vld [vmem:[%s2846 + $0x30] sm:$0xff]
        %v2854 = vld [vmem:[%s2846 + $0x38] sm:$0xff]
        %v2855 = vld [vmem:[%s2846 + $0x40] sm:$0xff]
        %v2856 = vld [vmem:[%s2846 + $0x48] sm:$0xff]
        %v2857 = vld [vmem:[%s2846 + $0x50] sm:$0xff]
        %v2858 = vld [vmem:[%s2846 + $0x58] sm:$0xff]
        %s2859 = scalar_lea.vmem %s10, 3
        %v2860 = vld [vmem:[%s2859] sm:$0x1]
        %2865 = vrot.lane.b32.xlu0 %v2842, 32
        %v2866 = vpop.permute.xlu0 %2865
        %2867 = vrot.lane.b32.xlu0 %v2843, 32
        %v2868 = vpop.permute.xlu0 %2867
        %2869 = vrot.lane.b32.xlu0 %v2844, 32
        %v2870 = vpop.permute.xlu0 %2869
        %2871 = vrot.lane.b32.xlu0 %v2845, 32
        %v2872 = vpop.permute.xlu0 %2871
        %2877 = vrot.lane.b32.xlu0 %v2843, 64
        %v2878 = vpop.permute.xlu0 %2877
        %2879 = vrot.lane.b32.xlu0 %v2845, 64
        %v2880 = vpop.permute.xlu0 %2879
        %v2883 = vsel %vm909, 0.0, %v2866
        %v2884 = vsel %vm909, %v2842, %v2868
        %v2885 = vsel %vm909, 0.0, %v2870
        %v2886 = vsel %vm909, %v2844, %v2872
        %v2887 = vsel %vm1070, %v2883, %v2878
        %v2888 = vsel %vm1070, %v2884, %v2641
        %v2889 = vsel %vm1070, %v2885, %v2880
        %v2890 = vsel %vm1070, %v2886, %v2641
        %v2892 = vlaneseq
        %v2893 = vshrl.u32 %v2892, 7
        %v2894 = vsub.s32 0, %v2893
        %v2895 = vrot.slane %v2860, %v2894
        %v2898 = vsel %vm1081, %v2887, 0
        %v2901 = vsel %vm1081, %v2888, 0
        %v2904 = vsel %vm1081, %v2889, 0
        %v2907 = vsel %vm1081, %v2890, 0
        %2909 = vmatprep.subr.mxu0 0.0
        %2910 = vmatpush1.msra.mxu0 %v2847
        %2911 = vmatprep.subr.mxu0 0.0
        %2912 = vmatpush1.msra.mxu0 %v2848
        %2913 = vmatprep.subr.mxu0 0.0
        %2914 = vmatpush1.msra.mxu0 %v2849
        %2915 = vmatprep.subr.mxu0 0.0
        %2916 = vmatpush1.msra.mxu0 %v2850
        %2917 = vmatprep.subr.mxu0 0.0
        %2918 = vmatpush1.msra.mxu0 %v2851
        %2919 = vmatprep.subr.mxu0 0.0
        %2920 = vmatpush1.msra.mxu0 %v2852
        %2921 = vmatprep.subr.mxu0 0.0
        %2922 = vmatpush1.msra.mxu0 %v2853
        %2923 = vmatprep.subr.mxu0 0.0
        %2924 = vmatpush1.msra.mxu0 %v2854
        %2925 = vmatprep.subr.mxu0 0.0
        %2926 = vmatpush1.msra.mxu0 %v2855
        %2927 = vmatprep.subr.mxu0 0.0
        %2928 = vmatpush1.msra.mxu0 %v2856
        %2929 = vmatprep.subr.mxu0 0.0
        %2930 = vmatpush1.msra.mxu0 %v2857
        %2931 = vmatprep.subr.mxu0 0.0
        %2932 = vmatpush1.msra.mxu0 %v2858
        %2933 = vmatprep.subr.mxu0 0.0
        %2934 = vmatpush1.msra.mxu0 0.0
        %2935 = vmatprep.subr.mxu0 0.0
        %2936 = vmatpush1.msra.mxu0 0.0
        %2937 = vmatprep.subr.mxu0 0.0
        %2938 = vmatpush1.msra.mxu0 0.0
        %2939 = vmatprep.subr.mxu0 0.0
        %2940 = vmatpush1.msra.mxu0 0.0
        %2941 = vmatprep.subr.mxu0 0.0
        %2942 = vmatpush1.msra.mxu0 0.0
        %2943 = vmatprep.subr.mxu0 0.0
        %2944 = vmatpush1.msra.mxu0 0.0
        %2945 = vmatprep.subr.mxu0 0.0
        %2946 = vmatpush1.msra.mxu0 0.0
        %2947 = vmatprep.subr.mxu0 0.0
        %2948 = vmatpush1.msra.mxu0 0.0
        %2949 = vmatprep.subr.mxu0 0.0
        %2950 = vmatpush1.msra.mxu0 0.0
        %2951 = vmatprep.subr.mxu0 0.0
        %2952 = vmatpush1.msra.mxu0 0.0
        %2953 = vmatprep.subr.mxu0 0.0
        %2954 = vmatpush1.msra.mxu0 0.0
        %2955 = vmatprep.subr.mxu0 0.0
        %2956 = vmatpush1.msra.mxu0 0.0
        %2957 = vmatprep.subr.mxu0 0.0
        %2958 = vmatpush1.msra.mxu0 0.0
        %2959 = vmatprep.subr.mxu0 0.0
        %2960 = vmatpush1.msra.mxu0 0.0
        %2961 = vmatprep.subr.mxu0 0.0
        %2962 = vmatpush1.msra.mxu0 0.0
        %2963 = vmatprep.subr.mxu0 0.0
        %2964 = vmatpush1.msra.mxu0 0.0
        %2965 = vmatprep.subr.mxu0 0.0
        %2966 = vmatpush1.msra.mxu0 0.0
        %2967 = vmatprep.subr.mxu0 0.0
        %2968 = vmatpush1.msra.mxu0 0.0
        %2969 = vmatprep.subr.mxu0 0.0
        %2970 = vmatpush1.msra.mxu0 0.0
        %2971 = vmatprep.subr.mxu0 0.0
        %2972 = vmatpush1.msra.mxu0 0.0
        %2973 = vmatprep.mubr.f32.mxu0 0.0
        %2974 = vmatmul.mubr.f32.gmra.mrb[0].mxu0 %v2898
        %v2975 = vpop.f32.mrb[0].mxu0
        %v2976 = vadd.f32 %v2895, %v2975
        %v2977 = vpop.f32.mrb[0].mxu0
        %2978 = vmatprep.mubr.f32.mxu0 0.0
        %2979 = vmatmul.mubr.f32.gmra.mrb[0].mxu0 %v2901
        %v2980 = vpop.f32.mrb[0].mxu0
        %v2981 = vadd.f32 %v2895, %v2980
        %v2982 = vpop.f32.mrb[0].mxu0
        %2983 = vmatprep.mubr.f32.mxu0 0.0
        %2984 = vmatmul.mubr.f32.gmra.mrb[0].mxu0 %v2904
        %v2985 = vpop.f32.mrb[0].mxu0
        %v2986 = vadd.f32 %v2895, %v2985
        %v2987 = vpop.f32.mrb[0].mxu0
        %2988 = vmatprep.mubr.f32.mxu0 0.0
        %2989 = vmatmul.mubr.f32.gmra.mrb[0].mxu0 %v2907
        %v2990 = vpop.f32.mrb[0].mxu0
        %v2991 = vadd.f32 %v2895, %v2990
        %v2992 = vpop.f32.mrb[0].mxu0
        %2993 = vdwg.mxu0
        %s2994 = scalar_lea.vmem %s11, 3
        %v2995 = vld [vmem:[%s2994] sm:$0x1]
        %s2996 = scalar_lea.vmem %s12, 3
        %v2997 = vld [vmem:[%s2996] sm:$0x1]
        %v2998 = vsel %vm909, %v2976, 0.0
        %2999 = vadd.xlane.f32.xlu0 %v2998
        %v3000 = vpop.xlane.xlu0 %2999
        %v3001 = vsel %vm909, %v2981, 0.0
        %3002 = vadd.xlane.f32.xlu0 %v3001
        %v3003 = vpop.xlane.xlu0 %3002
        %v3004 = vsel %vm909, %v2986, 0.0
        %3005 = vadd.xlane.f32.xlu0 %v3004
        %v3006 = vpop.xlane.xlu0 %3005
        %v3007 = vsel %vm909, %v2991, 0.0
        %3008 = vadd.xlane.f32.xlu0 %v3007
        %v3009 = vpop.xlane.xlu0 %3008
        %v3010 = vmul.f32 %v3000, %v922
        %v3011 = vmul.f32 %v3003, %v922
        %v3012 = vmul.f32 %v3006, %v922
        %v3013 = vmul.f32 %v3009, %v922
        %v3014 = vsub.f32 %v2976, %v3010
        %v3015 = vsub.f32 %v2981, %v3011
        %v3016 = vsub.f32 %v2986, %v3012
        %v3017 = vsub.f32 %v2991, %v3013
        %v3018 = vmul.f32 %v3014, %v3014
        %v3019 = vmul.f32 %v3015, %v3015
        %v3020 = vmul.f32 %v3016, %v3016
        %v3021 = vmul.f32 %v3017, %v3017
        %v3022 = vsel %vm909, %v3018, 0.0
        %3023 = vadd.xlane.f32.xlu0 %v3022
        %v3024 = vpop.xlane.xlu0 %3023
        %v3025 = vsel %vm909, %v3019, 0.0
        %3026 = vadd.xlane.f32.xlu0 %v3025
        %v3027 = vpop.xlane.xlu0 %3026
        %v3028 = vsel %vm909, %v3020, 0.0
        %3029 = vadd.xlane.f32.xlu0 %v3028
        %v3030 = vpop.xlane.xlu0 %3029
        %v3031 = vsel %vm909, %v3021, 0.0
        %3032 = vadd.xlane.f32.xlu0 %v3031
        %v3033 = vpop.xlane.xlu0 %3032
        %v3034 = vmul.f32 %v3024, %v922
        %v3035 = vmul.f32 %v3027, %v922
        %v3036 = vmul.f32 %v3030, %v922
        %v3037 = vmul.f32 %v3033, %v922
        %v3038 = vadd.f32 %v3034, 1e-05
        %v3039 = vadd.f32 %v3035, 1e-05
        %v3040 = vadd.f32 %v3036, 1e-05
        %v3041 = vadd.f32 %v3037, 1e-05
        %v3042 = vrsqrt.pop %v3038
        %v3043 = vrsqrt.pop %v3039
        %v3044 = vrsqrt.pop %v3040
        %v3045 = vrsqrt.pop %v3041
        %v3046 = vmul.f32 %v3014, %v3042
        %v3047 = vmul.f32 %v3015, %v3043
        %v3048 = vmul.f32 %v3016, %v3044
        %v3049 = vmul.f32 %v3017, %v3045
        %v3051 = vlaneseq
        %v3052 = vshrl.u32 %v3051, 7
        %v3053 = vsub.s32 0, %v3052
        %v3054 = vrot.slane %v2995, %v3053
        %v3056 = vmul.f32 %v3046, %v3054
        %v3057 = vmul.f32 %v3047, %v3054
        %v3058 = vmul.f32 %v3048, %v3054
        %v3059 = vmul.f32 %v3049, %v3054
        %v3061 = vlaneseq
        %v3062 = vshrl.u32 %v3061, 7
        %v3063 = vsub.s32 0, %v3062
        %v3064 = vrot.slane %v2997, %v3063
        %v3066 = vadd.f32 %v3056, %v3064
        %v3067 = vadd.f32 %v3057, %v3064
        %v3068 = vadd.f32 %v3058, %v3064
        %v3069 = vadd.f32 %v3059, %v3064
        %v3070 = vadd.f32 %v3066, %v2598
        %v3071 = vadd.f32 %v3067, %v2599
        %v3072 = vadd.f32 %v3068, %v2600
        %v3073 = vadd.f32 %v3069, %v2601
        %vm3074 = vcmp.gt.f32.partialorder %v3070, 0.0
        %vm3075 = vcmp.gt.f32.partialorder %v3071, 0.0
        %vm3076 = vcmp.gt.f32.partialorder %v3072, 0.0
        %vm3077 = vcmp.gt.f32.partialorder %v3073, 0.0
        %v3078 = vmul.f32 %v3070, 0.2
        %v3079 = vmul.f32 %v3071, 0.2
        %v3080 = vmul.f32 %v3072, 0.2
        %v3081 = vmul.f32 %v3073, 0.2
        %v3082 = vsel %vm3074, %v3070, %v3078
        %v3083 = vsel %vm3075, %v3071, %v3079
        %v3084 = vsel %vm3076, %v3072, %v3080
        %v3085 = vsel %vm3077, %v3073, %v3081
        %3086 = vst.msk [vmem:[%s778] sm:$0xff] %vm909, %v3082
        %3087 = vst.msk [vmem:[%s778 + $0x8] sm:$0xff] %vm909, %v3083
        %3088 = vst.msk [vmem:[%s778 + $0x10] sm:$0xff] %vm909, %v3084
        %3089 = vst.msk [vmem:[%s778 + $0x18] sm:$0xff] %vm909, %v3085
        %v3090 = vld [vmem:[%s13] sm:$0x1]
        %v3092 = vlaneseq
        %v3093 = vshrl.u32 %v3092, 7
        %v3094 = vsub.s32 0, %v3093
        %v3095 = vrot.slane %v3090, %v3094
        %v3097 = vmul.f32 %v3082, %v3095
        %v3098 = vmul.f32 %v3083, %v3095
        %v3099 = vmul.f32 %v3084, %v3095
        %v3100 = vmul.f32 %v3085, %v3095
        %v3101 = vsel %vm909, %v3097, 0.0
        %3102 = vadd.xlane.f32.xlu0 %v3101
        %v3103 = vpop.xlane.xlu0 %3102
        %v3104 = vsel %vm909, %v3098, 0.0
        %3105 = vadd.xlane.f32.xlu0 %v3104
        %v3106 = vpop.xlane.xlu0 %3105
        %v3107 = vsel %vm909, %v3099, 0.0
        %3108 = vadd.xlane.f32.xlu0 %v3107
        %v3109 = vpop.xlane.xlu0 %3108
        %v3110 = vsel %vm909, %v3100, 0.0
        %3111 = vadd.xlane.f32.xlu0 %v3110
        %v3112 = vpop.xlane.xlu0 %3111
        %v3113 = vld [vmem:[#allocation2] sm:$0x1]
        %v3115 = vlaneseq
        %v3116 = vshrl.u32 %v3115, 7
        %v3117 = vsub.s32 0, %v3116
        %v3118 = vrot.slane %v3113, %v3117
        %v3120 = vadd.f32 %v3103, %v3118
        %v3121 = vadd.f32 %v3106, %v3118
        %v3122 = vadd.f32 %v3109, %v3118
        %v3123 = vadd.f32 %v3112, %v3118
        %vm3124 = vcmask 7168
        %v3125 = vsel %vm3124, %v3120, -inf
        %v3126 = vsel %vm3124, %v3121, -inf
        %v3127 = vmax.f32 %v3125, %v3126
        %v3128 = vrot.slane %v3127, 4
        %v3129 = vmax.f32 %v3127, %v3128
        %v3130 = vrot.slane %v3129, 2
        %v3131 = vmax.f32 %v3129, %v3130
        %v3132 = vrot.slane %v3131, 1
        %v3133 = vmax.f32 %v3131, %v3132
        %v3134 = vsel %vm3124, %v3122, -inf
        %v3135 = vsel %vm3124, %v3123, -inf
        %v3136 = vmax.f32 %v3134, %v3135
        %v3137 = vrot.slane %v3136, 4
        %v3138 = vmax.f32 %v3136, %v3137
        %v3139 = vrot.slane %v3138, 2
        %v3140 = vmax.f32 %v3138, %v3139
        %v3141 = vrot.slane %v3140, 1
        %v3142 = vmax.f32 %v3140, %v3141
        %v3143 = vsub.f32 %v3120, %v3133
        %v3144 = vsub.f32 %v3121, %v3133
        %v3145 = vsub.f32 %v3122, %v3142
        %v3146 = vsub.f32 %v3123, %v3142
        %v3147 = vmul.f32 %v3143, 1.442695
        %v3148 = vpow.pop %v3147
        %v3149 = vmul.f32 %v3144, 1.442695
        %v3150 = vpow.pop %v3149
        %v3151 = vmul.f32 %v3145, 1.442695
        %v3152 = vpow.pop %v3151
        %v3153 = vmul.f32 %v3146, 1.442695
        %v3154 = vpow.pop %v3153
        %v3155 = vsel %vm3124, %v3148, 0.0
        %v3156 = vsel %vm3124, %v3150, 0.0
        %v3157 = vadd.f32 %v3155, %v3156
        %v3158 = vrot.slane %v3157, 4
        %v3159 = vadd.f32 %v3157, %v3158
        %v3160 = vrot.slane %v3159, 2
        %v3161 = vadd.f32 %v3159, %v3160
        %v3162 = vrot.slane %v3161, 1
        %v3163 = vadd.f32 %v3161, %v3162
        %v3164 = vsel %vm3124, %v3152, 0.0
        %v3165 = vsel %vm3124, %v3154, 0.0
        %v3166 = vadd.f32 %v3164, %v3165
        %v3167 = vrot.slane %v3166, 4
        %v3168 = vadd.f32 %v3166, %v3167
        %v3169 = vrot.slane %v3168, 2
        %v3170 = vadd.f32 %v3168, %v3169
        %v3171 = vrot.slane %v3170, 1
        %v3172 = vadd.f32 %v3170, %v3171
        %v3173 = vrcp.pop %v3163
        %v3174 = vrcp.pop %v3172
        %v3175 = vmul.f32 %v3148, %v3173
        %v3176 = vmul.f32 %v3150, %v3173
        %v3177 = vmul.f32 %v3152, %v3174
        %v3178 = vmul.f32 %v3154, %v3174
        %3180 = vset.pattern.permute.xlu0 0
        %3181 = vperm.xlu0 %3180, %v3175
        %v3182 = vpop.permute.xlu0 %3181
        %3185 = vset.pattern.permute.xlu0 0
        %3186 = vperm.xlu0 %3185, %v3176
        %v3187 = vpop.permute.xlu0 %3186
        %3190 = vset.pattern.permute.xlu0 0
        %3191 = vperm.xlu0 %3190, %v3177
        %v3192 = vpop.permute.xlu0 %3191
        %3195 = vset.pattern.permute.xlu0 0
        %3196 = vperm.xlu0 %3195, %v3178
        %v3197 = vpop.permute.xlu0 %3196
        %v3199 = vmul.f32 %v3082, %v3182
        %v3200 = vmul.f32 %v3083, %v3187
        %v3201 = vmul.f32 %v3084, %v3192
        %v3202 = vmul.f32 %v3085, %v3197
        %v3203 = vsel %vm909, %v3199, 0.0
        %v3204 = vsel %vm909, %v3200, 0.0
        %v3205 = vadd.f32 %v3203, %v3204
        %v3206 = vrot.slane %v3205, 4
        %v3207 = vadd.f32 %v3205, %v3206
        %v3208 = vrot.slane %v3207, 2
        %v3209 = vadd.f32 %v3207, %v3208
        %v3210 = vrot.slane %v3209, 1
        %v3211 = vadd.f32 %v3209, %v3210
        %v3212 = vsel %vm909, %v3201, 0.0
        %v3213 = vsel %vm909, %v3202, 0.0
        %v3214 = vadd.f32 %v3212, %v3213
        %v3215 = vrot.slane %v3214, 4
        %v3216 = vadd.f32 %v3214, %v3215
        %v3217 = vrot.slane %v3216, 2
        %v3218 = vadd.f32 %v3216, %v3217
        %v3219 = vrot.slane %v3218, 1
        %v3220 = vadd.f32 %v3218, %v3219
        %v3221 = vld [vmem:[%s15] sm:$0xff]
        %v3222 = vld [vmem:[%s15 + $0x8] sm:$0xff]
        %v3223 = vld [vmem:[%s15 + $0x10] sm:$0xff]
        %v3224 = vld [vmem:[%s15 + $0x18] sm:$0xff]
        %v3225 = vld [vmem:[%s16] sm:$0x1]
        %v3227 = vlaneseq
        %v3228 = vshrl.u32 %v3227, 7
        %v3229 = vsub.s32 0, %v3228
        %v3230 = vrot.slane %v3225, %v3229
        %vm3234 = vcmask 1041409
        %v3235 = vsel %vm3234, %v3220, %v3211
        %v3236 = vsel %vm909, %v3235, 0
        %3238 = vmatprep.subr.mxu0 0.0
        %3239 = vmatpush1.msra.mxu0 %v3221
        %3240 = vmatprep.subr.mxu0 0.0
        %3241 = vmatpush1.msra.mxu0 %v3222
        %3242 = vmatprep.subr.mxu0 0.0
        %3243 = vmatpush1.msra.mxu0 %v3223
        %3244 = vmatprep.subr.mxu0 0.0
        %3245 = vmatpush1.msra.mxu0 %v3224
        %3246 = vmatprep.subr.mxu0 0.0
        %3247 = vmatpush1.msra.mxu0 0.0
        %3248 = vmatprep.subr.mxu0 0.0
        %3249 = vmatpush1.msra.mxu0 0.0
        %3250 = vmatprep.subr.mxu0 0.0
        %3251 = vmatpush1.msra.mxu0 0.0
        %3252 = vmatprep.subr.mxu0 0.0
        %3253 = vmatpush1.msra.mxu0 0.0
        %3254 = vmatprep.subr.mxu0 0.0
        %3255 = vmatpush1.msra.mxu0 0.0
        %3256 = vmatprep.subr.mxu0 0.0
        %3257 = vmatpush1.msra.mxu0 0.0
        %3258 = vmatprep.subr.mxu0 0.0
        %3259 = vmatpush1.msra.mxu0 0.0
        %3260 = vmatprep.subr.mxu0 0.0
        %3261 = vmatpush1.msra.mxu0 0.0
        %3262 = vmatprep.subr.mxu0 0.0
        %3263 = vmatpush1.msra.mxu0 0.0
        %3264 = vmatprep.subr.mxu0 0.0
        %3265 = vmatpush1.msra.mxu0 0.0
        %3266 = vmatprep.subr.mxu0 0.0
        %3267 = vmatpush1.msra.mxu0 0.0
        %3268 = vmatprep.subr.mxu0 0.0
        %3269 = vmatpush1.msra.mxu0 0.0
        %3270 = vmatprep.subr.mxu0 0.0
        %3271 = vmatpush1.msra.mxu0 0.0
        %3272 = vmatprep.subr.mxu0 0.0
        %3273 = vmatpush1.msra.mxu0 0.0
        %3274 = vmatprep.subr.mxu0 0.0
        %3275 = vmatpush1.msra.mxu0 0.0
        %3276 = vmatprep.subr.mxu0 0.0
        %3277 = vmatpush1.msra.mxu0 0.0
        %3278 = vmatprep.subr.mxu0 0.0
        %3279 = vmatpush1.msra.mxu0 0.0
        %3280 = vmatprep.subr.mxu0 0.0
        %3281 = vmatpush1.msra.mxu0 0.0
        %3282 = vmatprep.subr.mxu0 0.0
        %3283 = vmatpush1.msra.mxu0 0.0
        %3284 = vmatprep.subr.mxu0 0.0
        %3285 = vmatpush1.msra.mxu0 0.0
        %3286 = vmatprep.subr.mxu0 0.0
        %3287 = vmatpush1.msra.mxu0 0.0
        %3288 = vmatprep.subr.mxu0 0.0
        %3289 = vmatpush1.msra.mxu0 0.0
        %3290 = vmatprep.subr.mxu0 0.0
        %3291 = vmatpush1.msra.mxu0 0.0
        %3292 = vmatprep.subr.mxu0 0.0
        %3293 = vmatpush1.msra.mxu0 0.0
        %3294 = vmatprep.subr.mxu0 0.0
        %3295 = vmatpush1.msra.mxu0 0.0
        %3296 = vmatprep.subr.mxu0 0.0
        %3297 = vmatpush1.msra.mxu0 0.0
        %3298 = vmatprep.subr.mxu0 0.0
        %3299 = vmatpush1.msra.mxu0 0.0
        %3300 = vmatprep.subr.mxu0 0.0
        %3301 = vmatpush1.msra.mxu0 0.0
        %3302 = vmatprep.mubr.f32.mxu0 0.0
        %3303 = vmatmul.mubr.f32.gmra.mrb[0].mxu0 %v3236
        %v3304 = vpop.f32.mrb[0].mxu0
        %v3305 = vadd.f32 %v3230, %v3304
        %v3306 = vpop.f32.mrb[0].mxu0
        %3307 = vdwg.mxu0
        %vm3308 = vcmp.gt.f32.partialorder %v3305, 0.0
        %v3309 = vmul.f32 %v3305, 0.2
        %v3310 = vsel %vm3308, %v3305, %v3309
        %v3311 = vld [vmem:[%s17] sm:$0x1]
        %v3313 = vlaneseq
        %v3314 = vshrl.u32 %v3313, 7
        %v3315 = vsub.s32 0, %v3314
        %v3316 = vrot.slane %v3311, %v3315
        %v3318 = vmul.f32 %v3310, %v3316
        %vm3319 = vcmask 254976
        %v3320 = vsel %vm3319, %v3318, 0.0
        %3321 = vadd.xlane.f32.xlu0 %v3320
        %v3322 = vpop.xlane.xlu0 %3321
        %v3323 = vld [vmem:[#allocation3] sm:$0x1]
        %v3325 = vlaneseq
        %v3326 = vshrl.u32 %v3325, 7
        %v3327 = vsub.s32 0, %v3326
        %v3328 = vrot.slane %v3323, %v3327
        %v3330 = vadd.f32 %v3322, %v3328
        %v3333 = vunpack.c.l.s4 1966171168
        %v3334 = vunpack.c.0.s8 %v3333
        %v3335 = vlaneseq
        %v3336 = vshrl.u32 %v3335, 7
        %v3337 = vsub.s32 %v3334, %v3336
        %v3338 = vrot.slane %v3330, %v3337
        %v3339 = vcombine.high %v3338, %v3338
        %v3341 = vunpack.c.l.s4 1966171168
        %v3342 = vunpack.c.0.s8 %v3341
        %v3343 = vlaneseq
        %v3344 = vshrl.u32 %v3343, 7
        %v3345 = vsub.s32 %v3342, %v3344
        %v3346 = vrot.slane %v3338, %v3345
        %v3348 = vunpack.c.l.s4 1966171168
        %v3349 = vunpack.c.0.s8 %v3348
        %v3350 = vlaneseq
        %v3351 = vshrl.u32 %v3350, 7
        %v3352 = vsub.s32 %v3349, %v3351
        %v3353 = vrot.slane %v3339, %v3352
        %vm3356 = vcmask 0
        %3357 = vst.msk [vmem:[%s789] sm:$0x1] %vm3356, %v3346
        %3358 = vst.msk [vmem:[%s789 + $0x1] sm:$0x1] %vm3356, %v3353
        %s3359 = smul.u32 2, %s49
        %p3360 = scmp.lt.s32.totalorder %s3359, 3
        %s3361 = scalar_select %p3360, %s3359, 3
        %s3362 = scalar_lea.vmem %s19, %s3361
        %s3363 = sand.u32 %s487, 1
        %s3364 = scalar_lea.sflag [#allocation5], %s3363
        %s3365 = sand.u32 %s487, 1
        %s3366 = smul.addr %s3365, 32
        %s3367 = scalar_lea.vmem [#allocation4], %s3366
        %s3368 = sand.u32 %s49, 1
        %s3369 = scalar_lea.sflag [#allocation7], %s3368
        %s3370 = sand.u32 %s513, 1
        %s3371 = smul.addr %s3370, 32
        %s3372 = scalar_lea.vmem [#allocation6], %s3371
        %s3373 = sand.u32 %s49, 1
        %s3374 = scalar_lea.sflag [#allocation7], %s3373
        %s3375 = sand.u32 %s539, 1
        %s3376 = smul.addr %s3375, 32
        %s3377 = scalar_lea.vmem [#allocation8], %s3376
        %s3378 = sand.u32 %s49, 1
        %s3379 = scalar_lea.sflag [#allocation10], %s3378
        %s3380 = sand.u32 %s565, 1
        %s3381 = smul.addr %s3380, 32
        %s3382 = scalar_lea.vmem [#allocation9], %s3381
        %s3383 = sand.u32 %s49, 1
        %s3384 = scalar_lea.sflag [#allocation10], %s3383
        %s3385 = sand.u32 %s591, 1
        %s3386 = smul.addr %s3385, 32
        %s3387 = scalar_lea.vmem [#allocation11], %s3386
        // Predicated region
        $region97: #{tpu_custom_call.1} parent=95 // pred_check
          %p3388 = pneg %p471
        $region98: #{tpu_custom_call.1} parent=95 // pred_check_branch
          %3390 = sbr.rel (%p3388) target = $region100
        $region99: #{tpu_custom_call.1} parent=95 // pred_region
          %s3391 = smul.u32 2, %s49
        $region100: #{tpu_custom_call.1} parent=95 // pred_fallthru
          _
        // Predicated region
        $region101: #{tpu_custom_call.1} parent=95 // pred_check
          %p3392 = pneg %p497
        $region102: #{tpu_custom_call.1} parent=95 // pred_check_branch
          %3394 = sbr.rel (%p3392) target = $region104
        $region103: #{tpu_custom_call.1} parent=95 // pred_region
          %s3395 = smul.u32 2, %s49
          %s3397 = ssub.s32 512, 512
          %3398 = vsyncadd %s3364, %s3397
          %s3399 = smul.addr %s3395, 2
          %s3400 = smul.addr %s3399, 128
          %s3401 = scalar_lea.hbm %s20, %s3400
          %s3402 = sshll.u32 %s3367, 4
          %s3403 = int_to_ptr.vmem [resolvable:$true] %s3402
          %3408 = dma.vmem_to_hbm [thread:$0]  %s3403, 512, %s3401, %s3364, 128, 128, 8
        $region104: #{tpu_custom_call.1} parent=95 // pred_fallthru
          _
        // Predicated region
        $region105: #{tpu_custom_call.1} parent=95 // pred_check
          %p3409 = pneg %p523
        $region106: #{tpu_custom_call.1} parent=95 // pred_check_branch
          %3411 = sbr.rel (%p3409) target = $region108
        $region107: #{tpu_custom_call.1} parent=95 // pred_region
          %s3412 = smul.u32 2, %s49
          %s3414 = ssub.s32 512, 512
          %3415 = vsyncadd %s3369, %s3414
          %s3416 = smul.addr %s3412, 2
          %s3417 = smul.addr %s3416, 128
          %s3418 = scalar_lea.hbm %s21, %s3417
          %s3419 = sshll.u32 %s3372, 4
          %s3420 = int_to_ptr.vmem [resolvable:$true] %s3419
          %3425 = dma.vmem_to_hbm [thread:$0]  %s3420, 512, %s3418, %s3369, 128, 128, 8
        $region108: #{tpu_custom_call.1} parent=95 // pred_fallthru
          _
        // Predicated region
        $region109: #{tpu_custom_call.1} parent=95 // pred_check
          %p3426 = pneg %p549
        $region110: #{tpu_custom_call.1} parent=95 // pred_check_branch
          %3428 = sbr.rel (%p3426) target = $region112
        $region111: #{tpu_custom_call.1} parent=95 // pred_region
          %s3429 = smul.u32 2, %s49
          %s3431 = ssub.s32 512, 512
          %3432 = vsyncadd %s3374, %s3431
          %s3433 = smul.addr %s3429, 2
          %s3434 = smul.addr %s3433, 128
          %s3435 = scalar_lea.hbm %s22, %s3434
          %s3436 = sshll.u32 %s3377, 4
          %s3437 = int_to_ptr.vmem [resolvable:$true] %s3436
          %3442 = dma.vmem_to_hbm [thread:$0]  %s3437, 512, %s3435, %s3374, 128, 128, 8
        $region112: #{tpu_custom_call.1} parent=95 // pred_fallthru
          _
        // Predicated region
        $region113: #{tpu_custom_call.1} parent=95 // pred_check
          %p3443 = pneg %p575
        $region114: #{tpu_custom_call.1} parent=95 // pred_check_branch
          %3445 = sbr.rel (%p3443) target = $region116
        $region115: #{tpu_custom_call.1} parent=95 // pred_region
          %s3446 = smul.u32 2, %s49
          %s3448 = ssub.s32 512, 512
          %3449 = vsyncadd %s3379, %s3448
          %s3450 = smul.addr %s3446, 2
          %s3451 = smul.addr %s3450, 128
          %s3452 = scalar_lea.hbm %s23, %s3451
          %s3453 = sshll.u32 %s3382, 4
          %s3454 = int_to_ptr.vmem [resolvable:$true] %s3453
          %3459 = dma.vmem_to_hbm [thread:$0]  %s3454, 512, %s3452, %s3379, 128, 128, 8
        $region116: #{tpu_custom_call.1} parent=95 // pred_fallthru
          _
        // Predicated region
        $region117: #{tpu_custom_call.1} parent=95 // pred_check
          %p3460 = pneg %p601
        $region118: #{tpu_custom_call.1} parent=95 // pred_check_branch
          %3462 = sbr.rel (%p3460) target = $region120
        $region119: #{tpu_custom_call.1} parent=95 // pred_region
          %s3463 = smul.u32 2, %s49
          %s3465 = ssub.s32 512, 512
          %3466 = vsyncadd %s3384, %s3465
          %s3467 = smul.addr %s3463, 2
          %s3468 = smul.addr %s3467, 128
          %s3469 = scalar_lea.hbm %s24, %s3468
          %s3470 = sshll.u32 %s3387, 4
          %s3471 = int_to_ptr.vmem [resolvable:$true] %s3470
          %3476 = dma.vmem_to_hbm [thread:$0]  %s3471, 512, %s3469, %s3384, 128, 128, 8
        $region120: #{tpu_custom_call.1} parent=95 // pred_fallthru
          _
      $region96: #{tpu_custom_call.1} parent=5 // pred_fallthru
        _
      %p3477 = scmp.le.s32.totalorder 2, %s44
      // Predicated region
      $region121: #{tpu_custom_call.1} parent=5 // pred_check
        %p3478 = pneg %p3477
      $region122: #{tpu_custom_call.1} parent=5 // pred_check_branch
        %3480 = sbr.rel (%p3478) target = $region124
      $region123: #{tpu_custom_call.1} parent=5 // pred_region
        %s3481 = ssub.s32 %s44, 2
        // Predicated region
        $region125: #{tpu_custom_call.1} parent=123 // pred_check
          %p3482 = pneg %p477
        $region126: #{tpu_custom_call.1} parent=123 // pred_check_branch
          %3484 = sbr.rel (%p3482) target = $region128
        $region127: #{tpu_custom_call.1} parent=123 // pred_region
          %s3485 = smul.u32 2, %s50
          %p3486 = scmp.lt.s32.totalorder %s3485, 3
          %s3487 = scalar_select %p3486, %s3485, 3
          %s3488 = scalar_lea.vmem %s19, %s3487
        $region128: #{tpu_custom_call.1} parent=123 // pred_fallthru
          _
        // Predicated region
        $region129: #{tpu_custom_call.1} parent=123 // pred_check
          %p3489 = pneg %p503
        $region130: #{tpu_custom_call.1} parent=123 // pred_check_branch
          %3491 = sbr.rel (%p3489) target = $region132
        $region131: #{tpu_custom_call.1} parent=123 // pred_region
          %s3492 = sand.u32 %s488, 1
          %s3493 = scalar_lea.sflag [#allocation5], %s3492
          %s3494 = sand.u32 %s488, 1
          %s3495 = smul.addr %s3494, 32
          %s3496 = scalar_lea.vmem [#allocation4], %s3495
          %3497 = dma.done %s3493, 512
        $region132: #{tpu_custom_call.1} parent=123 // pred_fallthru
          _
        // Predicated region
        $region133: #{tpu_custom_call.1} parent=123 // pred_check
          %p3498 = pneg %p529
        $region134: #{tpu_custom_call.1} parent=123 // pred_check_branch
          %3500 = sbr.rel (%p3498) target = $region136
        $region135: #{tpu_custom_call.1} parent=123 // pred_region
          %s3501 = sand.u32 %s50, 1
          %s3502 = scalar_lea.sflag [#allocation7], %s3501
          %s3503 = sand.u32 %s514, 1
          %s3504 = smul.addr %s3503, 32
          %s3505 = scalar_lea.vmem [#allocation6], %s3504
          %3506 = dma.done %s3502, 512
        $region136: #{tpu_custom_call.1} parent=123 // pred_fallthru
          _
        // Predicated region
        $region137: #{tpu_custom_call.1} parent=123 // pred_check
          %p3507 = pneg %p555
        $region138: #{tpu_custom_call.1} parent=123 // pred_check_branch
          %3509 = sbr.rel (%p3507) target = $region140
        $region139: #{tpu_custom_call.1} parent=123 // pred_region
          %s3510 = sand.u32 %s50, 1
          %s3511 = scalar_lea.sflag [#allocation7], %s3510
          %s3512 = sand.u32 %s540, 1
          %s3513 = smul.addr %s3512, 32
          %s3514 = scalar_lea.vmem [#allocation8], %s3513
          %3515 = dma.done %s3511, 512
        $region140: #{tpu_custom_call.1} parent=123 // pred_fallthru
          _
        // Predicated region
        $region141: #{tpu_custom_call.1} parent=123 // pred_check
          %p3516 = pneg %p581
        $region142: #{tpu_custom_call.1} parent=123 // pred_check_branch
          %3518 = sbr.rel (%p3516) target = $region144
        $region143: #{tpu_custom_call.1} parent=123 // pred_region
          %s3519 = sand.u32 %s50, 1
          %s3520 = scalar_lea.sflag [#allocation10], %s3519
          %s3521 = sand.u32 %s566, 1
          %s3522 = smul.addr %s3521, 32
          %s3523 = scalar_lea.vmem [#allocation9], %s3522
          %3524 = dma.done %s3520, 512
        $region144: #{tpu_custom_call.1} parent=123 // pred_fallthru
          _
        // Predicated region
        $region145: #{tpu_custom_call.1} parent=123 // pred_check
          %p3525 = pneg %p607
        $region146: #{tpu_custom_call.1} parent=123 // pred_check_branch
          %3527 = sbr.rel (%p3525) target = $region148
        $region147: #{tpu_custom_call.1} parent=123 // pred_region
          %s3528 = sand.u32 %s50, 1
          %s3529 = scalar_lea.sflag [#allocation10], %s3528
          %s3530 = sand.u32 %s592, 1
          %s3531 = smul.addr %s3530, 32
          %s3532 = scalar_lea.vmem [#allocation11], %s3531
          %3533 = dma.done %s3529, 512
        $region148: #{tpu_custom_call.1} parent=123 // pred_fallthru
          _
      $region124: #{tpu_custom_call.1} parent=5 // pred_fallthru
        _
    $region6: #{tpu_custom_call.1} parent=1 // loop_footer
      %s48 = sadd.s32 1, %s44
    $region7: #{tpu_custom_call.1} parent=1 // loop_footer_branch
      %43 = sbr.rel target = $region3
    $region8: #{tpu_custom_call.1} parent=1 // loop_exit
      _
    %3534 = vsyncpa [#allocation5], 1
    %s3535 = scalar_lea.sflag [#allocation5], 1
    %3536 = vsyncpa %s3535, 1
    %3537 = vsyncpa [#allocation7], 1
    %s3538 = scalar_lea.sflag [#allocation7], 1
    %3539 = vsyncpa %s3538, 1
    %3540 = vsyncpa [#allocation10], 1
    %s3541 = scalar_lea.sflag [#allocation10], 1
    %3542 = vsyncpa %s3541, 1

</llo_original>
